<compile_context>
chip_gen: v7x
topology: tpu7x:2x2x1
jax: 0.10.0
libtpu: 0.0.40
codegen_flags: <defaults>
</compile_context>

<pallas_src>
import functools
import math

import jax
import jax.numpy as jnp
from jax import lax
from jax.experimental import pallas as pl
from jax.experimental.pallas import tpu as pltpu


def _attention_pool_kernel(x_ref, pkv_ref, ckv_ref, wq_ref, cq_ref, wkv_ref,
                           wc_ref, bc_ref, hsel_ref, hselt_ref, o_ref,
                           *, t0_contract):
    # x_ref:    [bt, T0, C]   batch tile, spatial tokens, channels-on-lanes (cd)
    # pkv_ref:  [T0, 2C] f32  per-token kv bias        = pe_r @ Wkv.T + b_kv
    # ckv_ref:  [1, 2C]  f32  mean-token kv correction = (pe0 - mean(pe_r)) @ Wkv.T
    # wq_ref:   [C, C]   cd   Wq.T * scale^2
    # cq_ref:   [1, C]   f32  (pe0 @ Wq.T + b_q) * scale^2
    # wkv_ref:  [C, 2C]  cd   Wkv.T
    # wc_ref:   [C, O]   cd   Wc.T
    # bc_ref:   [1, O]   f32
    # hsel_ref: [C, H]   cd   0/1 channel->head selector;  hselt_ref: [H, C]
    # o_ref:    [1, bt, O]
    f32 = jnp.float32
    x = x_ref[...]
    bt, T0, C = x.shape
    N = bt * T0
    cd = x.dtype

    hsel = hsel_ref[...]
    hselt = hselt_ref[...]

    # --- k/v for every spatial token of every batch row: one wide matmul with
    #     f32 accumulation; pe + bias added in f32 afterwards (pkv).
    kv = jnp.dot(x.reshape(N, C), wkv_ref[...], preferred_element_type=f32)
    kv = kv.reshape(bt, T0, 2 * C) + pkv_ref[...][None]          # [bt,T0,2C] f32
    k = kv[:, :, :C]
    v = kv[:, :, C:]

    # --- token 0 (spatial mean): q from the f32-accumulated mean of x,
    #     k/v derived from the spatial kv mean + host-precomputed correction.
    mean = jnp.mean(x, axis=1, dtype=f32)                        # [bt, C] f32
    q0 = jnp.dot(mean.astype(cd), wq_ref[...],
                 preferred_element_type=f32) + cq_ref[...]       # [bt, C] (scale^2 folded)
    kv0 = jnp.mean(kv, axis=1) + ckv_ref[...]                    # [bt, 2C]
    k0 = kv0[:, :C]
    v0 = kv0[:, C:]

    # --- per-head scores for the single (token-0) query: K=C contractions.
    s0 = jnp.dot((q0 * k0).astype(cd), hsel,
                 preferred_element_type=f32)                     # [bt, H]
    qk = (q0[:, None, :] * k).reshape(N, C).astype(cd)
    sr = jnp.dot(qk, hsel, preferred_element_type=f32)
    sr = sr.reshape(bt, T0, -1)                                  # [bt, T0, H]

    # --- numerically stable softmax over the T0+1 keys (token-0 key = s0/e0)
    m = jnp.maximum(s0, jnp.max(sr, axis=1))                     # [bt, H]
    e0 = jnp.exp(s0 - m)
    er = jnp.exp(sr - m[:, None, :])                             # [bt, T0, H]
    denom = e0 + jnp.sum(er, axis=1)
    inv = pl.reciprocal(denom, approx=True)                      # EUP slot
    inv = inv * (2.0 - denom * inv)                              # 2x Newton ->
    inv = inv * (2.0 - denom * inv)                              # ~f32 exact
    w0 = e0 * inv                                                # [bt, H]
    wr = er * inv[:, None, :]                                    # [bt, T0, H]

    # --- value reduction
    if t0_contract:
        # Contract over T0 on the MXU ([H,T0] x [T0,C] per batch row), then a
        # 0/1 head-mask multiply and a small sum over H.
        a_h = lax.dot_general(wr.astype(cd), v.astype(cd),
                              dimension_numbers=(((1,), (1,)), ((0,), (0,))),
                              preferred_element_type=f32)        # [bt, H, C]
        a0 = jnp.sum(a_h * hselt[None], axis=1)                  # [bt, C]
    else:
        # Fallback: head->channel broadcast of the weights (K=H matmul).
        wrc = jnp.dot(wr.reshape(N, -1).astype(cd), hselt,
                      preferred_element_type=f32).reshape(bt, T0, C)
        a0 = jnp.sum(wrc * v, axis=1)                            # [bt, C]
    a0 = a0 + jnp.dot(w0.astype(cd), hselt, preferred_element_type=f32) * v0

    # --- output projection for token 0 only
    out = jnp.dot(a0.astype(cd), wc_ref[...],
                  preferred_element_type=f32) + bc_ref[...]      # [bt, O]
    o_ref[...] = out[None].astype(o_ref.dtype)


def _vmem_limit_bytes(bt, T0, C, O, H, cd_bytes, out_bytes):
    f32b = 4
    x_blk = bt * T0 * C * cd_bytes
    out_blk = bt * O * out_bytes
    weights = ((C * C + 2 * C * C + C * O + 2 * C * H) * cd_bytes
               + (2 * T0 * C + 2 * C + C + O) * f32b)
    interm = (bt * T0 * (2 * C + C + 3 * H) * f32b
              + bt * (H * C + 12 * C + 12 * H) * f32b)
    est = 2 * x_blk + 2 * out_blk + 2 * weights + interm
    est = int(est * 1.5) + (4 << 20)
    # clamp into [16 MiB, 48 MiB] but never below the estimated need
    return min(max(est, 16 << 20), max(est, 48 << 20))


def attention_pool_2d(x, pe, w_qkv, b_qkv, w_c, b_c, n_heads, *,
                      compute_dtype=None, batch_tile=None,
                      single_buffer_weights=True):
    """x: [B, C, H, W]. Returns [B, O] (same dtype as x).

    compute_dtype=jnp.bfloat16 is recommended at production sizes (f32
    accumulation and f32 softmax are kept either way).
    """
    B, C, H, W = x.shape
    T0 = H * W
    T = T0 + 1
    O = w_c.shape[0]
    assert C % n_heads == 0 and pe.shape == (C, T)
    ch = C // n_heads
    scale2 = 1.0 / math.sqrt(ch)          # == (1/sqrt(sqrt(ch)))**2 from the reference

    cd = x.dtype if compute_dtype is None else compute_dtype
    f32 = jnp.float32

    # ---- batch tiling: >=2 grid steps whenever B >= 2 (megacore + pipelining);
    #      pad B instead of falling back to one giant un-pipelined step.
    if batch_tile is None:
        batch_tile = 8 if B >= 16 else max(1, B // 2)
    bt = batch_tile
    G = pl.cdiv(B, bt)
    Bp = G * bt

    # [B, C, H, W] -> [B, T0, C]: channels on lanes, batch*tokens on sublanes.
    # TODO(synk): this transpose is an extra HBM round trip; produce x
    # token-major upstream / fuse into the producer to avoid it.
    x_t = jnp.transpose(x.reshape(B, C, T0), (0, 2, 1)).astype(cd)
    if Bp != B:
        x_t = jnp.pad(x_t, ((0, Bp - B), (0, 0), (0, 0)))

    # ---- host-side prep: fold scale^2, positional embedding and qkv bias
    #      into the projection weights / f32 additive tables.
    pe_f = pe.astype(f32).T                                        # [T, C]
    pe0 = pe_f[:1]                                                 # [1, C]
    pe_r = pe_f[1:]                                                # [T0, C]

    wq = w_qkv[:C].astype(f32)                                     # [C, C]  (out, in)
    wkv = w_qkv[C:].astype(f32)                                    # [2C, C]
    bq = b_qkv[:C].astype(f32)
    bkv = b_qkv[C:].astype(f32)

    wq_t = (wq.T * scale2).astype(cd)                              # [C, C]
    cq = ((pe0 @ wq.T) + bq[None]) * scale2                        # [1, C]   f32
    wkv_t = wkv.T.astype(cd)                                       # [C, 2C]
    pkv = pe_r @ wkv.T + bkv[None]                                 # [T0, 2C] f32
    ckv = (pe0 - pe_r.mean(axis=0, keepdims=True)) @ wkv.T         # [1, 2C]  f32
    wc_t = w_c.astype(f32).T.astype(cd)                            # [C, O]
    bc = b_c.astype(f32).reshape(1, O)                             # [1, O]

    head_of_c = jnp.arange(C) // ch
    hsel = (head_of_c[:, None] == jnp.arange(n_heads)[None, :]).astype(cd)  # [C, H]
    hselt = hsel.T                                                          # [H, C]

    consts = (pkv, ckv, wq_t, cq, wkv_t, wc_t, bc, hsel, hselt)

    vmem_limit = _vmem_limit_bytes(bt, T0, C, O, n_heads,
                                   jnp.dtype(cd).itemsize,
                                   jnp.dtype(x.dtype).itemsize)

    def run(t0_contract, single_buffer):
        pm = pl.Buffered(1) if single_buffer else None

        def const_spec(a):
            nd = a.ndim
            return pl.BlockSpec(a.shape, lambda i, _nd=nd: (0,) * _nd,
                                pipeline_mode=pm)

        kernel = functools.partial(_attention_pool_kernel,
                                   t0_contract=t0_contract)
        return pl.pallas_call(
            kernel,
            out_shape=jax.ShapeDtypeStruct((G, bt, O), x.dtype),
            grid_spec=pltpu.PrefetchScalarGridSpec(
                num_scalar_prefetch=0,
                grid=(G,),
                in_specs=[pl.BlockSpec((bt, T0, C), lambda i: (i, 0, 0))]
                         + [const_spec(a) for a in consts],
                out_specs=pl.BlockSpec((1, bt, O), lambda i: (i, 0, 0)),
            ),
            compiler_params=pltpu.CompilerParams(
                dimension_semantics=("parallel",),
                vmem_limit_bytes=vmem_limit,
            ),
        )(x_t, *consts)

    # Preferred config first; graceful degradation keeps the op runnable if a
    # particular feature (single-buffered constants / batched TN dot_general)
    # is unavailable in the installed lowering.
    attempts = [(True, single_buffer_weights), (True, False),
                (False, single_buffer_weights), (False, False)]
    seen = set()
    last_err = None
    out = None
    for cfg in attempts:
        if cfg in seen:
            continue
        seen.add(cfg)
        try:
            out = run(*cfg)
            last_err = None
            break
        except Exception as e:            # noqa: BLE001 - fall back and retry
            last_err = e
    if last_err is not None:
        raise last_err

    return out.reshape(Bp, O)[:B]


def attention_pool_2d_ref(x, pe, w_qkv, b_qkv, w_c, b_c, n_heads):
    """Pure-JAX reference mirroring the PyTorch forward exactly."""
    B, C, H, W = x.shape
    xf = x.reshape(B, C, -1)
    xf = jnp.concatenate([xf.mean(-1, keepdims=True), xf], axis=-1)
    xf = xf + pe[None]
    qkv = jnp.einsum('oc,bct->bot', w_qkv, xf) + b_qkv[None, :, None]
    ch = C // n_heads
    q, k, v = jnp.split(qkv, 3, axis=1)
    T = xf.shape[-1]
    q = q.reshape(B * n_heads, ch, T)
    k = k.reshape(B * n_heads, ch, T)
    v = v.reshape(B * n_heads, ch, T)
    scale = 1.0 / math.sqrt(math.sqrt(ch))
    w = jnp.einsum('bct,bcs->bts', q * scale, k * scale)
    w = jax.nn.softmax(w, axis=-1)
    a = jnp.einsum('bts,bcs->bct', w, v).reshape(B, C, T)
    out = jnp.einsum('oc,bct->bot', w_c, a) + b_c[None, :, None]
    return out[:, :, 0]


if __name__ == "__main__":
    # Small shapes consistent with the module:
    # spacial_dim=4, embed_dim=8, num_heads_channels=4, output_dim=8
    B, C, H, W = 2, 8, 4, 4
    spacial_dim = H
    num_heads_channels = 4
    n_heads = C // num_heads_channels
    out_dim = 8
    T = spacial_dim * spacial_dim + 1

    key = jax.random.PRNGKey(0)
    kx, kpe, kwq, kbq, kwc, kbc = jax.random.split(key, 6)

    x = jax.random.normal(kx, (B, C, H, W), dtype=jnp.float32)
    pe = jax.random.normal(kpe, (C, T), dtype=jnp.float32) / (C ** 0.5)
    w_qkv = jax.random.normal(kwq, (3 * C, C), dtype=jnp.float32) * (1.0 / C ** 0.5)
    b_qkv = jax.random.normal(kbq, (3 * C,), dtype=jnp.float32) * 0.1
    w_c = jax.random.normal(kwc, (out_dim, C), dtype=jnp.float32) * (1.0 / C ** 0.5)
    b_c = jax.random.normal(kbc, (out_dim,), dtype=jnp.float32) * 0.1

    ref = attention_pool_2d_ref(x, pe, w_qkv, b_qkv, w_c, b_c, n_heads)

    # f32 path (tight check against the PyTorch-equivalent reference)
    out = attention_pool_2d(x, pe, w_qkv, b_qkv, w_c, b_c, n_heads)
    out = jax.block_until_ready(out)
    assert out.shape == (B, out_dim)
    assert jnp.allclose(out, ref, atol=1e-4, rtol=1e-4), (out, ref)

    # bf16 weights/activations, f32 accumulation (halves DMA/VMEM at real sizes)
    out_bf16 = attention_pool_2d(x, pe, w_qkv, b_qkv, w_c, b_c, n_heads,
                                 compute_dtype=jnp.bfloat16)
    out_bf16 = jax.block_until_ready(out_bf16)
    assert jnp.allclose(out_bf16, ref, atol=1e-1, rtol=1e-1), (out_bf16, ref)

    print("KERNEL_OK")
</pallas_src>

<mosaic_0001>
module attributes {stable_mosaic.version = 11 : i64} {
  func.func @_attention_pool_kernel(%arg0: i32, %arg1: memref<1x16x8xf32, #tpu.memory_space<vmem>>, %arg2: memref<16x16xf32, #tpu.memory_space<vmem>>, %arg3: memref<1x16xf32, #tpu.memory_space<vmem>>, %arg4: memref<8x8xf32, #tpu.memory_space<vmem>>, %arg5: memref<1x8xf32, #tpu.memory_space<vmem>>, %arg6: memref<8x16xf32, #tpu.memory_space<vmem>>, %arg7: memref<8x8xf32, #tpu.memory_space<vmem>>, %arg8: memref<1x8xf32, #tpu.memory_space<vmem>>, %arg9: memref<8x2xf32, #tpu.memory_space<vmem>>, %arg10: memref<2x8xf32, #tpu.memory_space<vmem>>, %arg11: memref<1x1x8xf32, #tpu.memory_space<vmem>>) attributes {dimension_semantics = [#tpu.dimension_semantics<parallel>], iteration_bounds = array<i64: 2>, scalar_prefetch = 0 : i64, scratch_operands = 0 : i64, tpu.core_type = #tpu.core_type<tc>, window_params = [{transform_indices = @transform_0, window_bounds = array<i64: 1, 16, 8>}, {pipeline_mode = #tpu.pipeline_mode<synchronous>, transform_indices = @transform_1, window_bounds = array<i64: 16, 16>}, {pipeline_mode = #tpu.pipeline_mode<synchronous>, transform_indices = @transform_2, window_bounds = array<i64: 1, 16>}, {pipeline_mode = #tpu.pipeline_mode<synchronous>, transform_indices = @transform_3, window_bounds = array<i64: 8, 8>}, {pipeline_mode = #tpu.pipeline_mode<synchronous>, transform_indices = @transform_4, window_bounds = array<i64: 1, 8>}, {pipeline_mode = #tpu.pipeline_mode<synchronous>, transform_indices = @transform_5, window_bounds = array<i64: 8, 16>}, {pipeline_mode = #tpu.pipeline_mode<synchronous>, transform_indices = @transform_6, window_bounds = array<i64: 8, 8>}, {pipeline_mode = #tpu.pipeline_mode<synchronous>, transform_indices = @transform_7, window_bounds = array<i64: 1, 8>}, {pipeline_mode = #tpu.pipeline_mode<synchronous>, transform_indices = @transform_8, window_bounds = array<i64: 8, 2>}, {pipeline_mode = #tpu.pipeline_mode<synchronous>, transform_indices = @transform_9, window_bounds = array<i64: 2, 8>}, {transform_indices = @transform_10, window_bounds = array<i64: 1, 1, 8>}]} {
    %c0 = arith.constant 0 : index
    %c0_0 = arith.constant 0 : index
    %c0_1 = arith.constant 0 : index
    %0 = vector.load %arg1[%c0, %c0_0, %c0_1] : memref<1x16x8xf32, #tpu.memory_space<vmem>>, vector<1x16x8xf32>
    %c0_2 = arith.constant 0 : index
    %c0_3 = arith.constant 0 : index
    %1 = vector.load %arg9[%c0_2, %c0_3] : memref<8x2xf32, #tpu.memory_space<vmem>>, vector<8x2xf32>
    %c0_4 = arith.constant 0 : index
    %c0_5 = arith.constant 0 : index
    %2 = vector.load %arg10[%c0_4, %c0_5] : memref<2x8xf32, #tpu.memory_space<vmem>>, vector<2x8xf32>
    %3 = vector.shape_cast %0 : vector<1x16x8xf32> to vector<16x8xf32>
    %c0_6 = arith.constant 0 : index
    %c0_7 = arith.constant 0 : index
    %4 = vector.load %arg6[%c0_6, %c0_7] : memref<8x16xf32, #tpu.memory_space<vmem>>, vector<8x16xf32>
    %cst = arith.constant dense<0.000000e+00> : vector<16x16xf32>
    %5 = tpu.matmul %3, %4, %cst {dimension_numbers = #tpu.dot_dimension_numbers<[1], [0], [0], [1], [0, 0, 1, 1], [], []>} : vector<16x8xf32>, vector<8x16xf32>, vector<16x16xf32> -> vector<16x16xf32>
    %6 = vector.shape_cast %5 : vector<16x16xf32> to vector<1x16x16xf32>
    %c0_8 = arith.constant 0 : index
    %c0_9 = arith.constant 0 : index
    %7 = vector.load %arg2[%c0_8, %c0_9] : memref<16x16xf32, #tpu.memory_space<vmem>>, vector<16x16xf32>
    %8 = vector.shape_cast %7 : vector<16x16xf32> to vector<1x16x16xf32>
    %9 = arith.addf %6, %8 : vector<1x16x16xf32>
    %10 = vector.extract_strided_slice %9 {offsets = [0, 0, 0], sizes = [1, 16, 8], strides = [1, 1, 1]} : vector<1x16x16xf32> to vector<1x16x8xf32>
    %11 = vector.extract_strided_slice %9 {offsets = [0, 0, 8], sizes = [1, 16, 8], strides = [1, 1, 1]} : vector<1x16x16xf32> to vector<1x16x8xf32>
    %cst_10 = arith.constant dense<0.000000e+00> : vector<1x8xf32>
    %12 = vector.multi_reduction <add>, %0, %cst_10 [1] : vector<1x16x8xf32> to vector<1x8xf32>
    %cst_11 = arith.constant 1.600000e+01 : f32
    %13 = vector.broadcast %cst_11 : f32 to vector<1x8xf32>
    %14 = arith.divf %12, %13 : vector<1x8xf32>
    %c0_12 = arith.constant 0 : index
    %c0_13 = arith.constant 0 : index
    %15 = vector.load %arg4[%c0_12, %c0_13] : memref<8x8xf32, #tpu.memory_space<vmem>>, vector<8x8xf32>
    %cst_14 = arith.constant dense<0.000000e+00> : vector<1x8xf32>
    %16 = tpu.matmul %14, %15, %cst_14 {dimension_numbers = #tpu.dot_dimension_numbers<[1], [0], [0], [1], [0, 0, 1, 1], [], []>} : vector<1x8xf32>, vector<8x8xf32>, vector<1x8xf32> -> vector<1x8xf32>
    %c0_15 = arith.constant 0 : index
    %c0_16 = arith.constant 0 : index
    %17 = vector.load %arg5[%c0_15, %c0_16] : memref<1x8xf32, #tpu.memory_space<vmem>>, vector<1x8xf32>
    %18 = arith.addf %16, %17 : vector<1x8xf32>
    %cst_17 = arith.constant dense<0.000000e+00> : vector<1x16xf32>
    %19 = vector.multi_reduction <add>, %9, %cst_17 [1] : vector<1x16x16xf32> to vector<1x16xf32>
    %cst_18 = arith.constant 1.600000e+01 : f32
    %20 = vector.broadcast %cst_18 : f32 to vector<1x16xf32>
    %21 = arith.divf %19, %20 : vector<1x16xf32>
    %c0_19 = arith.constant 0 : index
    %c0_20 = arith.constant 0 : index
    %22 = vector.load %arg3[%c0_19, %c0_20] : memref<1x16xf32, #tpu.memory_space<vmem>>, vector<1x16xf32>
    %23 = arith.addf %21, %22 : vector<1x16xf32>
    %24 = vector.extract_strided_slice %23 {offsets = [0, 0], sizes = [1, 8], strides = [1, 1]} : vector<1x16xf32> to vector<1x8xf32>
    %25 = vector.extract_strided_slice %23 {offsets = [0, 8], sizes = [1, 8], strides = [1, 1]} : vector<1x16xf32> to vector<1x8xf32>
    %26 = arith.mulf %18, %24 : vector<1x8xf32>
    %cst_21 = arith.constant dense<0.000000e+00> : vector<1x2xf32>
    %27 = tpu.matmul %26, %1, %cst_21 {dimension_numbers = #tpu.dot_dimension_numbers<[1], [0], [0], [1], [0, 0, 1, 1], [], []>} : vector<1x8xf32>, vector<8x2xf32>, vector<1x2xf32> -> vector<1x2xf32>
    %28 = vector.shape_cast %18 : vector<1x8xf32> to vector<1x1x8xf32>
    %29 = vector.broadcast %28 : vector<1x1x8xf32> to vector<1x16x8xf32>
    %30 = arith.mulf %29, %10 : vector<1x16x8xf32>
    %31 = vector.shape_cast %30 : vector<1x16x8xf32> to vector<16x8xf32>
    %cst_22 = arith.constant dense<0.000000e+00> : vector<16x2xf32>
    %32 = tpu.matmul %31, %1, %cst_22 {dimension_numbers = #tpu.dot_dimension_numbers<[1], [0], [0], [1], [0, 0, 1, 1], [], []>} : vector<16x8xf32>, vector<8x2xf32>, vector<16x2xf32> -> vector<16x2xf32>
    %33 = vector.shape_cast %32 : vector<16x2xf32> to vector<1x16x2xf32>
    %cst_23 = arith.constant dense<0xFF800000> : vector<1x2xf32>
    %34 = vector.multi_reduction <maximumf>, %33, %cst_23 [1] : vector<1x16x2xf32> to vector<1x2xf32>
    %35 = arith.maximumf %27, %34 : vector<1x2xf32>
    %36 = arith.subf %27, %35 : vector<1x2xf32>
    %37 = math.exp %36 : vector<1x2xf32>
    %38 = vector.shape_cast %35 : vector<1x2xf32> to vector<1x1x2xf32>
    %39 = vector.broadcast %38 : vector<1x1x2xf32> to vector<1x16x2xf32>
    %40 = arith.subf %33, %39 : vector<1x16x2xf32>
    %41 = math.exp %40 : vector<1x16x2xf32>
    %cst_24 = arith.constant dense<0.000000e+00> : vector<1x2xf32>
    %42 = vector.multi_reduction <add>, %41, %cst_24 [1] : vector<1x16x2xf32> to vector<1x2xf32>
    %43 = arith.addf %37, %42 : vector<1x2xf32>
    %44 = tpu.reciprocal %43 {approx = true} : vector<1x2xf32> -> vector<1x2xf32>
    %45 = arith.mulf %43, %44 : vector<1x2xf32>
    %cst_25 = arith.constant 2.000000e+00 : f32
    %46 = vector.broadcast %cst_25 : f32 to vector<1x2xf32>
    %47 = arith.subf %46, %45 : vector<1x2xf32>
    %48 = arith.mulf %44, %47 : vector<1x2xf32>
    %49 = arith.mulf %43, %48 : vector<1x2xf32>
    %cst_26 = arith.constant 2.000000e+00 : f32
    %50 = vector.broadcast %cst_26 : f32 to vector<1x2xf32>
    %51 = arith.subf %50, %49 : vector<1x2xf32>
    %52 = arith.mulf %48, %51 : vector<1x2xf32>
    %53 = arith.mulf %37, %52 : vector<1x2xf32>
    %54 = vector.shape_cast %52 : vector<1x2xf32> to vector<1x1x2xf32>
    %55 = vector.broadcast %54 : vector<1x1x2xf32> to vector<1x16x2xf32>
    %56 = arith.mulf %41, %55 : vector<1x16x2xf32>
    %cst_27 = arith.constant dense<0.000000e+00> : vector<1x2x8xf32>
    %57 = tpu.matmul %56, %11, %cst_27 {dimension_numbers = #tpu.dot_dimension_numbers<[1], [1], [2], [2], [0, 0, 0, 2, 1, 2], [0], [0]>} : vector<1x16x2xf32>, vector<1x16x8xf32>, vector<1x2x8xf32> -> vector<1x2x8xf32>
    %58 = vector.shape_cast %2 : vector<2x8xf32> to vector<1x2x8xf32>
    %59 = arith.mulf %57, %58 : vector<1x2x8xf32>
    %cst_28 = arith.constant dense<0.000000e+00> : vector<1x8xf32>
    %60 = vector.multi_reduction <add>, %59, %cst_28 [1] : vector<1x2x8xf32> to vector<1x8xf32>
    %cst_29 = arith.constant dense<0.000000e+00> : vector<1x8xf32>
    %61 = tpu.matmul %53, %2, %cst_29 {dimension_numbers = #tpu.dot_dimension_numbers<[1], [0], [0], [1], [0, 0, 1, 1], [], []>} : vector<1x2xf32>, vector<2x8xf32>, vector<1x8xf32> -> vector<1x8xf32>
    %62 = arith.mulf %61, %25 : vector<1x8xf32>
    %63 = arith.addf %60, %62 : vector<1x8xf32>
    %c0_30 = arith.constant 0 : index
    %c0_31 = arith.constant 0 : index
    %64 = vector.load %arg7[%c0_30, %c0_31] : memref<8x8xf32, #tpu.memory_space<vmem>>, vector<8x8xf32>
    %cst_32 = arith.constant dense<0.000000e+00> : vector<1x8xf32>
    %65 = tpu.matmul %63, %64, %cst_32 {dimension_numbers = #tpu.dot_dimension_numbers<[1], [0], [0], [1], [0, 0, 1, 1], [], []>} : vector<1x8xf32>, vector<8x8xf32>, vector<1x8xf32> -> vector<1x8xf32>
    %c0_33 = arith.constant 0 : index
    %c0_34 = arith.constant 0 : index
    %66 = vector.load %arg8[%c0_33, %c0_34] : memref<1x8xf32, #tpu.memory_space<vmem>>, vector<1x8xf32>
    %67 = arith.addf %65, %66 : vector<1x8xf32>
    %68 = vector.shape_cast %67 : vector<1x8xf32> to vector<1x1x8xf32>
    %c0_35 = arith.constant 0 : index
    %c0_36 = arith.constant 0 : index
    %c0_37 = arith.constant 0 : index
    %69 = vector.load %arg11[%c0_35, %c0_36, %c0_37] : memref<1x1x8xf32, #tpu.memory_space<vmem>>, vector<1x1x8xf32>
    tpu.vector_store %arg11[%c0_35, %c0_36, %c0_37], %68 {strides = array<i32>} : memref<1x1x8xf32, #tpu.memory_space<vmem>>, vector<1x1x8xf32>,
    return
  }
  func.func @transform_0(%arg0: i32) -> (i32, i32, i32) {
    %c0_i32 = arith.constant 0 : i32
    %c0_i32_0 = arith.constant 0 : i32
    %c0_i32_1 = arith.constant 0 : i32
    return %arg0, %c0_i32, %c0_i32_0 : i32, i32, i32
  }
  func.func @transform_1(%arg0: i32) -> (i32, i32) {
    %c0_i32 = arith.constant 0 : i32
    %c0_i32_0 = arith.constant 0 : i32
    %c0_i32_1 = arith.constant 0 : i32
    return %c0_i32, %c0_i32_0 : i32, i32
  }
  func.func @transform_2(%arg0: i32) -> (i32, i32) {
    %c0_i32 = arith.constant 0 : i32
    %c0_i32_0 = arith.constant 0 : i32
    %c0_i32_1 = arith.constant 0 : i32
    return %c0_i32, %c0_i32_0 : i32, i32
  }
  func.func @transform_3(%arg0: i32) -> (i32, i32) {
    %c0_i32 = arith.constant 0 : i32
    %c0_i32_0 = arith.constant 0 : i32
    %c0_i32_1 = arith.constant 0 : i32
    return %c0_i32, %c0_i32_0 : i32, i32
  }
  func.func @transform_4(%arg0: i32) -> (i32, i32) {
    %c0_i32 = arith.constant 0 : i32
    %c0_i32_0 = arith.constant 0 : i32
    %c0_i32_1 = arith.constant 0 : i32
    return %c0_i32, %c0_i32_0 : i32, i32
  }
  func.func @transform_5(%arg0: i32) -> (i32, i32) {
    %c0_i32 = arith.constant 0 : i32
    %c0_i32_0 = arith.constant 0 : i32
    %c0_i32_1 = arith.constant 0 : i32
    return %c0_i32, %c0_i32_0 : i32, i32
  }
  func.func @transform_6(%arg0: i32) -> (i32, i32) {
    %c0_i32 = arith.constant 0 : i32
    %c0_i32_0 = arith.constant 0 : i32
    %c0_i32_1 = arith.constant 0 : i32
    return %c0_i32, %c0_i32_0 : i32, i32
  }
  func.func @transform_7(%arg0: i32) -> (i32, i32) {
    %c0_i32 = arith.constant 0 : i32
    %c0_i32_0 = arith.constant 0 : i32
    %c0_i32_1 = arith.constant 0 : i32
    return %c0_i32, %c0_i32_0 : i32, i32
  }
  func.func @transform_8(%arg0: i32) -> (i32, i32) {
    %c0_i32 = arith.constant 0 : i32
    %c0_i32_0 = arith.constant 0 : i32
    %c0_i32_1 = arith.constant 0 : i32
    return %c0_i32, %c0_i32_0 : i32, i32
  }
  func.func @transform_9(%arg0: i32) -> (i32, i32) {
    %c0_i32 = arith.constant 0 : i32
    %c0_i32_0 = arith.constant 0 : i32
    %c0_i32_1 = arith.constant 0 : i32
    return %c0_i32, %c0_i32_0 : i32, i32
  }
  func.func @transform_10(%arg0: i32) -> (i32, i32, i32) {
    %c0_i32 = arith.constant 0 : i32
    %c0_i32_0 = arith.constant 0 : i32
    %c0_i32_1 = arith.constant 0 : i32
    return %arg0, %c0_i32, %c0_i32_0 : i32, i32, i32
  }
}

module attributes {stable_mosaic.version = 11 : i64} {
  func.func @_attention_pool_kernel(%arg0: i32, %arg1: memref<1x16x8xf32, #tpu.memory_space<vmem>>, %arg2: memref<16x16xf32, #tpu.memory_space<vmem>>, %arg3: memref<1x16xf32, #tpu.memory_space<vmem>>, %arg4: memref<8x8xf32, #tpu.memory_space<vmem>>, %arg5: memref<1x8xf32, #tpu.memory_space<vmem>>, %arg6: memref<8x16xf32, #tpu.memory_space<vmem>>, %arg7: memref<8x8xf32, #tpu.memory_space<vmem>>, %arg8: memref<1x8xf32, #tpu.memory_space<vmem>>, %arg9: memref<8x2xf32, #tpu.memory_space<vmem>>, %arg10: memref<2x8xf32, #tpu.memory_space<vmem>>, %arg11: memref<1x1x8xf32, #tpu.memory_space<vmem>>) attributes {dimension_semantics = [#tpu.dimension_semantics<parallel>], iteration_bounds = array<i64: 2>, scalar_prefetch = 0 : i64, scratch_operands = 0 : i64, tpu.core_type = #tpu.core_type<tc>, window_params = [{transform_indices = @transform_0, window_bounds = array<i64: 1, 16, 8>}, {pipeline_mode = #tpu.pipeline_mode<synchronous>, transform_indices = @transform_1, window_bounds = array<i64: 16, 16>}, {pipeline_mode = #tpu.pipeline_mode<synchronous>, transform_indices = @transform_2, window_bounds = array<i64: 1, 16>}, {pipeline_mode = #tpu.pipeline_mode<synchronous>, transform_indices = @transform_3, window_bounds = array<i64: 8, 8>}, {pipeline_mode = #tpu.pipeline_mode<synchronous>, transform_indices = @transform_4, window_bounds = array<i64: 1, 8>}, {pipeline_mode = #tpu.pipeline_mode<synchronous>, transform_indices = @transform_5, window_bounds = array<i64: 8, 16>}, {pipeline_mode = #tpu.pipeline_mode<synchronous>, transform_indices = @transform_6, window_bounds = array<i64: 8, 8>}, {pipeline_mode = #tpu.pipeline_mode<synchronous>, transform_indices = @transform_7, window_bounds = array<i64: 1, 8>}, {pipeline_mode = #tpu.pipeline_mode<synchronous>, transform_indices = @transform_8, window_bounds = array<i64: 8, 2>}, {pipeline_mode = #tpu.pipeline_mode<synchronous>, transform_indices = @transform_9, window_bounds = array<i64: 2, 8>}, {transform_indices = @transform_10, window_bounds = array<i64: 1, 1, 8>}]} {
    %c0 = arith.constant 0 : index
    %c0_0 = arith.constant 0 : index
    %c0_1 = arith.constant 0 : index
    %0 = vector.load %arg1[%c0, %c0_0, %c0_1] : memref<1x16x8xf32, #tpu.memory_space<vmem>>, vector<1x16x8xf32>
    %c0_2 = arith.constant 0 : index
    %c0_3 = arith.constant 0 : index
    %1 = vector.load %arg9[%c0_2, %c0_3] : memref<8x2xf32, #tpu.memory_space<vmem>>, vector<8x2xf32>
    %c0_4 = arith.constant 0 : index
    %c0_5 = arith.constant 0 : index
    %2 = vector.load %arg10[%c0_4, %c0_5] : memref<2x8xf32, #tpu.memory_space<vmem>>, vector<2x8xf32>
    %3 = vector.shape_cast %0 : vector<1x16x8xf32> to vector<16x8xf32>
    %c0_6 = arith.constant 0 : index
    %c0_7 = arith.constant 0 : index
    %4 = vector.load %arg6[%c0_6, %c0_7] : memref<8x16xf32, #tpu.memory_space<vmem>>, vector<8x16xf32>
    %cst = arith.constant dense<0.000000e+00> : vector<16x16xf32>
    %5 = tpu.matmul %3, %4, %cst {dimension_numbers = #tpu.dot_dimension_numbers<[1], [0], [0], [1], [0, 0, 1, 1], [], []>} : vector<16x8xf32>, vector<8x16xf32>, vector<16x16xf32> -> vector<16x16xf32>
    %6 = vector.shape_cast %5 : vector<16x16xf32> to vector<1x16x16xf32>
    %c0_8 = arith.constant 0 : index
    %c0_9 = arith.constant 0 : index
    %7 = vector.load %arg2[%c0_8, %c0_9] : memref<16x16xf32, #tpu.memory_space<vmem>>, vector<16x16xf32>
    %8 = vector.shape_cast %7 : vector<16x16xf32> to vector<1x16x16xf32>
    %9 = arith.addf %6, %8 : vector<1x16x16xf32>
    %10 = vector.extract_strided_slice %9 {offsets = [0, 0, 0], sizes = [1, 16, 8], strides = [1, 1, 1]} : vector<1x16x16xf32> to vector<1x16x8xf32>
    %11 = vector.extract_strided_slice %9 {offsets = [0, 0, 8], sizes = [1, 16, 8], strides = [1, 1, 1]} : vector<1x16x16xf32> to vector<1x16x8xf32>
    %cst_10 = arith.constant dense<0.000000e+00> : vector<1x8xf32>
    %12 = vector.multi_reduction <add>, %0, %cst_10 [1] : vector<1x16x8xf32> to vector<1x8xf32>
    %cst_11 = arith.constant 1.600000e+01 : f32
    %13 = vector.broadcast %cst_11 : f32 to vector<1x8xf32>
    %14 = arith.divf %12, %13 : vector<1x8xf32>
    %c0_12 = arith.constant 0 : index
    %c0_13 = arith.constant 0 : index
    %15 = vector.load %arg4[%c0_12, %c0_13] : memref<8x8xf32, #tpu.memory_space<vmem>>, vector<8x8xf32>
    %cst_14 = arith.constant dense<0.000000e+00> : vector<1x8xf32>
    %16 = tpu.matmul %14, %15, %cst_14 {dimension_numbers = #tpu.dot_dimension_numbers<[1], [0], [0], [1], [0, 0, 1, 1], [], []>} : vector<1x8xf32>, vector<8x8xf32>, vector<1x8xf32> -> vector<1x8xf32>
    %c0_15 = arith.constant 0 : index
    %c0_16 = arith.constant 0 : index
    %17 = vector.load %arg5[%c0_15, %c0_16] : memref<1x8xf32, #tpu.memory_space<vmem>>, vector<1x8xf32>
    %18 = arith.addf %16, %17 : vector<1x8xf32>
    %cst_17 = arith.constant dense<0.000000e+00> : vector<1x16xf32>
    %19 = vector.multi_reduction <add>, %9, %cst_17 [1] : vector<1x16x16xf32> to vector<1x16xf32>
    %cst_18 = arith.constant 1.600000e+01 : f32
    %20 = vector.broadcast %cst_18 : f32 to vector<1x16xf32>
    %21 = arith.divf %19, %20 : vector<1x16xf32>
    %c0_19 = arith.constant 0 : index
    %c0_20 = arith.constant 0 : index
    %22 = vector.load %arg3[%c0_19, %c0_20] : memref<1x16xf32, #tpu.memory_space<vmem>>, vector<1x16xf32>
    %23 = arith.addf %21, %22 : vector<1x16xf32>
    %24 = vector.extract_strided_slice %23 {offsets = [0, 0], sizes = [1, 8], strides = [1, 1]} : vector<1x16xf32> to vector<1x8xf32>
    %25 = vector.extract_strided_slice %23 {offsets = [0, 8], sizes = [1, 8], strides = [1, 1]} : vector<1x16xf32> to vector<1x8xf32>
    %26 = arith.mulf %18, %24 : vector<1x8xf32>
    %cst_21 = arith.constant dense<0.000000e+00> : vector<1x2xf32>
    %27 = tpu.matmul %26, %1, %cst_21 {dimension_numbers = #tpu.dot_dimension_numbers<[1], [0], [0], [1], [0, 0, 1, 1], [], []>} : vector<1x8xf32>, vector<8x2xf32>, vector<1x2xf32> -> vector<1x2xf32>
    %28 = vector.shape_cast %18 : vector<1x8xf32> to vector<1x1x8xf32>
    %29 = vector.broadcast %28 : vector<1x1x8xf32> to vector<1x16x8xf32>
    %30 = arith.mulf %29, %10 : vector<1x16x8xf32>
    %31 = vector.shape_cast %30 : vector<1x16x8xf32> to vector<16x8xf32>
    %cst_22 = arith.constant dense<0.000000e+00> : vector<16x2xf32>
    %32 = tpu.matmul %31, %1, %cst_22 {dimension_numbers = #tpu.dot_dimension_numbers<[1], [0], [0], [1], [0, 0, 1, 1], [], []>} : vector<16x8xf32>, vector<8x2xf32>, vector<16x2xf32> -> vector<16x2xf32>
    %33 = vector.shape_cast %32 : vector<16x2xf32> to vector<1x16x2xf32>
    %cst_23 = arith.constant dense<0xFF800000> : vector<1x2xf32>
    %34 = vector.multi_reduction <maximumf>, %33, %cst_23 [1] : vector<1x16x2xf32> to vector<1x2xf32>
    %35 = arith.maximumf %27, %34 : vector<1x2xf32>
    %36 = arith.subf %27, %35 : vector<1x2xf32>
    %37 = math.exp %36 : vector<1x2xf32>
    %38 = vector.shape_cast %35 : vector<1x2xf32> to vector<1x1x2xf32>
    %39 = vector.broadcast %38 : vector<1x1x2xf32> to vector<1x16x2xf32>
    %40 = arith.subf %33, %39 : vector<1x16x2xf32>
    %41 = math.exp %40 : vector<1x16x2xf32>
    %cst_24 = arith.constant dense<0.000000e+00> : vector<1x2xf32>
    %42 = vector.multi_reduction <add>, %41, %cst_24 [1] : vector<1x16x2xf32> to vector<1x2xf32>
    %43 = arith.addf %37, %42 : vector<1x2xf32>
    %44 = tpu.reciprocal %43 {approx = true} : vector<1x2xf32> -> vector<1x2xf32>
    %45 = arith.mulf %43, %44 : vector<1x2xf32>
    %cst_25 = arith.constant 2.000000e+00 : f32
    %46 = vector.broadcast %cst_25 : f32 to vector<1x2xf32>
    %47 = arith.subf %46, %45 : vector<1x2xf32>
    %48 = arith.mulf %44, %47 : vector<1x2xf32>
    %49 = arith.mulf %43, %48 : vector<1x2xf32>
    %cst_26 = arith.constant 2.000000e+00 : f32
    %50 = vector.broadcast %cst_26 : f32 to vector<1x2xf32>
    %51 = arith.subf %50, %49 : vector<1x2xf32>
    %52 = arith.mulf %48, %51 : vector<1x2xf32>
    %53 = arith.mulf %37, %52 : vector<1x2xf32>
    %54 = vector.shape_cast %52 : vector<1x2xf32> to vector<1x1x2xf32>
    %55 = vector.broadcast %54 : vector<1x1x2xf32> to vector<1x16x2xf32>
    %56 = arith.mulf %41, %55 : vector<1x16x2xf32>
    %cst_27 = arith.constant dense<0.000000e+00> : vector<1x2x8xf32>
    %57 = tpu.matmul %56, %11, %cst_27 {dimension_numbers = #tpu.dot_dimension_numbers<[1], [1], [2], [2], [0, 0, 0, 2, 1, 2], [0], [0]>} : vector<1x16x2xf32>, vector<1x16x8xf32>, vector<1x2x8xf32> -> vector<1x2x8xf32>
    %58 = vector.shape_cast %2 : vector<2x8xf32> to vector<1x2x8xf32>
    %59 = arith.mulf %57, %58 : vector<1x2x8xf32>
    %cst_28 = arith.constant dense<0.000000e+00> : vector<1x8xf32>
    %60 = vector.multi_reduction <add>, %59, %cst_28 [1] : vector<1x2x8xf32> to vector<1x8xf32>
    %cst_29 = arith.constant dense<0.000000e+00> : vector<1x8xf32>
    %61 = tpu.matmul %53, %2, %cst_29 {dimension_numbers = #tpu.dot_dimension_numbers<[1], [0], [0], [1], [0, 0, 1, 1], [], []>} : vector<1x2xf32>, vector<2x8xf32>, vector<1x8xf32> -> vector<1x8xf32>
    %62 = arith.mulf %61, %25 : vector<1x8xf32>
    %63 = arith.addf %60, %62 : vector<1x8xf32>
    %c0_30 = arith.constant 0 : index
    %c0_31 = arith.constant 0 : index
    %64 = vector.load %arg7[%c0_30, %c0_31] : memref<8x8xf32, #tpu.memory_space<vmem>>, vector<8x8xf32>
    %cst_32 = arith.constant dense<0.000000e+00> : vector<1x8xf32>
    %65 = tpu.matmul %63, %64, %cst_32 {dimension_numbers = #tpu.dot_dimension_numbers<[1], [0], [0], [1], [0, 0, 1, 1], [], []>} : vector<1x8xf32>, vector<8x8xf32>, vector<1x8xf32> -> vector<1x8xf32>
    %c0_33 = arith.constant 0 : index
    %c0_34 = arith.constant 0 : index
    %66 = vector.load %arg8[%c0_33, %c0_34] : memref<1x8xf32, #tpu.memory_space<vmem>>, vector<1x8xf32>
    %67 = arith.addf %65, %66 : vector<1x8xf32>
    %68 = vector.shape_cast %67 : vector<1x8xf32> to vector<1x1x8xf32>
    %c0_35 = arith.constant 0 : index
    %c0_36 = arith.constant 0 : index
    %c0_37 = arith.constant 0 : index
    %69 = vector.load %arg11[%c0_35, %c0_36, %c0_37] : memref<1x1x8xf32, #tpu.memory_space<vmem>>, vector<1x1x8xf32>
    tpu.vector_store %arg11[%c0_35, %c0_36, %c0_37], %68 {strides = array<i32>} : memref<1x1x8xf32, #tpu.memory_space<vmem>>, vector<1x1x8xf32>,
    return
  }
  func.func @transform_0(%arg0: i32) -> (i32, i32, i32) {
    %c0_i32 = arith.constant 0 : i32
    %c0_i32_0 = arith.constant 0 : i32
    %c0_i32_1 = arith.constant 0 : i32
    return %arg0, %c0_i32, %c0_i32_0 : i32, i32, i32
  }
  func.func @transform_1(%arg0: i32) -> (i32, i32) {
    %c0_i32 = arith.constant 0 : i32
    %c0_i32_0 = arith.constant 0 : i32
    %c0_i32_1 = arith.constant 0 : i32
    return %c0_i32, %c0_i32_0 : i32, i32
  }
  func.func @transform_2(%arg0: i32) -> (i32, i32) {
    %c0_i32 = arith.constant 0 : i32
    %c0_i32_0 = arith.constant 0 : i32
    %c0_i32_1 = arith.constant 0 : i32
    return %c0_i32, %c0_i32_0 : i32, i32
  }
  func.func @transform_3(%arg0: i32) -> (i32, i32) {
    %c0_i32 = arith.constant 0 : i32
    %c0_i32_0 = arith.constant 0 : i32
    %c0_i32_1 = arith.constant 0 : i32
    return %c0_i32, %c0_i32_0 : i32, i32
  }
  func.func @transform_4(%arg0: i32) -> (i32, i32) {
    %c0_i32 = arith.constant 0 : i32
    %c0_i32_0 = arith.constant 0 : i32
    %c0_i32_1 = arith.constant 0 : i32
    return %c0_i32, %c0_i32_0 : i32, i32
  }
  func.func @transform_5(%arg0: i32) -> (i32, i32) {
    %c0_i32 = arith.constant 0 : i32
    %c0_i32_0 = arith.constant 0 : i32
    %c0_i32_1 = arith.constant 0 : i32
    return %c0_i32, %c0_i32_0 : i32, i32
  }
  func.func @transform_6(%arg0: i32) -> (i32, i32) {
    %c0_i32 = arith.constant 0 : i32
    %c0_i32_0 = arith.constant 0 : i32
    %c0_i32_1 = arith.constant 0 : i32
    return %c0_i32, %c0_i32_0 : i32, i32
  }
  func.func @transform_7(%arg0: i32) -> (i32, i32) {
    %c0_i32 = arith.constant 0 : i32
    %c0_i32_0 = arith.constant 0 : i32
    %c0_i32_1 = arith.constant 0 : i32
    return %c0_i32, %c0_i32_0 : i32, i32
  }
  func.func @transform_8(%arg0: i32) -> (i32, i32) {
    %c0_i32 = arith.constant 0 : i32
    %c0_i32_0 = arith.constant 0 : i32
    %c0_i32_1 = arith.constant 0 : i32
    return %c0_i32, %c0_i32_0 : i32, i32
  }
  func.func @transform_9(%arg0: i32) -> (i32, i32) {
    %c0_i32 = arith.constant 0 : i32
    %c0_i32_0 = arith.constant 0 : i32
    %c0_i32_1 = arith.constant 0 : i32
    return %c0_i32, %c0_i32_0 : i32, i32
  }
  func.func @transform_10(%arg0: i32) -> (i32, i32, i32) {
    %c0_i32 = arith.constant 0 : i32
    %c0_i32_0 = arith.constant 0 : i32
    %c0_i32_1 = arith.constant 0 : i32
    return %arg0, %c0_i32, %c0_i32_0 : i32, i32, i32
  }
}

module attributes {stable_mosaic.version = 11 : i64} {
  func.func @_attention_pool_kernel(%arg0: i32, %arg1: memref<1x16x8xf32, #tpu.memory_space<vmem>>, %arg2: memref<16x16xf32, #tpu.memory_space<vmem>>, %arg3: memref<1x16xf32, #tpu.memory_space<vmem>>, %arg4: memref<8x8xf32, #tpu.memory_space<vmem>>, %arg5: memref<1x8xf32, #tpu.memory_space<vmem>>, %arg6: memref<8x16xf32, #tpu.memory_space<vmem>>, %arg7: memref<8x8xf32, #tpu.memory_space<vmem>>, %arg8: memref<1x8xf32, #tpu.memory_space<vmem>>, %arg9: memref<8x2xf32, #tpu.memory_space<vmem>>, %arg10: memref<2x8xf32, #tpu.memory_space<vmem>>, %arg11: memref<1x1x8xf32, #tpu.memory_space<vmem>>) attributes {dimension_semantics = [#tpu.dimension_semantics<parallel>], iteration_bounds = array<i64: 2>, scalar_prefetch = 0 : i64, scratch_operands = 0 : i64, tpu.core_type = #tpu.core_type<tc>, window_params = [{transform_indices = @transform_0, window_bounds = array<i64: 1, 16, 8>}, {pipeline_mode = #tpu.pipeline_mode<synchronous>, transform_indices = @transform_1, window_bounds = array<i64: 16, 16>}, {pipeline_mode = #tpu.pipeline_mode<synchronous>, transform_indices = @transform_2, window_bounds = array<i64: 1, 16>}, {pipeline_mode = #tpu.pipeline_mode<synchronous>, transform_indices = @transform_3, window_bounds = array<i64: 8, 8>}, {pipeline_mode = #tpu.pipeline_mode<synchronous>, transform_indices = @transform_4, window_bounds = array<i64: 1, 8>}, {pipeline_mode = #tpu.pipeline_mode<synchronous>, transform_indices = @transform_5, window_bounds = array<i64: 8, 16>}, {pipeline_mode = #tpu.pipeline_mode<synchronous>, transform_indices = @transform_6, window_bounds = array<i64: 8, 8>}, {pipeline_mode = #tpu.pipeline_mode<synchronous>, transform_indices = @transform_7, window_bounds = array<i64: 1, 8>}, {pipeline_mode = #tpu.pipeline_mode<synchronous>, transform_indices = @transform_8, window_bounds = array<i64: 8, 2>}, {pipeline_mode = #tpu.pipeline_mode<synchronous>, transform_indices = @transform_9, window_bounds = array<i64: 2, 8>}, {transform_indices = @transform_10, window_bounds = array<i64: 1, 1, 8>}]} {
    %c0 = arith.constant 0 : index
    %c0_0 = arith.constant 0 : index
    %c0_1 = arith.constant 0 : index
    %0 = vector.load %arg1[%c0, %c0_0, %c0_1] : memref<1x16x8xf32, #tpu.memory_space<vmem>>, vector<1x16x8xf32>
    %c0_2 = arith.constant 0 : index
    %c0_3 = arith.constant 0 : index
    %1 = vector.load %arg9[%c0_2, %c0_3] : memref<8x2xf32, #tpu.memory_space<vmem>>, vector<8x2xf32>
    %c0_4 = arith.constant 0 : index
    %c0_5 = arith.constant 0 : index
    %2 = vector.load %arg10[%c0_4, %c0_5] : memref<2x8xf32, #tpu.memory_space<vmem>>, vector<2x8xf32>
    %3 = vector.shape_cast %0 : vector<1x16x8xf32> to vector<16x8xf32>
    %c0_6 = arith.constant 0 : index
    %c0_7 = arith.constant 0 : index
    %4 = vector.load %arg6[%c0_6, %c0_7] : memref<8x16xf32, #tpu.memory_space<vmem>>, vector<8x16xf32>
    %cst = arith.constant dense<0.000000e+00> : vector<16x16xf32>
    %5 = tpu.matmul %3, %4, %cst {dimension_numbers = #tpu.dot_dimension_numbers<[1], [0], [0], [1], [0, 0, 1, 1], [], []>} : vector<16x8xf32>, vector<8x16xf32>, vector<16x16xf32> -> vector<16x16xf32>
    %6 = vector.shape_cast %5 : vector<16x16xf32> to vector<1x16x16xf32>
    %c0_8 = arith.constant 0 : index
    %c0_9 = arith.constant 0 : index
    %7 = vector.load %arg2[%c0_8, %c0_9] : memref<16x16xf32, #tpu.memory_space<vmem>>, vector<16x16xf32>
    %8 = vector.shape_cast %7 : vector<16x16xf32> to vector<1x16x16xf32>
    %9 = arith.addf %6, %8 : vector<1x16x16xf32>
    %10 = vector.extract_strided_slice %9 {offsets = [0, 0, 0], sizes = [1, 16, 8], strides = [1, 1, 1]} : vector<1x16x16xf32> to vector<1x16x8xf32>
    %11 = vector.extract_strided_slice %9 {offsets = [0, 0, 8], sizes = [1, 16, 8], strides = [1, 1, 1]} : vector<1x16x16xf32> to vector<1x16x8xf32>
    %cst_10 = arith.constant dense<0.000000e+00> : vector<1x8xf32>
    %12 = vector.multi_reduction <add>, %0, %cst_10 [1] : vector<1x16x8xf32> to vector<1x8xf32>
    %cst_11 = arith.constant 1.600000e+01 : f32
    %13 = vector.broadcast %cst_11 : f32 to vector<1x8xf32>
    %14 = arith.divf %12, %13 : vector<1x8xf32>
    %c0_12 = arith.constant 0 : index
    %c0_13 = arith.constant 0 : index
    %15 = vector.load %arg4[%c0_12, %c0_13] : memref<8x8xf32, #tpu.memory_space<vmem>>, vector<8x8xf32>
    %cst_14 = arith.constant dense<0.000000e+00> : vector<1x8xf32>
    %16 = tpu.matmul %14, %15, %cst_14 {dimension_numbers = #tpu.dot_dimension_numbers<[1], [0], [0], [1], [0, 0, 1, 1], [], []>} : vector<1x8xf32>, vector<8x8xf32>, vector<1x8xf32> -> vector<1x8xf32>
    %c0_15 = arith.constant 0 : index
    %c0_16 = arith.constant 0 : index
    %17 = vector.load %arg5[%c0_15, %c0_16] : memref<1x8xf32, #tpu.memory_space<vmem>>, vector<1x8xf32>
    %18 = arith.addf %16, %17 : vector<1x8xf32>
    %cst_17 = arith.constant dense<0.000000e+00> : vector<1x16xf32>
    %19 = vector.multi_reduction <add>, %9, %cst_17 [1] : vector<1x16x16xf32> to vector<1x16xf32>
    %cst_18 = arith.constant 1.600000e+01 : f32
    %20 = vector.broadcast %cst_18 : f32 to vector<1x16xf32>
    %21 = arith.divf %19, %20 : vector<1x16xf32>
    %c0_19 = arith.constant 0 : index
    %c0_20 = arith.constant 0 : index
    %22 = vector.load %arg3[%c0_19, %c0_20] : memref<1x16xf32, #tpu.memory_space<vmem>>, vector<1x16xf32>
    %23 = arith.addf %21, %22 : vector<1x16xf32>
    %24 = vector.extract_strided_slice %23 {offsets = [0, 0], sizes = [1, 8], strides = [1, 1]} : vector<1x16xf32> to vector<1x8xf32>
    %25 = vector.extract_strided_slice %23 {offsets = [0, 8], sizes = [1, 8], strides = [1, 1]} : vector<1x16xf32> to vector<1x8xf32>
    %26 = arith.mulf %18, %24 : vector<1x8xf32>
    %cst_21 = arith.constant dense<0.000000e+00> : vector<1x2xf32>
    %27 = tpu.matmul %26, %1, %cst_21 {dimension_numbers = #tpu.dot_dimension_numbers<[1], [0], [0], [1], [0, 0, 1, 1], [], []>} : vector<1x8xf32>, vector<8x2xf32>, vector<1x2xf32> -> vector<1x2xf32>
    %28 = vector.shape_cast %18 : vector<1x8xf32> to vector<1x1x8xf32>
    %29 = vector.broadcast %28 : vector<1x1x8xf32> to vector<1x16x8xf32>
    %30 = arith.mulf %29, %10 : vector<1x16x8xf32>
    %31 = vector.shape_cast %30 : vector<1x16x8xf32> to vector<16x8xf32>
    %cst_22 = arith.constant dense<0.000000e+00> : vector<16x2xf32>
    %32 = tpu.matmul %31, %1, %cst_22 {dimension_numbers = #tpu.dot_dimension_numbers<[1], [0], [0], [1], [0, 0, 1, 1], [], []>} : vector<16x8xf32>, vector<8x2xf32>, vector<16x2xf32> -> vector<16x2xf32>
    %33 = vector.shape_cast %32 : vector<16x2xf32> to vector<1x16x2xf32>
    %cst_23 = arith.constant dense<0xFF800000> : vector<1x2xf32>
    %34 = vector.multi_reduction <maximumf>, %33, %cst_23 [1] : vector<1x16x2xf32> to vector<1x2xf32>
    %35 = arith.maximumf %27, %34 : vector<1x2xf32>
    %36 = arith.subf %27, %35 : vector<1x2xf32>
    %37 = math.exp %36 : vector<1x2xf32>
    %38 = vector.shape_cast %35 : vector<1x2xf32> to vector<1x1x2xf32>
    %39 = vector.broadcast %38 : vector<1x1x2xf32> to vector<1x16x2xf32>
    %40 = arith.subf %33, %39 : vector<1x16x2xf32>
    %41 = math.exp %40 : vector<1x16x2xf32>
    %cst_24 = arith.constant dense<0.000000e+00> : vector<1x2xf32>
    %42 = vector.multi_reduction <add>, %41, %cst_24 [1] : vector<1x16x2xf32> to vector<1x2xf32>
    %43 = arith.addf %37, %42 : vector<1x2xf32>
    %44 = tpu.reciprocal %43 {approx = true} : vector<1x2xf32> -> vector<1x2xf32>
    %45 = arith.mulf %43, %44 : vector<1x2xf32>
    %cst_25 = arith.constant 2.000000e+00 : f32
    %46 = vector.broadcast %cst_25 : f32 to vector<1x2xf32>
    %47 = arith.subf %46, %45 : vector<1x2xf32>
    %48 = arith.mulf %44, %47 : vector<1x2xf32>
    %49 = arith.mulf %43, %48 : vector<1x2xf32>
    %cst_26 = arith.constant 2.000000e+00 : f32
    %50 = vector.broadcast %cst_26 : f32 to vector<1x2xf32>
    %51 = arith.subf %50, %49 : vector<1x2xf32>
    %52 = arith.mulf %48, %51 : vector<1x2xf32>
    %53 = arith.mulf %37, %52 : vector<1x2xf32>
    %54 = vector.shape_cast %52 : vector<1x2xf32> to vector<1x1x2xf32>
    %55 = vector.broadcast %54 : vector<1x1x2xf32> to vector<1x16x2xf32>
    %56 = arith.mulf %41, %55 : vector<1x16x2xf32>
    %57 = vector.shape_cast %56 : vector<1x16x2xf32> to vector<16x2xf32>
    %cst_27 = arith.constant dense<0.000000e+00> : vector<16x8xf32>
    %58 = tpu.matmul %57, %2, %cst_27 {dimension_numbers = #tpu.dot_dimension_numbers<[1], [0], [0], [1], [0, 0, 1, 1], [], []>} : vector<16x2xf32>, vector<2x8xf32>, vector<16x8xf32> -> vector<16x8xf32>
    %59 = vector.shape_cast %58 : vector<16x8xf32> to vector<1x16x8xf32>
    %60 = arith.mulf %59, %11 : vector<1x16x8xf32>
    %cst_28 = arith.constant dense<0.000000e+00> : vector<1x8xf32>
    %61 = vector.multi_reduction <add>, %60, %cst_28 [1] : vector<1x16x8xf32> to vector<1x8xf32>
    %cst_29 = arith.constant dense<0.000000e+00> : vector<1x8xf32>
    %62 = tpu.matmul %53, %2, %cst_29 {dimension_numbers = #tpu.dot_dimension_numbers<[1], [0], [0], [1], [0, 0, 1, 1], [], []>} : vector<1x2xf32>, vector<2x8xf32>, vector<1x8xf32> -> vector<1x8xf32>
    %63 = arith.mulf %62, %25 : vector<1x8xf32>
    %64 = arith.addf %61, %63 : vector<1x8xf32>
    %c0_30 = arith.constant 0 : index
    %c0_31 = arith.constant 0 : index
    %65 = vector.load %arg7[%c0_30, %c0_31] : memref<8x8xf32, #tpu.memory_space<vmem>>, vector<8x8xf32>
    %cst_32 = arith.constant dense<0.000000e+00> : vector<1x8xf32>
    %66 = tpu.matmul %64, %65, %cst_32 {dimension_numbers = #tpu.dot_dimension_numbers<[1], [0], [0], [1], [0, 0, 1, 1], [], []>} : vector<1x8xf32>, vector<8x8xf32>, vector<1x8xf32> -> vector<1x8xf32>
    %c0_33 = arith.constant 0 : index
    %c0_34 = arith.constant 0 : index
    %67 = vector.load %arg8[%c0_33, %c0_34] : memref<1x8xf32, #tpu.memory_space<vmem>>, vector<1x8xf32>
    %68 = arith.addf %66, %67 : vector<1x8xf32>
    %69 = vector.shape_cast %68 : vector<1x8xf32> to vector<1x1x8xf32>
    %c0_35 = arith.constant 0 : index
    %c0_36 = arith.constant 0 : index
    %c0_37 = arith.constant 0 : index
    %70 = vector.load %arg11[%c0_35, %c0_36, %c0_37] : memref<1x1x8xf32, #tpu.memory_space<vmem>>, vector<1x1x8xf32>
    tpu.vector_store %arg11[%c0_35, %c0_36, %c0_37], %69 {strides = array<i32>} : memref<1x1x8xf32, #tpu.memory_space<vmem>>, vector<1x1x8xf32>,
    return
  }
  func.func @transform_0(%arg0: i32) -> (i32, i32, i32) {
    %c0_i32 = arith.constant 0 : i32
    %c0_i32_0 = arith.constant 0 : i32
    %c0_i32_1 = arith.constant 0 : i32
    return %arg0, %c0_i32, %c0_i32_0 : i32, i32, i32
  }
  func.func @transform_1(%arg0: i32) -> (i32, i32) {
    %c0_i32 = arith.constant 0 : i32
    %c0_i32_0 = arith.constant 0 : i32
    %c0_i32_1 = arith.constant 0 : i32
    return %c0_i32, %c0_i32_0 : i32, i32
  }
  func.func @transform_2(%arg0: i32) -> (i32, i32) {
    %c0_i32 = arith.constant 0 : i32
    %c0_i32_0 = arith.constant 0 : i32
    %c0_i32_1 = arith.constant 0 : i32
    return %c0_i32, %c0_i32_0 : i32, i32
  }
  func.func @transform_3(%arg0: i32) -> (i32, i32) {
    %c0_i32 = arith.constant 0 : i32
    %c0_i32_0 = arith.constant 0 : i32
    %c0_i32_1 = arith.constant 0 : i32
    return %c0_i32, %c0_i32_0 : i32, i32
  }
  func.func @transform_4(%arg0: i32) -> (i32, i32) {
    %c0_i32 = arith.constant 0 : i32
    %c0_i32_0 = arith.constant 0 : i32
    %c0_i32_1 = arith.constant 0 : i32
    return %c0_i32, %c0_i32_0 : i32, i32
  }
  func.func @transform_5(%arg0: i32) -> (i32, i32) {
    %c0_i32 = arith.constant 0 : i32
    %c0_i32_0 = arith.constant 0 : i32
    %c0_i32_1 = arith.constant 0 : i32
    return %c0_i32, %c0_i32_0 : i32, i32
  }
  func.func @transform_6(%arg0: i32) -> (i32, i32) {
    %c0_i32 = arith.constant 0 : i32
    %c0_i32_0 = arith.constant 0 : i32
    %c0_i32_1 = arith.constant 0 : i32
    return %c0_i32, %c0_i32_0 : i32, i32
  }
  func.func @transform_7(%arg0: i32) -> (i32, i32) {
    %c0_i32 = arith.constant 0 : i32
    %c0_i32_0 = arith.constant 0 : i32
    %c0_i32_1 = arith.constant 0 : i32
    return %c0_i32, %c0_i32_0 : i32, i32
  }
  func.func @transform_8(%arg0: i32) -> (i32, i32) {
    %c0_i32 = arith.constant 0 : i32
    %c0_i32_0 = arith.constant 0 : i32
    %c0_i32_1 = arith.constant 0 : i32
    return %c0_i32, %c0_i32_0 : i32, i32
  }
  func.func @transform_9(%arg0: i32) -> (i32, i32) {
    %c0_i32 = arith.constant 0 : i32
    %c0_i32_0 = arith.constant 0 : i32
    %c0_i32_1 = arith.constant 0 : i32
    return %c0_i32, %c0_i32_0 : i32, i32
  }
  func.func @transform_10(%arg0: i32) -> (i32, i32, i32) {
    %c0_i32 = arith.constant 0 : i32
    %c0_i32_0 = arith.constant 0 : i32
    %c0_i32_1 = arith.constant 0 : i32
    return %arg0, %c0_i32, %c0_i32_0 : i32, i32, i32
  }
}

module attributes {stable_mosaic.version = 11 : i64} {
  func.func @_attention_pool_kernel(%arg0: i32, %arg1: memref<1x16x8xf32, #tpu.memory_space<vmem>>, %arg2: memref<16x16xf32, #tpu.memory_space<vmem>>, %arg3: memref<1x16xf32, #tpu.memory_space<vmem>>, %arg4: memref<8x8xf32, #tpu.memory_space<vmem>>, %arg5: memref<1x8xf32, #tpu.memory_space<vmem>>, %arg6: memref<8x16xf32, #tpu.memory_space<vmem>>, %arg7: memref<8x8xf32, #tpu.memory_space<vmem>>, %arg8: memref<1x8xf32, #tpu.memory_space<vmem>>, %arg9: memref<8x2xf32, #tpu.memory_space<vmem>>, %arg10: memref<2x8xf32, #tpu.memory_space<vmem>>, %arg11: memref<1x1x8xf32, #tpu.memory_space<vmem>>) attributes {dimension_semantics = [#tpu.dimension_semantics<parallel>], iteration_bounds = array<i64: 2>, scalar_prefetch = 0 : i64, scratch_operands = 0 : i64, tpu.core_type = #tpu.core_type<tc>, window_params = [{transform_indices = @transform_0, window_bounds = array<i64: 1, 16, 8>}, {pipeline_mode = #tpu.pipeline_mode<synchronous>, transform_indices = @transform_1, window_bounds = array<i64: 16, 16>}, {pipeline_mode = #tpu.pipeline_mode<synchronous>, transform_indices = @transform_2, window_bounds = array<i64: 1, 16>}, {pipeline_mode = #tpu.pipeline_mode<synchronous>, transform_indices = @transform_3, window_bounds = array<i64: 8, 8>}, {pipeline_mode = #tpu.pipeline_mode<synchronous>, transform_indices = @transform_4, window_bounds = array<i64: 1, 8>}, {pipeline_mode = #tpu.pipeline_mode<synchronous>, transform_indices = @transform_5, window_bounds = array<i64: 8, 16>}, {pipeline_mode = #tpu.pipeline_mode<synchronous>, transform_indices = @transform_6, window_bounds = array<i64: 8, 8>}, {pipeline_mode = #tpu.pipeline_mode<synchronous>, transform_indices = @transform_7, window_bounds = array<i64: 1, 8>}, {pipeline_mode = #tpu.pipeline_mode<synchronous>, transform_indices = @transform_8, window_bounds = array<i64: 8, 2>}, {pipeline_mode = #tpu.pipeline_mode<synchronous>, transform_indices = @transform_9, window_bounds = array<i64: 2, 8>}, {transform_indices = @transform_10, window_bounds = array<i64: 1, 1, 8>}]} {
    %c0 = arith.constant 0 : index
    %c0_0 = arith.constant 0 : index
    %c0_1 = arith.constant 0 : index
    %0 = vector.load %arg1[%c0, %c0_0, %c0_1] : memref<1x16x8xf32, #tpu.memory_space<vmem>>, vector<1x16x8xf32>
    %c0_2 = arith.constant 0 : index
    %c0_3 = arith.constant 0 : index
    %1 = vector.load %arg9[%c0_2, %c0_3] : memref<8x2xf32, #tpu.memory_space<vmem>>, vector<8x2xf32>
    %c0_4 = arith.constant 0 : index
    %c0_5 = arith.constant 0 : index
    %2 = vector.load %arg10[%c0_4, %c0_5] : memref<2x8xf32, #tpu.memory_space<vmem>>, vector<2x8xf32>
    %3 = vector.shape_cast %0 : vector<1x16x8xf32> to vector<16x8xf32>
    %c0_6 = arith.constant 0 : index
    %c0_7 = arith.constant 0 : index
    %4 = vector.load %arg6[%c0_6, %c0_7] : memref<8x16xf32, #tpu.memory_space<vmem>>, vector<8x16xf32>
    %cst = arith.constant dense<0.000000e+00> : vector<16x16xf32>
    %5 = tpu.matmul %3, %4, %cst {dimension_numbers = #tpu.dot_dimension_numbers<[1], [0], [0], [1], [0, 0, 1, 1], [], []>} : vector<16x8xf32>, vector<8x16xf32>, vector<16x16xf32> -> vector<16x16xf32>
    %6 = vector.shape_cast %5 : vector<16x16xf32> to vector<1x16x16xf32>
    %c0_8 = arith.constant 0 : index
    %c0_9 = arith.constant 0 : index
    %7 = vector.load %arg2[%c0_8, %c0_9] : memref<16x16xf32, #tpu.memory_space<vmem>>, vector<16x16xf32>
    %8 = vector.shape_cast %7 : vector<16x16xf32> to vector<1x16x16xf32>
    %9 = arith.addf %6, %8 : vector<1x16x16xf32>
    %10 = vector.extract_strided_slice %9 {offsets = [0, 0, 0], sizes = [1, 16, 8], strides = [1, 1, 1]} : vector<1x16x16xf32> to vector<1x16x8xf32>
    %11 = vector.extract_strided_slice %9 {offsets = [0, 0, 8], sizes = [1, 16, 8], strides = [1, 1, 1]} : vector<1x16x16xf32> to vector<1x16x8xf32>
    %cst_10 = arith.constant dense<0.000000e+00> : vector<1x8xf32>
    %12 = vector.multi_reduction <add>, %0, %cst_10 [1] : vector<1x16x8xf32> to vector<1x8xf32>
    %cst_11 = arith.constant 1.600000e+01 : f32
    %13 = vector.broadcast %cst_11 : f32 to vector<1x8xf32>
    %14 = arith.divf %12, %13 : vector<1x8xf32>
    %c0_12 = arith.constant 0 : index
    %c0_13 = arith.constant 0 : index
    %15 = vector.load %arg4[%c0_12, %c0_13] : memref<8x8xf32, #tpu.memory_space<vmem>>, vector<8x8xf32>
    %cst_14 = arith.constant dense<0.000000e+00> : vector<1x8xf32>
    %16 = tpu.matmul %14, %15, %cst_14 {dimension_numbers = #tpu.dot_dimension_numbers<[1], [0], [0], [1], [0, 0, 1, 1], [], []>} : vector<1x8xf32>, vector<8x8xf32>, vector<1x8xf32> -> vector<1x8xf32>
    %c0_15 = arith.constant 0 : index
    %c0_16 = arith.constant 0 : index
    %17 = vector.load %arg5[%c0_15, %c0_16] : memref<1x8xf32, #tpu.memory_space<vmem>>, vector<1x8xf32>
    %18 = arith.addf %16, %17 : vector<1x8xf32>
    %cst_17 = arith.constant dense<0.000000e+00> : vector<1x16xf32>
    %19 = vector.multi_reduction <add>, %9, %cst_17 [1] : vector<1x16x16xf32> to vector<1x16xf32>
    %cst_18 = arith.constant 1.600000e+01 : f32
    %20 = vector.broadcast %cst_18 : f32 to vector<1x16xf32>
    %21 = arith.divf %19, %20 : vector<1x16xf32>
    %c0_19 = arith.constant 0 : index
    %c0_20 = arith.constant 0 : index
    %22 = vector.load %arg3[%c0_19, %c0_20] : memref<1x16xf32, #tpu.memory_space<vmem>>, vector<1x16xf32>
    %23 = arith.addf %21, %22 : vector<1x16xf32>
    %24 = vector.extract_strided_slice %23 {offsets = [0, 0], sizes = [1, 8], strides = [1, 1]} : vector<1x16xf32> to vector<1x8xf32>
    %25 = vector.extract_strided_slice %23 {offsets = [0, 8], sizes = [1, 8], strides = [1, 1]} : vector<1x16xf32> to vector<1x8xf32>
    %26 = arith.mulf %18, %24 : vector<1x8xf32>
    %cst_21 = arith.constant dense<0.000000e+00> : vector<1x2xf32>
    %27 = tpu.matmul %26, %1, %cst_21 {dimension_numbers = #tpu.dot_dimension_numbers<[1], [0], [0], [1], [0, 0, 1, 1], [], []>} : vector<1x8xf32>, vector<8x2xf32>, vector<1x2xf32> -> vector<1x2xf32>
    %28 = vector.shape_cast %18 : vector<1x8xf32> to vector<1x1x8xf32>
    %29 = vector.broadcast %28 : vector<1x1x8xf32> to vector<1x16x8xf32>
    %30 = arith.mulf %29, %10 : vector<1x16x8xf32>
    %31 = vector.shape_cast %30 : vector<1x16x8xf32> to vector<16x8xf32>
    %cst_22 = arith.constant dense<0.000000e+00> : vector<16x2xf32>
    %32 = tpu.matmul %31, %1, %cst_22 {dimension_numbers = #tpu.dot_dimension_numbers<[1], [0], [0], [1], [0, 0, 1, 1], [], []>} : vector<16x8xf32>, vector<8x2xf32>, vector<16x2xf32> -> vector<16x2xf32>
    %33 = vector.shape_cast %32 : vector<16x2xf32> to vector<1x16x2xf32>
    %cst_23 = arith.constant dense<0xFF800000> : vector<1x2xf32>
    %34 = vector.multi_reduction <maximumf>, %33, %cst_23 [1] : vector<1x16x2xf32> to vector<1x2xf32>
    %35 = arith.maximumf %27, %34 : vector<1x2xf32>
    %36 = arith.subf %27, %35 : vector<1x2xf32>
    %37 = math.exp %36 : vector<1x2xf32>
    %38 = vector.shape_cast %35 : vector<1x2xf32> to vector<1x1x2xf32>
    %39 = vector.broadcast %38 : vector<1x1x2xf32> to vector<1x16x2xf32>
    %40 = arith.subf %33, %39 : vector<1x16x2xf32>
    %41 = math.exp %40 : vector<1x16x2xf32>
    %cst_24 = arith.constant dense<0.000000e+00> : vector<1x2xf32>
    %42 = vector.multi_reduction <add>, %41, %cst_24 [1] : vector<1x16x2xf32> to vector<1x2xf32>
    %43 = arith.addf %37, %42 : vector<1x2xf32>
    %44 = tpu.reciprocal %43 {approx = true} : vector<1x2xf32> -> vector<1x2xf32>
    %45 = arith.mulf %43, %44 : vector<1x2xf32>
    %cst_25 = arith.constant 2.000000e+00 : f32
    %46 = vector.broadcast %cst_25 : f32 to vector<1x2xf32>
    %47 = arith.subf %46, %45 : vector<1x2xf32>
    %48 = arith.mulf %44, %47 : vector<1x2xf32>
    %49 = arith.mulf %43, %48 : vector<1x2xf32>
    %cst_26 = arith.constant 2.000000e+00 : f32
    %50 = vector.broadcast %cst_26 : f32 to vector<1x2xf32>
    %51 = arith.subf %50, %49 : vector<1x2xf32>
    %52 = arith.mulf %48, %51 : vector<1x2xf32>
    %53 = arith.mulf %37, %52 : vector<1x2xf32>
    %54 = vector.shape_cast %52 : vector<1x2xf32> to vector<1x1x2xf32>
    %55 = vector.broadcast %54 : vector<1x1x2xf32> to vector<1x16x2xf32>
    %56 = arith.mulf %41, %55 : vector<1x16x2xf32>
    %57 = vector.shape_cast %56 : vector<1x16x2xf32> to vector<16x2xf32>
    %cst_27 = arith.constant dense<0.000000e+00> : vector<16x8xf32>
    %58 = tpu.matmul %57, %2, %cst_27 {dimension_numbers = #tpu.dot_dimension_numbers<[1], [0], [0], [1], [0, 0, 1, 1], [], []>} : vector<16x2xf32>, vector<2x8xf32>, vector<16x8xf32> -> vector<16x8xf32>
    %59 = vector.shape_cast %58 : vector<16x8xf32> to vector<1x16x8xf32>
    %60 = arith.mulf %59, %11 : vector<1x16x8xf32>
    %cst_28 = arith.constant dense<0.000000e+00> : vector<1x8xf32>
    %61 = vector.multi_reduction <add>, %60, %cst_28 [1] : vector<1x16x8xf32> to vector<1x8xf32>
    %cst_29 = arith.constant dense<0.000000e+00> : vector<1x8xf32>
    %62 = tpu.matmul %53, %2, %cst_29 {dimension_numbers = #tpu.dot_dimension_numbers<[1], [0], [0], [1], [0, 0, 1, 1], [], []>} : vector<1x2xf32>, vector<2x8xf32>, vector<1x8xf32> -> vector<1x8xf32>
    %63 = arith.mulf %62, %25 : vector<1x8xf32>
    %64 = arith.addf %61, %63 : vector<1x8xf32>
    %c0_30 = arith.constant 0 : index
    %c0_31 = arith.constant 0 : index
    %65 = vector.load %arg7[%c0_30, %c0_31] : memref<8x8xf32, #tpu.memory_space<vmem>>, vector<8x8xf32>
    %cst_32 = arith.constant dense<0.000000e+00> : vector<1x8xf32>
    %66 = tpu.matmul %64, %65, %cst_32 {dimension_numbers = #tpu.dot_dimension_numbers<[1], [0], [0], [1], [0, 0, 1, 1], [], []>} : vector<1x8xf32>, vector<8x8xf32>, vector<1x8xf32> -> vector<1x8xf32>
    %c0_33 = arith.constant 0 : index
    %c0_34 = arith.constant 0 : index
    %67 = vector.load %arg8[%c0_33, %c0_34] : memref<1x8xf32, #tpu.memory_space<vmem>>, vector<1x8xf32>
    %68 = arith.addf %66, %67 : vector<1x8xf32>
    %69 = vector.shape_cast %68 : vector<1x8xf32> to vector<1x1x8xf32>
    %c0_35 = arith.constant 0 : index
    %c0_36 = arith.constant 0 : index
    %c0_37 = arith.constant 0 : index
    %70 = vector.load %arg11[%c0_35, %c0_36, %c0_37] : memref<1x1x8xf32, #tpu.memory_space<vmem>>, vector<1x1x8xf32>
    tpu.vector_store %arg11[%c0_35, %c0_36, %c0_37], %69 {strides = array<i32>} : memref<1x1x8xf32, #tpu.memory_space<vmem>>, vector<1x1x8xf32>,
    return
  }
  func.func @transform_0(%arg0: i32) -> (i32, i32, i32) {
    %c0_i32 = arith.constant 0 : i32
    %c0_i32_0 = arith.constant 0 : i32
    %c0_i32_1 = arith.constant 0 : i32
    return %arg0, %c0_i32, %c0_i32_0 : i32, i32, i32
  }
  func.func @transform_1(%arg0: i32) -> (i32, i32) {
    %c0_i32 = arith.constant 0 : i32
    %c0_i32_0 = arith.constant 0 : i32
    %c0_i32_1 = arith.constant 0 : i32
    return %c0_i32, %c0_i32_0 : i32, i32
  }
  func.func @transform_2(%arg0: i32) -> (i32, i32) {
    %c0_i32 = arith.constant 0 : i32
    %c0_i32_0 = arith.constant 0 : i32
    %c0_i32_1 = arith.constant 0 : i32
    return %c0_i32, %c0_i32_0 : i32, i32
  }
  func.func @transform_3(%arg0: i32) -> (i32, i32) {
    %c0_i32 = arith.constant 0 : i32
    %c0_i32_0 = arith.constant 0 : i32
    %c0_i32_1 = arith.constant 0 : i32
    return %c0_i32, %c0_i32_0 : i32, i32
  }
  func.func @transform_4(%arg0: i32) -> (i32, i32) {
    %c0_i32 = arith.constant 0 : i32
    %c0_i32_0 = arith.constant 0 : i32
    %c0_i32_1 = arith.constant 0 : i32
    return %c0_i32, %c0_i32_0 : i32, i32
  }
  func.func @transform_5(%arg0: i32) -> (i32, i32) {
    %c0_i32 = arith.constant 0 : i32
    %c0_i32_0 = arith.constant 0 : i32
    %c0_i32_1 = arith.constant 0 : i32
    return %c0_i32, %c0_i32_0 : i32, i32
  }
  func.func @transform_6(%arg0: i32) -> (i32, i32) {
    %c0_i32 = arith.constant 0 : i32
    %c0_i32_0 = arith.constant 0 : i32
    %c0_i32_1 = arith.constant 0 : i32
    return %c0_i32, %c0_i32_0 : i32, i32
  }
  func.func @transform_7(%arg0: i32) -> (i32, i32) {
    %c0_i32 = arith.constant 0 : i32
    %c0_i32_0 = arith.constant 0 : i32
    %c0_i32_1 = arith.constant 0 : i32
    return %c0_i32, %c0_i32_0 : i32, i32
  }
  func.func @transform_8(%arg0: i32) -> (i32, i32) {
    %c0_i32 = arith.constant 0 : i32
    %c0_i32_0 = arith.constant 0 : i32
    %c0_i32_1 = arith.constant 0 : i32
    return %c0_i32, %c0_i32_0 : i32, i32
  }
  func.func @transform_9(%arg0: i32) -> (i32, i32) {
    %c0_i32 = arith.constant 0 : i32
    %c0_i32_0 = arith.constant 0 : i32
    %c0_i32_1 = arith.constant 0 : i32
    return %c0_i32, %c0_i32_0 : i32, i32
  }
  func.func @transform_10(%arg0: i32) -> (i32, i32, i32) {
    %c0_i32 = arith.constant 0 : i32
    %c0_i32_0 = arith.constant 0 : i32
    %c0_i32_1 = arith.constant 0 : i32
    return %arg0, %c0_i32, %c0_i32_0 : i32, i32, i32
  }
}

</mosaic_0001>

<llo_original>
// kernel: tpu_custom_call.1
$region0: #{tpu_custom_call.1}
  #allocation0 [shape = 'u32[]', space=smem, size = 0x4, offset = 0x4, fixed_abs, tag = 'smem constant byte address 0x4 - core index']
  #allocation1 [shape = 'u32[144,128]{1,0:T(1,128)}', space=vmem, size = 0x12000, scoped, tag = 'internal scratch']
  %s0 = inlined_call_operand.vmem [shape: f32[2,16,8], index: 0, kind: input, shape index: {}]
  %s1 = inlined_call_operand.vmem [shape: f32[16,16], index: 1, kind: input, shape index: {}]
  %s2 = inlined_call_operand.vmem [shape: f32[1,16], index: 2, kind: input, shape index: {}]
  %s3 = inlined_call_operand.vmem [shape: f32[8,8], index: 3, kind: input, shape index: {}]
  %s4 = inlined_call_operand.vmem [shape: f32[1,8], index: 4, kind: input, shape index: {}]
  %s5 = inlined_call_operand.vmem [shape: f32[8,16], index: 5, kind: input, shape index: {}]
  %s6 = inlined_call_operand.vmem [shape: f32[8,8], index: 6, kind: input, shape index: {}]
  %s7 = inlined_call_operand.vmem [shape: f32[1,8], index: 7, kind: input, shape index: {}]
  %s8 = inlined_call_operand.vmem [shape: f32[8,2], index: 8, kind: input, shape index: {}]
  %s9 = inlined_call_operand.vmem [shape: f32[2,8], index: 9, kind: input, shape index: {}]
  %s10 = inlined_call_operand.hbm [shape: f32[2,1,8], index: 10, kind: output, shape index: {}]
  %s11 = sld [smem:[#allocation0]]
  $region73: #{tpu_custom_call.1} parent=0
    _
  %s13 = ssub.s32 1, %s11
  %s14 = scalar_select 0, %s13, %s11
  $region1: #{tpu_custom_call.1} parent=0
    #allocation2 [shape = 'u8[1024]{0}', space=vmem, size = 0x400, scoped, tag = 'output window, operand 0']
    #allocation3 [shape = 's32[2]{0}', space=sflag, size = 0x8, scoped, tag = 'scoped memory for tpu_custom_call.1']
    %15 = vsyncpa [#allocation3], 0
    %s16 = scalar_lea.sflag [#allocation3], 1
    %17 = vsyncpa %s16, 0
    loop: start=0, step=1, limit=4
    $region2: #{tpu_custom_call.1} parent=1 // loop_pre_header
      _
    $region3: #{tpu_custom_call.1} parent=1 // loop_header
      %s19 = sphi 0, %s23
      %p20 = scmp.ge.s32.totalorder %s19, 4
      %s29 = sphi 0, %s31
      %s32 = sphi 0, %s29
      %s33 = sphi 0, %s32
      %s49 = sphi 0, %s33
      %s53 = sphi 0, %s53
      %s55 = sphi 0, %s53
      %s56 = sphi 0, %s55
      %s70 = sphi 0, %s56
      %s74 = sphi 0, %s74
      %s76 = sphi 0, %s74
      %s77 = sphi 0, %s76
      %s91 = sphi 0, %s77
      %s95 = sphi 0, %s95
      %s97 = sphi 0, %s95
      %s98 = sphi 0, %s97
      %s112 = sphi 0, %s98
      %s116 = sphi 0, %s116
      %s118 = sphi 0, %s116
      %s119 = sphi 0, %s118
      %s133 = sphi 0, %s119
      %s137 = sphi 0, %s137
      %s139 = sphi 0, %s137
      %s140 = sphi 0, %s139
      %s154 = sphi 0, %s140
      %s158 = sphi 0, %s158
      %s160 = sphi 0, %s158
      %s161 = sphi 0, %s160
      %s175 = sphi 0, %s161
      %s179 = sphi 0, %s179
      %s181 = sphi 0, %s179
      %s182 = sphi 0, %s181
      %s196 = sphi 0, %s182
      %s200 = sphi 0, %s200
      %s202 = sphi 0, %s200
      %s203 = sphi 0, %s202
      %s217 = sphi 0, %s203
      %s221 = sphi 0, %s221
      %s223 = sphi 0, %s221
      %s224 = sphi 0, %s223
      %s238 = sphi 0, %s224
      %s244 = sphi 0, %s246
      %s247 = sphi 0, %s244
      %s248 = sphi 0, %s247
      %s264 = sphi 0, %s248
    $region4: #{tpu_custom_call.1} parent=1 // loop_header_branch
      %22 = sbr.rel (%p20) target = $region8
    $region5: #{tpu_custom_call.1} parent=1 // loop_body
      %s24 = ssub.s32 %s19, 1
      %s25 = ssub.s32 %s19, 2
      %s26 = sadd.s32 %s19, 1
      %s27 = ssub.s32 %s19, %s26
      %p28 = scmp.eq.s32.totalorder %s27, 0
      %s30 = sadd.s32 %s29, 1
      %s31 = scalar_select %p28, %s29, %s30
      %p34 = pneg %p28
      %p35 = scmp.eq.s32.totalorder %s19, 1
      %p36 = por %p34, %p35
      %p37 = scmp.ne.s32.totalorder %s29, %s32
      %p38 = scmp.eq.s32.totalorder %s19, 0
      %p39 = por %p37, %p38
      %p40 = scmp.ne.s32.totalorder %s29, %s32
      %p41 = scmp.eq.s32.totalorder %s24, 1
      %p42 = por %p40, %p41
      %p43 = scmp.ne.s32.totalorder %s32, %s33
      %p44 = scmp.eq.s32.totalorder %s24, 0
      %p45 = por %p43, %p44
      %p46 = scmp.ne.s32.totalorder %s32, %s33
      %p47 = scmp.eq.s32.totalorder %s25, 1
      %p48 = por %p46, %p47
      %p50 = scmp.ne.s32.totalorder %s33, %s49
      %p51 = scmp.eq.s32.totalorder %s25, 0
      %p52 = por %p50, %p51
      %s54 = sadd.s32 %s53, 1
      %p57 = scmp.eq.s32.totalorder %s19, 1
      %p58 = scmp.ne.s32.totalorder %s53, %s55
      %p59 = scmp.eq.s32.totalorder %s19, 0
      %p60 = por %p58, %p59
      %p61 = scmp.ne.s32.totalorder %s53, %s55
      %p62 = scmp.eq.s32.totalorder %s24, 1
      %p63 = por %p61, %p62
      %p64 = scmp.ne.s32.totalorder %s55, %s56
      %p65 = scmp.eq.s32.totalorder %s24, 0
      %p66 = por %p64, %p65
      %p67 = scmp.ne.s32.totalorder %s55, %s56
      %p68 = scmp.eq.s32.totalorder %s25, 1
      %p69 = por %p67, %p68
      %p71 = scmp.ne.s32.totalorder %s56, %s70
      %p72 = scmp.eq.s32.totalorder %s25, 0
      %p73 = por %p71, %p72
      %s75 = sadd.s32 %s74, 1
      %p78 = scmp.eq.s32.totalorder %s19, 1
      %p79 = scmp.ne.s32.totalorder %s74, %s76
      %p80 = scmp.eq.s32.totalorder %s19, 0
      %p81 = por %p79, %p80
      %p82 = scmp.ne.s32.totalorder %s74, %s76
      %p83 = scmp.eq.s32.totalorder %s24, 1
      %p84 = por %p82, %p83
      %p85 = scmp.ne.s32.totalorder %s76, %s77
      %p86 = scmp.eq.s32.totalorder %s24, 0
      %p87 = por %p85, %p86
      %p88 = scmp.ne.s32.totalorder %s76, %s77
      %p89 = scmp.eq.s32.totalorder %s25, 1
      %p90 = por %p88, %p89
      %p92 = scmp.ne.s32.totalorder %s77, %s91
      %p93 = scmp.eq.s32.totalorder %s25, 0
      %p94 = por %p92, %p93
      %s96 = sadd.s32 %s95, 1
      %p99 = scmp.eq.s32.totalorder %s19, 1
      %p100 = scmp.ne.s32.totalorder %s95, %s97
      %p101 = scmp.eq.s32.totalorder %s19, 0
      %p102 = por %p100, %p101
      %p103 = scmp.ne.s32.totalorder %s95, %s97
      %p104 = scmp.eq.s32.totalorder %s24, 1
      %p105 = por %p103, %p104
      %p106 = scmp.ne.s32.totalorder %s97, %s98
      %p107 = scmp.eq.s32.totalorder %s24, 0
      %p108 = por %p106, %p107
      %p109 = scmp.ne.s32.totalorder %s97, %s98
      %p110 = scmp.eq.s32.totalorder %s25, 1
      %p111 = por %p109, %p110
      %p113 = scmp.ne.s32.totalorder %s98, %s112
      %p114 = scmp.eq.s32.totalorder %s25, 0
      %p115 = por %p113, %p114
      %s117 = sadd.s32 %s116, 1
      %p120 = scmp.eq.s32.totalorder %s19, 1
      %p121 = scmp.ne.s32.totalorder %s116, %s118
      %p122 = scmp.eq.s32.totalorder %s19, 0
      %p123 = por %p121, %p122
      %p124 = scmp.ne.s32.totalorder %s116, %s118
      %p125 = scmp.eq.s32.totalorder %s24, 1
      %p126 = por %p124, %p125
      %p127 = scmp.ne.s32.totalorder %s118, %s119
      %p128 = scmp.eq.s32.totalorder %s24, 0
      %p129 = por %p127, %p128
      %p130 = scmp.ne.s32.totalorder %s118, %s119
      %p131 = scmp.eq.s32.totalorder %s25, 1
      %p132 = por %p130, %p131
      %p134 = scmp.ne.s32.totalorder %s119, %s133
      %p135 = scmp.eq.s32.totalorder %s25, 0
      %p136 = por %p134, %p135
      %s138 = sadd.s32 %s137, 1
      %p141 = scmp.eq.s32.totalorder %s19, 1
      %p142 = scmp.ne.s32.totalorder %s137, %s139
      %p143 = scmp.eq.s32.totalorder %s19, 0
      %p144 = por %p142, %p143
      %p145 = scmp.ne.s32.totalorder %s137, %s139
      %p146 = scmp.eq.s32.totalorder %s24, 1
      %p147 = por %p145, %p146
      %p148 = scmp.ne.s32.totalorder %s139, %s140
      %p149 = scmp.eq.s32.totalorder %s24, 0
      %p150 = por %p148, %p149
      %p151 = scmp.ne.s32.totalorder %s139, %s140
      %p152 = scmp.eq.s32.totalorder %s25, 1
      %p153 = por %p151, %p152
      %p155 = scmp.ne.s32.totalorder %s140, %s154
      %p156 = scmp.eq.s32.totalorder %s25, 0
      %p157 = por %p155, %p156
      %s159 = sadd.s32 %s158, 1
      %p162 = scmp.eq.s32.totalorder %s19, 1
      %p163 = scmp.ne.s32.totalorder %s158, %s160
      %p164 = scmp.eq.s32.totalorder %s19, 0
      %p165 = por %p163, %p164
      %p166 = scmp.ne.s32.totalorder %s158, %s160
      %p167 = scmp.eq.s32.totalorder %s24, 1
      %p168 = por %p166, %p167
      %p169 = scmp.ne.s32.totalorder %s160, %s161
      %p170 = scmp.eq.s32.totalorder %s24, 0
      %p171 = por %p169, %p170
      %p172 = scmp.ne.s32.totalorder %s160, %s161
      %p173 = scmp.eq.s32.totalorder %s25, 1
      %p174 = por %p172, %p173
      %p176 = scmp.ne.s32.totalorder %s161, %s175
      %p177 = scmp.eq.s32.totalorder %s25, 0
      %p178 = por %p176, %p177
      %s180 = sadd.s32 %s179, 1
      %p183 = scmp.eq.s32.totalorder %s19, 1
      %p184 = scmp.ne.s32.totalorder %s179, %s181
      %p185 = scmp.eq.s32.totalorder %s19, 0
      %p186 = por %p184, %p185
      %p187 = scmp.ne.s32.totalorder %s179, %s181
      %p188 = scmp.eq.s32.totalorder %s24, 1
      %p189 = por %p187, %p188
      %p190 = scmp.ne.s32.totalorder %s181, %s182
      %p191 = scmp.eq.s32.totalorder %s24, 0
      %p192 = por %p190, %p191
      %p193 = scmp.ne.s32.totalorder %s181, %s182
      %p194 = scmp.eq.s32.totalorder %s25, 1
      %p195 = por %p193, %p194
      %p197 = scmp.ne.s32.totalorder %s182, %s196
      %p198 = scmp.eq.s32.totalorder %s25, 0
      %p199 = por %p197, %p198
      %s201 = sadd.s32 %s200, 1
      %p204 = scmp.eq.s32.totalorder %s19, 1
      %p205 = scmp.ne.s32.totalorder %s200, %s202
      %p206 = scmp.eq.s32.totalorder %s19, 0
      %p207 = por %p205, %p206
      %p208 = scmp.ne.s32.totalorder %s200, %s202
      %p209 = scmp.eq.s32.totalorder %s24, 1
      %p210 = por %p208, %p209
      %p211 = scmp.ne.s32.totalorder %s202, %s203
      %p212 = scmp.eq.s32.totalorder %s24, 0
      %p213 = por %p211, %p212
      %p214 = scmp.ne.s32.totalorder %s202, %s203
      %p215 = scmp.eq.s32.totalorder %s25, 1
      %p216 = por %p214, %p215
      %p218 = scmp.ne.s32.totalorder %s203, %s217
      %p219 = scmp.eq.s32.totalorder %s25, 0
      %p220 = por %p218, %p219
      %s222 = sadd.s32 %s221, 1
      %p225 = scmp.eq.s32.totalorder %s19, 1
      %p226 = scmp.ne.s32.totalorder %s221, %s223
      %p227 = scmp.eq.s32.totalorder %s19, 0
      %p228 = por %p226, %p227
      %p229 = scmp.ne.s32.totalorder %s221, %s223
      %p230 = scmp.eq.s32.totalorder %s24, 1
      %p231 = por %p229, %p230
      %p232 = scmp.ne.s32.totalorder %s223, %s224
      %p233 = scmp.eq.s32.totalorder %s24, 0
      %p234 = por %p232, %p233
      %p235 = scmp.ne.s32.totalorder %s223, %s224
      %p236 = scmp.eq.s32.totalorder %s25, 1
      %p237 = por %p235, %p236
      %p239 = scmp.ne.s32.totalorder %s224, %s238
      %p240 = scmp.eq.s32.totalorder %s25, 0
      %p241 = por %p239, %p240
      %s242 = ssub.s32 %s19, %s26
      %p243 = scmp.eq.s32.totalorder %s242, 0
      %s245 = sadd.s32 %s244, 1
      %s246 = scalar_select %p243, %s244, %s245
      %p249 = pneg %p243
      %p250 = scmp.eq.s32.totalorder %s19, 1
      %p251 = por %p249, %p250
      %p252 = scmp.ne.s32.totalorder %s244, %s247
      %p253 = scmp.eq.s32.totalorder %s19, 0
      %p254 = por %p252, %p253
      %p255 = scmp.ne.s32.totalorder %s244, %s247
      %p256 = scmp.eq.s32.totalorder %s24, 1
      %p257 = por %p255, %p256
      %p258 = scmp.ne.s32.totalorder %s247, %s248
      %p259 = scmp.eq.s32.totalorder %s24, 0
      %p260 = por %p258, %p259
      %p261 = scmp.ne.s32.totalorder %s247, %s248
      %p262 = scmp.eq.s32.totalorder %s25, 1
      %p263 = por %p261, %p262
      %p265 = scmp.ne.s32.totalorder %s248, %s264
      %p266 = scmp.eq.s32.totalorder %s25, 0
      %p267 = por %p265, %p266
      %p268 = scmp.le.s32.totalorder 1, %s19
      %p269 = scmp.lt.s32.totalorder %s19, 3
      %p270 = pnand %p268, %p269
      %p271 = pneg %p270
      // Predicated region
      $region9: #{tpu_custom_call.1} parent=5 // pred_check
        _
      $region10: #{tpu_custom_call.1} parent=5 // pred_check_branch
        %273 = sbr.rel (%p270) target = $region12
      $region11: #{tpu_custom_call.1} parent=5 // pred_region
        %s274 = ssub.s32 %s19, 1
        // Predicated region
        $region13: #{tpu_custom_call.1} parent=11 // pred_check
          %p275 = pneg %p66
        $region14: #{tpu_custom_call.1} parent=11 // pred_check_branch
          %277 = sbr.rel (%p275) target = $region16
        $region15: #{tpu_custom_call.1} parent=11 // pred_region
          _
        $region16: #{tpu_custom_call.1} parent=11 // pred_fallthru
          _
        // Predicated region
        $region17: #{tpu_custom_call.1} parent=11 // pred_check
          %p278 = pneg %p87
        $region18: #{tpu_custom_call.1} parent=11 // pred_check_branch
          %280 = sbr.rel (%p278) target = $region20
        $region19: #{tpu_custom_call.1} parent=11 // pred_region
          _
        $region20: #{tpu_custom_call.1} parent=11 // pred_fallthru
          _
        // Predicated region
        $region21: #{tpu_custom_call.1} parent=11 // pred_check
          %p281 = pneg %p108
        $region22: #{tpu_custom_call.1} parent=11 // pred_check_branch
          %283 = sbr.rel (%p281) target = $region24
        $region23: #{tpu_custom_call.1} parent=11 // pred_region
          _
        $region24: #{tpu_custom_call.1} parent=11 // pred_fallthru
          _
        // Predicated region
        $region25: #{tpu_custom_call.1} parent=11 // pred_check
          %p284 = pneg %p129
        $region26: #{tpu_custom_call.1} parent=11 // pred_check_branch
          %286 = sbr.rel (%p284) target = $region28
        $region27: #{tpu_custom_call.1} parent=11 // pred_region
          _
        $region28: #{tpu_custom_call.1} parent=11 // pred_fallthru
          _
        // Predicated region
        $region29: #{tpu_custom_call.1} parent=11 // pred_check
          %p287 = pneg %p150
        $region30: #{tpu_custom_call.1} parent=11 // pred_check_branch
          %289 = sbr.rel (%p287) target = $region32
        $region31: #{tpu_custom_call.1} parent=11 // pred_region
          _
        $region32: #{tpu_custom_call.1} parent=11 // pred_fallthru
          _
        // Predicated region
        $region33: #{tpu_custom_call.1} parent=11 // pred_check
          %p290 = pneg %p171
        $region34: #{tpu_custom_call.1} parent=11 // pred_check_branch
          %292 = sbr.rel (%p290) target = $region36
        $region35: #{tpu_custom_call.1} parent=11 // pred_region
          _
        $region36: #{tpu_custom_call.1} parent=11 // pred_fallthru
          _
        // Predicated region
        $region37: #{tpu_custom_call.1} parent=11 // pred_check
          %p293 = pneg %p192
        $region38: #{tpu_custom_call.1} parent=11 // pred_check_branch
          %295 = sbr.rel (%p293) target = $region40
        $region39: #{tpu_custom_call.1} parent=11 // pred_region
          _
        $region40: #{tpu_custom_call.1} parent=11 // pred_fallthru
          _
        // Predicated region
        $region41: #{tpu_custom_call.1} parent=11 // pred_check
          %p296 = pneg %p213
        $region42: #{tpu_custom_call.1} parent=11 // pred_check_branch
          %298 = sbr.rel (%p296) target = $region44
        $region43: #{tpu_custom_call.1} parent=11 // pred_region
          _
        $region44: #{tpu_custom_call.1} parent=11 // pred_fallthru
          _
        // Predicated region
        $region45: #{tpu_custom_call.1} parent=11 // pred_check
          %p299 = pneg %p234
        $region46: #{tpu_custom_call.1} parent=11 // pred_check_branch
          %301 = sbr.rel (%p299) target = $region48
        $region47: #{tpu_custom_call.1} parent=11 // pred_region
          _
        $region48: #{tpu_custom_call.1} parent=11 // pred_fallthru
          _
      $region12: #{tpu_custom_call.1} parent=5 // pred_fallthru
        _
      %p302 = scmp.lt.s32.totalorder %s19, 2
      // Predicated region
      $region49: #{tpu_custom_call.1} parent=5 // pred_check
        %p303 = pneg %p302
      $region50: #{tpu_custom_call.1} parent=5 // pred_check_branch
        %305 = sbr.rel (%p303) target = $region52
      $region51: #{tpu_custom_call.1} parent=5 // pred_region
        // Predicated region
        $region53: #{tpu_custom_call.1} parent=51 // pred_check
          %p306 = pneg %p39
        $region54: #{tpu_custom_call.1} parent=51 // pred_check_branch
          %308 = sbr.rel (%p306) target = $region56
        $region55: #{tpu_custom_call.1} parent=51 // pred_region
          %p309 = scmp.lt.s32.totalorder %s19, 1
          %s310 = scalar_select %p309, %s19, 1
          %s311 = smul.addr %s310, 2
          %s312 = smul.addr %s311, 8
          %s313 = scalar_lea.vmem %s0, %s312
        $region56: #{tpu_custom_call.1} parent=51 // pred_fallthru
          _
      $region52: #{tpu_custom_call.1} parent=5 // pred_fallthru
        _
      %p314 = scmp.le.s32.totalorder 1, %s19
      %p315 = scmp.lt.s32.totalorder %s19, 3
      %p316 = pnand %p314, %p315
      %p317 = pneg %p316
      // Predicated region
      $region57: #{tpu_custom_call.1} parent=5 // pred_check
        _
      $region58: #{tpu_custom_call.1} parent=5 // pred_check_branch
        %319 = sbr.rel (%p316) target = $region60
      $region59: #{tpu_custom_call.1} parent=5 // pred_region
        %s320 = ssub.s32 %s19, 1
        %p321 = scmp.lt.s32.totalorder %s24, 1
        %s322 = scalar_select %p321, %s24, 1
        %s323 = smul.addr %s322, 2
        %s324 = smul.addr %s323, 8
        %s325 = scalar_lea.vmem %s0, %s324
        %p326 = pneg %p45
        %p327 = pneg %p42
        %p328 = pneg %p66
        %p329 = pneg %p63
        %p330 = pneg %p87
        %p331 = pneg %p84
        %p332 = pneg %p108
        %p333 = pneg %p105
        %p334 = pneg %p129
        %p335 = pneg %p126
        %p336 = pneg %p150
        %p337 = pneg %p147
        %p338 = pneg %p171
        %p339 = pneg %p168
        %p340 = pneg %p192
        %p341 = pneg %p189
        %p342 = pneg %p213
        %p343 = pneg %p210
        %p344 = pneg %p234
        %p345 = pneg %p231
        %p346 = pneg %p260
        %p347 = pneg %p257
        %s348 = sand.u32 %s247, 1
        %s349 = scalar_lea.sflag [#allocation3], %s348
        %s350 = sand.u32 %s247, 1
        %s351 = scalar_lea.vmem [#allocation2], %s350
        %p352 = scmp.lt.s32.totalorder %s24, 1
        %s353 = scalar_select %p352, %s24, 1
        %s354 = smul.addr %s353, 2
        %s355 = smul.addr %s354, 8
        %s356 = scalar_lea.vmem %s0, %s355
        %v357 = vld [vmem:[%s356] sm:$0xff]
        %v358 = vld [vmem:[%s356 + $0x8] sm:$0xff]
        %v359 = vld [vmem:[%s8] sm:$0xff]
        %v360 = vld [vmem:[%s9] sm:$0x3]
        %v361 = vld [vmem:[%s5] sm:$0xff]
        %vm362 = vcmask 64512
        %v364 = vsel %vm362, %v357, 0
        %v367 = vsel %vm362, %v358, 0
        %369 = vmatprep.subr.mxu0 0.0
        %370 = vmatpush1.msra.mxu0 %v361
        %371 = vmatprep.subr.mxu0 0.0
        %372 = vmatpush1.msra.mxu0 0.0
        %373 = vmatprep.subr.mxu0 0.0
        %374 = vmatpush1.msra.mxu0 0.0
        %375 = vmatprep.subr.mxu0 0.0
        %376 = vmatpush1.msra.mxu0 0.0
        %377 = vmatprep.subr.mxu0 0.0
        %378 = vmatpush1.msra.mxu0 0.0
        %379 = vmatprep.subr.mxu0 0.0
        %380 = vmatpush1.msra.mxu0 0.0
        %381 = vmatprep.subr.mxu0 0.0
        %382 = vmatpush1.msra.mxu0 0.0
        %383 = vmatprep.subr.mxu0 0.0
        %384 = vmatpush1.msra.mxu0 0.0
        %385 = vmatprep.subr.mxu0 0.0
        %386 = vmatpush1.msra.mxu0 0.0
        %387 = vmatprep.subr.mxu0 0.0
        %388 = vmatpush1.msra.mxu0 0.0
        %389 = vmatprep.subr.mxu0 0.0
        %390 = vmatpush1.msra.mxu0 0.0
        %391 = vmatprep.subr.mxu0 0.0
        %392 = vmatpush1.msra.mxu0 0.0
        %393 = vmatprep.subr.mxu0 0.0
        %394 = vmatpush1.msra.mxu0 0.0
        %395 = vmatprep.subr.mxu0 0.0
        %396 = vmatpush1.msra.mxu0 0.0
        %397 = vmatprep.subr.mxu0 0.0
        %398 = vmatpush1.msra.mxu0 0.0
        %399 = vmatprep.subr.mxu0 0.0
        %400 = vmatpush1.msra.mxu0 0.0
        %401 = vmatprep.subr.mxu0 0.0
        %402 = vmatpush1.msra.mxu0 0.0
        %403 = vmatprep.subr.mxu0 0.0
        %404 = vmatpush1.msra.mxu0 0.0
        %405 = vmatprep.subr.mxu0 0.0
        %406 = vmatpush1.msra.mxu0 0.0
        %407 = vmatprep.subr.mxu0 0.0
        %408 = vmatpush1.msra.mxu0 0.0
        %409 = vmatprep.subr.mxu0 0.0
        %410 = vmatpush1.msra.mxu0 0.0
        %411 = vmatprep.subr.mxu0 0.0
        %412 = vmatpush1.msra.mxu0 0.0
        %413 = vmatprep.subr.mxu0 0.0
        %414 = vmatpush1.msra.mxu0 0.0
        %415 = vmatprep.subr.mxu0 0.0
        %416 = vmatpush1.msra.mxu0 0.0
        %417 = vmatprep.subr.mxu0 0.0
        %418 = vmatpush1.msra.mxu0 0.0
        %419 = vmatprep.subr.mxu0 0.0
        %420 = vmatpush1.msra.mxu0 0.0
        %421 = vmatprep.subr.mxu0 0.0
        %422 = vmatpush1.msra.mxu0 0.0
        %423 = vmatprep.subr.mxu0 0.0
        %424 = vmatpush1.msra.mxu0 0.0
        %425 = vmatprep.subr.mxu0 0.0
        %426 = vmatpush1.msra.mxu0 0.0
        %427 = vmatprep.subr.mxu0 0.0
        %428 = vmatpush1.msra.mxu0 0.0
        %429 = vmatprep.subr.mxu0 0.0
        %430 = vmatpush1.msra.mxu0 0.0
        %431 = vmatprep.subr.mxu0 0.0
        %432 = vmatpush1.msra.mxu0 0.0
        %433 = vmatprep.mubr.f32.mxu0 0.0
        %434 = vmatmul.mubr.f32.gmra.mrb[0].mxu0 %v364
        %v435 = vpop.f32.mrb[0].mxu0
        %v436 = vadd.f32 0.0, %v435
        %v437 = vpop.f32.mrb[0].mxu0
        %438 = vmatprep.mubr.f32.mxu0 0.0
        %439 = vmatmul.mubr.f32.gmra.mrb[0].mxu0 %v367
        %v440 = vpop.f32.mrb[0].mxu0
        %v441 = vadd.f32 0.0, %v440
        %v442 = vpop.f32.mrb[0].mxu0
        %443 = vdwg.mxu0
        %v444 = vld [vmem:[%s1] sm:$0xff]
        %v445 = vld [vmem:[%s1 + $0x8] sm:$0xff]
        %v446 = vadd.f32 %v436, %v444
        %v447 = vadd.f32 %v441, %v445
        %v448 = vsel %vm362, %v357, 0.0
        %v449 = vsel %vm362, %v358, 0.0
        %v450 = vadd.f32 %v448, %v449
        %v451 = vrot.slane %v450, 4
        %v452 = vadd.f32 %v450, %v451
        %v453 = vrot.slane %v452, 2
        %v454 = vadd.f32 %v452, %v453
        %v455 = vrot.slane %v454, 1
        %v456 = vadd.f32 %v454, %v455
        %v457 = vrcp.pop 16.0
        %v458 = vmul.f32 %v456, %v457
        %v459 = vld [vmem:[%s3] sm:$0xff]
        %v460 = vld [vmem:[%s4] sm:$0x1]
        %v462 = vsel %vm362, %v458, 0
        %464 = vmatprep.subr.mxu0 0.0
        %465 = vmatpush1.msra.mxu0 %v459
        %466 = vmatprep.subr.mxu0 0.0
        %467 = vmatpush1.msra.mxu0 0.0
        %468 = vmatprep.subr.mxu0 0.0
        %469 = vmatpush1.msra.mxu0 0.0
        %470 = vmatprep.subr.mxu0 0.0
        %471 = vmatpush1.msra.mxu0 0.0
        %472 = vmatprep.subr.mxu0 0.0
        %473 = vmatpush1.msra.mxu0 0.0
        %474 = vmatprep.subr.mxu0 0.0
        %475 = vmatpush1.msra.mxu0 0.0
        %476 = vmatprep.subr.mxu0 0.0
        %477 = vmatpush1.msra.mxu0 0.0
        %478 = vmatprep.subr.mxu0 0.0
        %479 = vmatpush1.msra.mxu0 0.0
        %480 = vmatprep.subr.mxu0 0.0
        %481 = vmatpush1.msra.mxu0 0.0
        %482 = vmatprep.subr.mxu0 0.0
        %483 = vmatpush1.msra.mxu0 0.0
        %484 = vmatprep.subr.mxu0 0.0
        %485 = vmatpush1.msra.mxu0 0.0
        %486 = vmatprep.subr.mxu0 0.0
        %487 = vmatpush1.msra.mxu0 0.0
        %488 = vmatprep.subr.mxu0 0.0
        %489 = vmatpush1.msra.mxu0 0.0
        %490 = vmatprep.subr.mxu0 0.0
        %491 = vmatpush1.msra.mxu0 0.0
        %492 = vmatprep.subr.mxu0 0.0
        %493 = vmatpush1.msra.mxu0 0.0
        %494 = vmatprep.subr.mxu0 0.0
        %495 = vmatpush1.msra.mxu0 0.0
        %496 = vmatprep.subr.mxu0 0.0
        %497 = vmatpush1.msra.mxu0 0.0
        %498 = vmatprep.subr.mxu0 0.0
        %499 = vmatpush1.msra.mxu0 0.0
        %500 = vmatprep.subr.mxu0 0.0
        %501 = vmatpush1.msra.mxu0 0.0
        %502 = vmatprep.subr.mxu0 0.0
        %503 = vmatpush1.msra.mxu0 0.0
        %504 = vmatprep.subr.mxu0 0.0
        %505 = vmatpush1.msra.mxu0 0.0
        %506 = vmatprep.subr.mxu0 0.0
        %507 = vmatpush1.msra.mxu0 0.0
        %508 = vmatprep.subr.mxu0 0.0
        %509 = vmatpush1.msra.mxu0 0.0
        %510 = vmatprep.subr.mxu0 0.0
        %511 = vmatpush1.msra.mxu0 0.0
        %512 = vmatprep.subr.mxu0 0.0
        %513 = vmatpush1.msra.mxu0 0.0
        %514 = vmatprep.subr.mxu0 0.0
        %515 = vmatpush1.msra.mxu0 0.0
        %516 = vmatprep.subr.mxu0 0.0
        %517 = vmatpush1.msra.mxu0 0.0
        %518 = vmatprep.subr.mxu0 0.0
        %519 = vmatpush1.msra.mxu0 0.0
        %520 = vmatprep.subr.mxu0 0.0
        %521 = vmatpush1.msra.mxu0 0.0
        %522 = vmatprep.subr.mxu0 0.0
        %523 = vmatpush1.msra.mxu0 0.0
        %524 = vmatprep.subr.mxu0 0.0
        %525 = vmatpush1.msra.mxu0 0.0
        %526 = vmatprep.subr.mxu0 0.0
        %527 = vmatpush1.msra.mxu0 0.0
        %528 = vmatprep.mubr.f32.mxu0 0.0
        %529 = vmatmul.mubr.f32.gmra.mrb[0].mxu0 %v462
        %v530 = vpop.f32.mrb[0].mxu0
        %v531 = vadd.f32 %v460, %v530
        %v532 = vpop.f32.mrb[0].mxu0
        %533 = vdwg.mxu0
        %vm534 = vcmask 130048
        %v535 = vsel %vm534, %v446, 0.0
        %v536 = vsel %vm534, %v447, 0.0
        %v537 = vadd.f32 %v535, %v536
        %v538 = vrot.slane %v537, 4
        %v539 = vadd.f32 %v537, %v538
        %v540 = vrot.slane %v539, 2
        %v541 = vadd.f32 %v539, %v540
        %v542 = vrot.slane %v541, 1
        %v543 = vadd.f32 %v541, %v542
        %v544 = vmul.f32 %v543, %v457
        %v545 = vld [vmem:[%s2] sm:$0x1]
        %v546 = vadd.f32 %v544, %v545
        %v547 = vmul.f32 %v531, %v546
        %v549 = vsel %vm362, %v547, 0
        %551 = vmatprep.subr.mxu0 0.0
        %552 = vmatpush1.msra.mxu0 %v359
        %553 = vmatprep.subr.mxu0 0.0
        %554 = vmatpush1.msra.mxu0 0.0
        %555 = vmatprep.subr.mxu0 0.0
        %556 = vmatpush1.msra.mxu0 0.0
        %557 = vmatprep.subr.mxu0 0.0
        %558 = vmatpush1.msra.mxu0 0.0
        %559 = vmatprep.subr.mxu0 0.0
        %560 = vmatpush1.msra.mxu0 0.0
        %561 = vmatprep.subr.mxu0 0.0
        %562 = vmatpush1.msra.mxu0 0.0
        %563 = vmatprep.subr.mxu0 0.0
        %564 = vmatpush1.msra.mxu0 0.0
        %565 = vmatprep.subr.mxu0 0.0
        %566 = vmatpush1.msra.mxu0 0.0
        %567 = vmatprep.subr.mxu0 0.0
        %568 = vmatpush1.msra.mxu0 0.0
        %569 = vmatprep.subr.mxu0 0.0
        %570 = vmatpush1.msra.mxu0 0.0
        %571 = vmatprep.subr.mxu0 0.0
        %572 = vmatpush1.msra.mxu0 0.0
        %573 = vmatprep.subr.mxu0 0.0
        %574 = vmatpush1.msra.mxu0 0.0
        %575 = vmatprep.subr.mxu0 0.0
        %576 = vmatpush1.msra.mxu0 0.0
        %577 = vmatprep.subr.mxu0 0.0
        %578 = vmatpush1.msra.mxu0 0.0
        %579 = vmatprep.subr.mxu0 0.0
        %580 = vmatpush1.msra.mxu0 0.0
        %581 = vmatprep.subr.mxu0 0.0
        %582 = vmatpush1.msra.mxu0 0.0
        %583 = vmatprep.subr.mxu0 0.0
        %584 = vmatpush1.msra.mxu0 0.0
        %585 = vmatprep.subr.mxu0 0.0
        %586 = vmatpush1.msra.mxu0 0.0
        %587 = vmatprep.subr.mxu0 0.0
        %588 = vmatpush1.msra.mxu0 0.0
        %589 = vmatprep.subr.mxu0 0.0
        %590 = vmatpush1.msra.mxu0 0.0
        %591 = vmatprep.subr.mxu0 0.0
        %592 = vmatpush1.msra.mxu0 0.0
        %593 = vmatprep.subr.mxu0 0.0
        %594 = vmatpush1.msra.mxu0 0.0
        %595 = vmatprep.subr.mxu0 0.0
        %596 = vmatpush1.msra.mxu0 0.0
        %597 = vmatprep.subr.mxu0 0.0
        %598 = vmatpush1.msra.mxu0 0.0
        %599 = vmatprep.subr.mxu0 0.0
        %600 = vmatpush1.msra.mxu0 0.0
        %601 = vmatprep.subr.mxu0 0.0
        %602 = vmatpush1.msra.mxu0 0.0
        %603 = vmatprep.subr.mxu0 0.0
        %604 = vmatpush1.msra.mxu0 0.0
        %605 = vmatprep.subr.mxu0 0.0
        %606 = vmatpush1.msra.mxu0 0.0
        %607 = vmatprep.subr.mxu0 0.0
        %608 = vmatpush1.msra.mxu0 0.0
        %609 = vmatprep.subr.mxu0 0.0
        %610 = vmatpush1.msra.mxu0 0.0
        %611 = vmatprep.subr.mxu0 0.0
        %612 = vmatpush1.msra.mxu0 0.0
        %613 = vmatprep.subr.mxu0 0.0
        %614 = vmatpush1.msra.mxu0 0.0
        %615 = vmatprep.mubr.f32.mxu0 0.0
        %616 = vmatmul.mubr.f32.gmra.mrb[0].mxu0 %v549
        %v617 = vpop.f32.mrb[0].mxu0
        %v618 = vadd.f32 0.0, %v617
        %v619 = vpop.f32.mrb[0].mxu0
        %620 = vdwg.mxu0
        %v621 = vlaneseq
        %v622 = vshrl.u32 %v621, 7
        %v623 = vsub.s32 0, %v622
        %v624 = vrot.slane %v531, %v623
        %v625 = vmul.f32 %v624, %v446
        %v626 = vmul.f32 %v624, %v447
        %v628 = vsel %vm362, %v625, 0
        %v631 = vsel %vm362, %v626, 0
        %633 = vmatprep.subr.mxu0 0.0
        %634 = vmatpush1.msra.mxu0 %v359
        %635 = vmatprep.subr.mxu0 0.0
        %636 = vmatpush1.msra.mxu0 0.0
        %637 = vmatprep.subr.mxu0 0.0
        %638 = vmatpush1.msra.mxu0 0.0
        %639 = vmatprep.subr.mxu0 0.0
        %640 = vmatpush1.msra.mxu0 0.0
        %641 = vmatprep.subr.mxu0 0.0
        %642 = vmatpush1.msra.mxu0 0.0
        %643 = vmatprep.subr.mxu0 0.0
        %644 = vmatpush1.msra.mxu0 0.0
        %645 = vmatprep.subr.mxu0 0.0
        %646 = vmatpush1.msra.mxu0 0.0
        %647 = vmatprep.subr.mxu0 0.0
        %648 = vmatpush1.msra.mxu0 0.0
        %649 = vmatprep.subr.mxu0 0.0
        %650 = vmatpush1.msra.mxu0 0.0
        %651 = vmatprep.subr.mxu0 0.0
        %652 = vmatpush1.msra.mxu0 0.0
        %653 = vmatprep.subr.mxu0 0.0
        %654 = vmatpush1.msra.mxu0 0.0
        %655 = vmatprep.subr.mxu0 0.0
        %656 = vmatpush1.msra.mxu0 0.0
        %657 = vmatprep.subr.mxu0 0.0
        %658 = vmatpush1.msra.mxu0 0.0
        %659 = vmatprep.subr.mxu0 0.0
        %660 = vmatpush1.msra.mxu0 0.0
        %661 = vmatprep.subr.mxu0 0.0
        %662 = vmatpush1.msra.mxu0 0.0
        %663 = vmatprep.subr.mxu0 0.0
        %664 = vmatpush1.msra.mxu0 0.0
        %665 = vmatprep.subr.mxu0 0.0
        %666 = vmatpush1.msra.mxu0 0.0
        %667 = vmatprep.subr.mxu0 0.0
        %668 = vmatpush1.msra.mxu0 0.0
        %669 = vmatprep.subr.mxu0 0.0
        %670 = vmatpush1.msra.mxu0 0.0
        %671 = vmatprep.subr.mxu0 0.0
        %672 = vmatpush1.msra.mxu0 0.0
        %673 = vmatprep.subr.mxu0 0.0
        %674 = vmatpush1.msra.mxu0 0.0
        %675 = vmatprep.subr.mxu0 0.0
        %676 = vmatpush1.msra.mxu0 0.0
        %677 = vmatprep.subr.mxu0 0.0
        %678 = vmatpush1.msra.mxu0 0.0
        %679 = vmatprep.subr.mxu0 0.0
        %680 = vmatpush1.msra.mxu0 0.0
        %681 = vmatprep.subr.mxu0 0.0
        %682 = vmatpush1.msra.mxu0 0.0
        %683 = vmatprep.subr.mxu0 0.0
        %684 = vmatpush1.msra.mxu0 0.0
        %685 = vmatprep.subr.mxu0 0.0
        %686 = vmatpush1.msra.mxu0 0.0
        %687 = vmatprep.subr.mxu0 0.0
        %688 = vmatpush1.msra.mxu0 0.0
        %689 = vmatprep.subr.mxu0 0.0
        %690 = vmatpush1.msra.mxu0 0.0
        %691 = vmatprep.subr.mxu0 0.0
        %692 = vmatpush1.msra.mxu0 0.0
        %693 = vmatprep.subr.mxu0 0.0
        %694 = vmatpush1.msra.mxu0 0.0
        %695 = vmatprep.subr.mxu0 0.0
        %696 = vmatpush1.msra.mxu0 0.0
        %697 = vmatprep.mubr.f32.mxu0 0.0
        %698 = vmatmul.mubr.f32.gmra.mrb[0].mxu0 %v628
        %v699 = vpop.f32.mrb[0].mxu0
        %v700 = vadd.f32 0.0, %v699
        %v701 = vpop.f32.mrb[0].mxu0
        %702 = vmatprep.mubr.f32.mxu0 0.0
        %703 = vmatmul.mubr.f32.gmra.mrb[0].mxu0 %v631
        %v704 = vpop.f32.mrb[0].mxu0
        %v705 = vadd.f32 0.0, %v704
        %v706 = vpop.f32.mrb[0].mxu0
        %707 = vdwg.mxu0
        %vm708 = vcmask 15360
        %v709 = vsel %vm708, %v700, -inf
        %v710 = vsel %vm708, %v705, -inf
        %v711 = vmax.f32 %v709, %v710
        %v712 = vrot.slane %v711, 4
        %v713 = vmax.f32 %v711, %v712
        %v714 = vrot.slane %v713, 2
        %v715 = vmax.f32 %v713, %v714
        %v716 = vrot.slane %v715, 1
        %v717 = vmax.f32 %v715, %v716
        %v718 = vmax.f32 %v618, %v717
        %v719 = vsub.f32 %v618, %v718
        %v720 = vmul.f32 %v719, 1.442695
        %v721 = vpow.pop %v720
        %v722 = vlaneseq
        %v723 = vshrl.u32 %v722, 7
        %v724 = vsub.s32 0, %v723
        %v725 = vrot.slane %v718, %v724
        %v726 = vsub.f32 %v700, %v725
        %v727 = vsub.f32 %v705, %v725
        %v728 = vmul.f32 %v726, 1.442695
        %v729 = vpow.pop %v728
        %v730 = vmul.f32 %v727, 1.442695
        %v731 = vpow.pop %v730
        %v732 = vsel %vm708, %v729, 0.0
        %v733 = vsel %vm708, %v731, 0.0
        %v734 = vadd.f32 %v732, %v733
        %v735 = vrot.slane %v734, 4
        %v736 = vadd.f32 %v734, %v735
        %v737 = vrot.slane %v736, 2
        %v738 = vadd.f32 %v736, %v737
        %v739 = vrot.slane %v738, 1
        %v740 = vadd.f32 %v738, %v739
        %v741 = vadd.f32 %v721, %v740
        %v742 = vrcp.pop %v741
        %v743 = vmul.f32 %v741, %v742
        %v744 = vsub.f32 2.0, %v743
        %v745 = vmul.f32 %v742, %v744
        %v746 = vmul.f32 %v741, %v745
        %v747 = vsub.f32 2.0, %v746
        %v748 = vmul.f32 %v745, %v747
        %v749 = vmul.f32 %v721, %v748
        %v750 = vlaneseq
        %v751 = vshrl.u32 %v750, 7
        %v752 = vsub.s32 0, %v751
        %v753 = vrot.slane %v748, %v752
        %v754 = vmul.f32 %v729, %v753
        %v755 = vmul.f32 %v731, %v753
        %756 = vxpose.xlu0.b32.start [1/16] %v754, 128
        %757 = vxpose.xlu0.b32.cont [2/16] %v755, 128
        %758 = vxpose.xlu0.b32.cont [3/16] 0.0, 128
        %759 = vxpose.xlu0.b32.cont [4/16] 0.0, 128
        %760 = vxpose.xlu0.b32.cont [5/16] 0.0, 128
        %761 = vxpose.xlu0.b32.cont [6/16] 0.0, 128
        %762 = vxpose.xlu0.b32.cont [7/16] 0.0, 128
        %763 = vxpose.xlu0.b32.cont [8/16] 0.0, 128
        %764 = vxpose.xlu0.b32.cont [9/16] 0.0, 128
        %765 = vxpose.xlu0.b32.cont [10/16] 0.0, 128
        %766 = vxpose.xlu0.b32.cont [11/16] 0.0, 128
        %767 = vxpose.xlu0.b32.cont [12/16] 0.0, 128
        %768 = vxpose.xlu0.b32.cont [13/16] 0.0, 128
        %769 = vxpose.xlu0.b32.cont [14/16] 0.0, 128
        %770 = vxpose.xlu0.b32.cont [15/16] 0.0, 128
        %771 = vxpose.xlu0.b32.end [16/16] 0.0, 128
        %v772 = vpop.trf.xlu0
        %v773 = vpop.trf.xlu0
        %v774 = vpop.trf.xlu0
        %v775 = vpop.trf.xlu0
        %v776 = vpop.trf.xlu0
        %v777 = vpop.trf.xlu0
        %v778 = vpop.trf.xlu0
        %v779 = vpop.trf.xlu0
        %v780 = vpop.trf.xlu0
        %v781 = vpop.trf.xlu0
        %v782 = vpop.trf.xlu0
        %v783 = vpop.trf.xlu0
        %v784 = vpop.trf.xlu0
        %v785 = vpop.trf.xlu0
        %v786 = vpop.trf.xlu0
        %v787 = vpop.trf.xlu0
        %790 = vrot.lane.b32.xlu0 %v446, 120
        %v791 = vpop.permute.xlu0 %790
        %792 = vrot.lane.b32.xlu0 %v447, 120
        %v793 = vpop.permute.xlu0 %792
        %v797 = vsel %vm534, %v772, 0
        %799 = vmatprep.subr.mxu0 0.0
        %800 = vmatpush1.msra.mxu0 %v791
        %801 = vmatprep.subr.mxu0 0.0
        %802 = vmatpush1.msra.mxu0 %v793
        %803 = vmatprep.subr.mxu0 0.0
        %804 = vmatpush1.msra.mxu0 0.0
        %805 = vmatprep.subr.mxu0 0.0
        %806 = vmatpush1.msra.mxu0 0.0
        %807 = vmatprep.subr.mxu0 0.0
        %808 = vmatpush1.msra.mxu0 0.0
        %809 = vmatprep.subr.mxu0 0.0
        %810 = vmatpush1.msra.mxu0 0.0
        %811 = vmatprep.subr.mxu0 0.0
        %812 = vmatpush1.msra.mxu0 0.0
        %813 = vmatprep.subr.mxu0 0.0
        %814 = vmatpush1.msra.mxu0 0.0
        %815 = vmatprep.subr.mxu0 0.0
        %816 = vmatpush1.msra.mxu0 0.0
        %817 = vmatprep.subr.mxu0 0.0
        %818 = vmatpush1.msra.mxu0 0.0
        %819 = vmatprep.subr.mxu0 0.0
        %820 = vmatpush1.msra.mxu0 0.0
        %821 = vmatprep.subr.mxu0 0.0
        %822 = vmatpush1.msra.mxu0 0.0
        %823 = vmatprep.subr.mxu0 0.0
        %824 = vmatpush1.msra.mxu0 0.0
        %825 = vmatprep.subr.mxu0 0.0
        %826 = vmatpush1.msra.mxu0 0.0
        %827 = vmatprep.subr.mxu0 0.0
        %828 = vmatpush1.msra.mxu0 0.0
        %829 = vmatprep.subr.mxu0 0.0
        %830 = vmatpush1.msra.mxu0 0.0
        %831 = vmatprep.subr.mxu0 0.0
        %832 = vmatpush1.msra.mxu0 0.0
        %833 = vmatprep.subr.mxu0 0.0
        %834 = vmatpush1.msra.mxu0 0.0
        %835 = vmatprep.subr.mxu0 0.0
        %836 = vmatpush1.msra.mxu0 0.0
        %837 = vmatprep.subr.mxu0 0.0
        %838 = vmatpush1.msra.mxu0 0.0
        %839 = vmatprep.subr.mxu0 0.0
        %840 = vmatpush1.msra.mxu0 0.0
        %841 = vmatprep.subr.mxu0 0.0
        %842 = vmatpush1.msra.mxu0 0.0
        %843 = vmatprep.subr.mxu0 0.0
        %844 = vmatpush1.msra.mxu0 0.0
        %845 = vmatprep.subr.mxu0 0.0
        %846 = vmatpush1.msra.mxu0 0.0
        %847 = vmatprep.subr.mxu0 0.0
        %848 = vmatpush1.msra.mxu0 0.0
        %849 = vmatprep.subr.mxu0 0.0
        %850 = vmatpush1.msra.mxu0 0.0
        %851 = vmatprep.subr.mxu0 0.0
        %852 = vmatpush1.msra.mxu0 0.0
        %853 = vmatprep.subr.mxu0 0.0
        %854 = vmatpush1.msra.mxu0 0.0
        %855 = vmatprep.subr.mxu0 0.0
        %856 = vmatpush1.msra.mxu0 0.0
        %857 = vmatprep.subr.mxu0 0.0
        %858 = vmatpush1.msra.mxu0 0.0
        %859 = vmatprep.subr.mxu0 0.0
        %860 = vmatpush1.msra.mxu0 0.0
        %861 = vmatprep.subr.mxu0 0.0
        %862 = vmatpush1.msra.mxu0 0.0
        %863 = vmatprep.mubr.f32.mxu0 0.0
        %864 = vmatmul.mubr.f32.gmra.mrb[0].mxu0 %v797
        %v865 = vpop.f32.mrb[0].mxu0
        %v866 = vadd.f32 0.0, %v865
        %v867 = vpop.f32.mrb[0].mxu0
        %868 = vdwg.mxu0
        %v869 = vmul.f32 %v866, %v360
        %vm870 = vcmask 58368
        %v871 = vsel %vm870, %v869, 0.0
        %v872 = vrot.slane %v871, 4
        %v873 = vadd.f32 %v871, %v872
        %v874 = vrot.slane %v873, 2
        %v875 = vadd.f32 %v873, %v874
        %v876 = vrot.slane %v875, 1
        %v877 = vadd.f32 %v875, %v876
        %v879 = vsel %vm708, %v749, 0
        %vm881 = vcmask 1041408
        %v883 = vsel %vm881, %v360, 0
        %885 = vmatprep.subr.mxu0 0.0
        %886 = vmatpush1.msra.mxu0 %v883
        %887 = vmatprep.subr.mxu0 0.0
        %888 = vmatpush1.msra.mxu0 0.0
        %889 = vmatprep.subr.mxu0 0.0
        %890 = vmatpush1.msra.mxu0 0.0
        %891 = vmatprep.subr.mxu0 0.0
        %892 = vmatpush1.msra.mxu0 0.0
        %893 = vmatprep.subr.mxu0 0.0
        %894 = vmatpush1.msra.mxu0 0.0
        %895 = vmatprep.subr.mxu0 0.0
        %896 = vmatpush1.msra.mxu0 0.0
        %897 = vmatprep.subr.mxu0 0.0
        %898 = vmatpush1.msra.mxu0 0.0
        %899 = vmatprep.subr.mxu0 0.0
        %900 = vmatpush1.msra.mxu0 0.0
        %901 = vmatprep.subr.mxu0 0.0
        %902 = vmatpush1.msra.mxu0 0.0
        %903 = vmatprep.subr.mxu0 0.0
        %904 = vmatpush1.msra.mxu0 0.0
        %905 = vmatprep.subr.mxu0 0.0
        %906 = vmatpush1.msra.mxu0 0.0
        %907 = vmatprep.subr.mxu0 0.0
        %908 = vmatpush1.msra.mxu0 0.0
        %909 = vmatprep.subr.mxu0 0.0
        %910 = vmatpush1.msra.mxu0 0.0
        %911 = vmatprep.subr.mxu0 0.0
        %912 = vmatpush1.msra.mxu0 0.0
        %913 = vmatprep.subr.mxu0 0.0
        %914 = vmatpush1.msra.mxu0 0.0
        %915 = vmatprep.subr.mxu0 0.0
        %916 = vmatpush1.msra.mxu0 0.0
        %917 = vmatprep.subr.mxu0 0.0
        %918 = vmatpush1.msra.mxu0 0.0
        %919 = vmatprep.subr.mxu0 0.0
        %920 = vmatpush1.msra.mxu0 0.0
        %921 = vmatprep.subr.mxu0 0.0
        %922 = vmatpush1.msra.mxu0 0.0
        %923 = vmatprep.subr.mxu0 0.0
        %924 = vmatpush1.msra.mxu0 0.0
        %925 = vmatprep.subr.mxu0 0.0
        %926 = vmatpush1.msra.mxu0 0.0
        %927 = vmatprep.subr.mxu0 0.0
        %928 = vmatpush1.msra.mxu0 0.0
        %929 = vmatprep.subr.mxu0 0.0
        %930 = vmatpush1.msra.mxu0 0.0
        %931 = vmatprep.subr.mxu0 0.0
        %932 = vmatpush1.msra.mxu0 0.0
        %933 = vmatprep.subr.mxu0 0.0
        %934 = vmatpush1.msra.mxu0 0.0
        %935 = vmatprep.subr.mxu0 0.0
        %936 = vmatpush1.msra.mxu0 0.0
        %937 = vmatprep.subr.mxu0 0.0
        %938 = vmatpush1.msra.mxu0 0.0
        %939 = vmatprep.subr.mxu0 0.0
        %940 = vmatpush1.msra.mxu0 0.0
        %941 = vmatprep.subr.mxu0 0.0
        %942 = vmatpush1.msra.mxu0 0.0
        %943 = vmatprep.subr.mxu0 0.0
        %944 = vmatpush1.msra.mxu0 0.0
        %945 = vmatprep.subr.mxu0 0.0
        %946 = vmatpush1.msra.mxu0 0.0
        %947 = vmatprep.subr.mxu0 0.0
        %948 = vmatpush1.msra.mxu0 0.0
        %949 = vmatprep.mubr.f32.mxu0 0.0
        %950 = vmatmul.mubr.f32.gmra.mrb[0].mxu0 %v879
        %v951 = vpop.f32.mrb[0].mxu0
        %v952 = vadd.f32 0.0, %v951
        %v953 = vpop.f32.mrb[0].mxu0
        %954 = vdwg.mxu0
        %956 = vrot.lane.b32.xlu0 %v546, 120
        %v957 = vpop.permute.xlu0 %956
        %v959 = vmul.f32 %v952, %v957
        %v960 = vadd.f32 %v877, %v959
        %v961 = vld [vmem:[%s6] sm:$0xff]
        %v962 = vld [vmem:[%s7] sm:$0x1]
        %v964 = vsel %vm362, %v960, 0
        %966 = vmatprep.subr.mxu0 0.0
        %967 = vmatpush1.msra.mxu0 %v961
        %968 = vmatprep.subr.mxu0 0.0
        %969 = vmatpush1.msra.mxu0 0.0
        %970 = vmatprep.subr.mxu0 0.0
        %971 = vmatpush1.msra.mxu0 0.0
        %972 = vmatprep.subr.mxu0 0.0
        %973 = vmatpush1.msra.mxu0 0.0
        %974 = vmatprep.subr.mxu0 0.0
        %975 = vmatpush1.msra.mxu0 0.0
        %976 = vmatprep.subr.mxu0 0.0
        %977 = vmatpush1.msra.mxu0 0.0
        %978 = vmatprep.subr.mxu0 0.0
        %979 = vmatpush1.msra.mxu0 0.0
        %980 = vmatprep.subr.mxu0 0.0
        %981 = vmatpush1.msra.mxu0 0.0
        %982 = vmatprep.subr.mxu0 0.0
        %983 = vmatpush1.msra.mxu0 0.0
        %984 = vmatprep.subr.mxu0 0.0
        %985 = vmatpush1.msra.mxu0 0.0
        %986 = vmatprep.subr.mxu0 0.0
        %987 = vmatpush1.msra.mxu0 0.0
        %988 = vmatprep.subr.mxu0 0.0
        %989 = vmatpush1.msra.mxu0 0.0
        %990 = vmatprep.subr.mxu0 0.0
        %991 = vmatpush1.msra.mxu0 0.0
        %992 = vmatprep.subr.mxu0 0.0
        %993 = vmatpush1.msra.mxu0 0.0
        %994 = vmatprep.subr.mxu0 0.0
        %995 = vmatpush1.msra.mxu0 0.0
        %996 = vmatprep.subr.mxu0 0.0
        %997 = vmatpush1.msra.mxu0 0.0
        %998 = vmatprep.subr.mxu0 0.0
        %999 = vmatpush1.msra.mxu0 0.0
        %1000 = vmatprep.subr.mxu0 0.0
        %1001 = vmatpush1.msra.mxu0 0.0
        %1002 = vmatprep.subr.mxu0 0.0
        %1003 = vmatpush1.msra.mxu0 0.0
        %1004 = vmatprep.subr.mxu0 0.0
        %1005 = vmatpush1.msra.mxu0 0.0
        %1006 = vmatprep.subr.mxu0 0.0
        %1007 = vmatpush1.msra.mxu0 0.0
        %1008 = vmatprep.subr.mxu0 0.0
        %1009 = vmatpush1.msra.mxu0 0.0
        %1010 = vmatprep.subr.mxu0 0.0
        %1011 = vmatpush1.msra.mxu0 0.0
        %1012 = vmatprep.subr.mxu0 0.0
        %1013 = vmatpush1.msra.mxu0 0.0
        %1014 = vmatprep.subr.mxu0 0.0
        %1015 = vmatpush1.msra.mxu0 0.0
        %1016 = vmatprep.subr.mxu0 0.0
        %1017 = vmatpush1.msra.mxu0 0.0
        %1018 = vmatprep.subr.mxu0 0.0
        %1019 = vmatpush1.msra.mxu0 0.0
        %1020 = vmatprep.subr.mxu0 0.0
        %1021 = vmatpush1.msra.mxu0 0.0
        %1022 = vmatprep.subr.mxu0 0.0
        %1023 = vmatpush1.msra.mxu0 0.0
        %1024 = vmatprep.subr.mxu0 0.0
        %1025 = vmatpush1.msra.mxu0 0.0
        %1026 = vmatprep.subr.mxu0 0.0
        %1027 = vmatpush1.msra.mxu0 0.0
        %1028 = vmatprep.subr.mxu0 0.0
        %1029 = vmatpush1.msra.mxu0 0.0
        %1030 = vmatprep.mubr.f32.mxu0 0.0
        %1031 = vmatmul.mubr.f32.gmra.mrb[0].mxu0 %v964
        %v1032 = vpop.f32.mrb[0].mxu0
        %v1033 = vadd.f32 %v962, %v1032
        %v1034 = vpop.f32.mrb[0].mxu0
        %1035 = vdwg.mxu0
        %vm1036 = vcmask 57344
        %1037 = vst.msk [vmem:[%s351] sm:$0x1] %vm1036, %v1033
        %s1038 = sand.u32 %s247, 1
        %s1039 = scalar_lea.sflag [#allocation3], %s1038
        %s1040 = sand.u32 %s247, 1
        %s1041 = scalar_lea.vmem [#allocation2], %s1040
        // Predicated region
        $region61: #{tpu_custom_call.1} parent=59 // pred_check
          %p1042 = pneg %p257
        $region62: #{tpu_custom_call.1} parent=59 // pred_check_branch
          %1044 = sbr.rel (%p1042) target = $region64
        $region63: #{tpu_custom_call.1} parent=59 // pred_region
          %s1046 = ssub.s32 16, 16
          %1047 = vsyncadd %s1039, %s1046
          %s1048 = smul.addr %s24, 16
          %s1049 = scalar_lea.hbm %s10, %s1048
          %s1051 = sshll.u32 %s1041, 4
          %s1052 = int_to_ptr.vmem [resolvable:$true] %s1051
          %1054 = dma.vmem_to_hbm [thread:$0]  %s1052, 16, %s1049, %s1039
        $region64: #{tpu_custom_call.1} parent=59 // pred_fallthru
          _
      $region60: #{tpu_custom_call.1} parent=5 // pred_fallthru
        _
      %p1055 = scmp.le.s32.totalorder 2, %s19
      // Predicated region
      $region65: #{tpu_custom_call.1} parent=5 // pred_check
        %p1056 = pneg %p1055
      $region66: #{tpu_custom_call.1} parent=5 // pred_check_branch
        %1058 = sbr.rel (%p1056) target = $region68
      $region67: #{tpu_custom_call.1} parent=5 // pred_region
        %s1059 = ssub.s32 %s19, 2
        // Predicated region
        $region69: #{tpu_custom_call.1} parent=67 // pred_check
          %p1060 = pneg %p263
        $region70: #{tpu_custom_call.1} parent=67 // pred_check_branch
          %1062 = sbr.rel (%p1060) target = $region72
        $region71: #{tpu_custom_call.1} parent=67 // pred_region
          %s1063 = sand.u32 %s248, 1
          %s1064 = scalar_lea.sflag [#allocation3], %s1063
          %s1065 = sand.u32 %s248, 1
          %s1066 = scalar_lea.vmem [#allocation2], %s1065
          %1067 = dma.done %s1064, 16
        $region72: #{tpu_custom_call.1} parent=67 // pred_fallthru
          _
      $region68: #{tpu_custom_call.1} parent=5 // pred_fallthru
        _
    $region6: #{tpu_custom_call.1} parent=1 // loop_footer
      %s23 = sadd.s32 1, %s19
    $region7: #{tpu_custom_call.1} parent=1 // loop_footer_branch
      %18 = sbr.rel target = $region3
    $region8: #{tpu_custom_call.1} parent=1 // loop_exit
      _
    %1068 = vsyncpa [#allocation3], 1
    %s1069 = scalar_lea.sflag [#allocation3], 1
    %1070 = vsyncpa %s1069, 1

// kernel: tpu_custom_call.1
$region0: #{tpu_custom_call.1}
  #allocation0 [shape = 'u32[]', space=smem, size = 0x4, offset = 0x4, fixed_abs, tag = 'smem constant byte address 0x4 - core index']
  #allocation1 [shape = 'u32[144,128]{1,0:T(1,128)}', space=vmem, size = 0x12000, scoped, tag = 'internal scratch']
  %s0 = inlined_call_operand.vmem [shape: f32[2,16,8], index: 0, kind: input, shape index: {}]
  %s1 = inlined_call_operand.vmem [shape: f32[16,16], index: 1, kind: input, shape index: {}]
  %s2 = inlined_call_operand.vmem [shape: f32[1,16], index: 2, kind: input, shape index: {}]
  %s3 = inlined_call_operand.vmem [shape: f32[8,8], index: 3, kind: input, shape index: {}]
  %s4 = inlined_call_operand.vmem [shape: f32[1,8], index: 4, kind: input, shape index: {}]
  %s5 = inlined_call_operand.vmem [shape: f32[8,16], index: 5, kind: input, shape index: {}]
  %s6 = inlined_call_operand.vmem [shape: f32[8,8], index: 6, kind: input, shape index: {}]
  %s7 = inlined_call_operand.vmem [shape: f32[1,8], index: 7, kind: input, shape index: {}]
  %s8 = inlined_call_operand.vmem [shape: f32[8,2], index: 8, kind: input, shape index: {}]
  %s9 = inlined_call_operand.vmem [shape: f32[2,8], index: 9, kind: input, shape index: {}]
  %s10 = inlined_call_operand.hbm [shape: f32[2,1,8], index: 10, kind: output, shape index: {}]
  %s11 = sld [smem:[#allocation0]]
  $region73: #{tpu_custom_call.1} parent=0
    _
  %s13 = ssub.s32 1, %s11
  %s14 = scalar_select 0, %s13, %s11
  $region1: #{tpu_custom_call.1} parent=0
    #allocation2 [shape = 'u8[1024]{0}', space=vmem, size = 0x400, scoped, tag = 'output window, operand 0']
    #allocation3 [shape = 's32[2]{0}', space=sflag, size = 0x8, scoped, tag = 'scoped memory for tpu_custom_call.1']
    %15 = vsyncpa [#allocation3], 0
    %s16 = scalar_lea.sflag [#allocation3], 1
    %17 = vsyncpa %s16, 0
    loop: start=0, step=1, limit=4
    $region2: #{tpu_custom_call.1} parent=1 // loop_pre_header
      _
    $region3: #{tpu_custom_call.1} parent=1 // loop_header
      %s19 = sphi 0, %s23
      %p20 = scmp.ge.s32.totalorder %s19, 4
      %s29 = sphi 0, %s31
      %s32 = sphi 0, %s29
      %s33 = sphi 0, %s32
      %s49 = sphi 0, %s33
      %s53 = sphi 0, %s53
      %s55 = sphi 0, %s53
      %s56 = sphi 0, %s55
      %s70 = sphi 0, %s56
      %s74 = sphi 0, %s74
      %s76 = sphi 0, %s74
      %s77 = sphi 0, %s76
      %s91 = sphi 0, %s77
      %s95 = sphi 0, %s95
      %s97 = sphi 0, %s95
      %s98 = sphi 0, %s97
      %s112 = sphi 0, %s98
      %s116 = sphi 0, %s116
      %s118 = sphi 0, %s116
      %s119 = sphi 0, %s118
      %s133 = sphi 0, %s119
      %s137 = sphi 0, %s137
      %s139 = sphi 0, %s137
      %s140 = sphi 0, %s139
      %s154 = sphi 0, %s140
      %s158 = sphi 0, %s158
      %s160 = sphi 0, %s158
      %s161 = sphi 0, %s160
      %s175 = sphi 0, %s161
      %s179 = sphi 0, %s179
      %s181 = sphi 0, %s179
      %s182 = sphi 0, %s181
      %s196 = sphi 0, %s182
      %s200 = sphi 0, %s200
      %s202 = sphi 0, %s200
      %s203 = sphi 0, %s202
      %s217 = sphi 0, %s203
      %s221 = sphi 0, %s221
      %s223 = sphi 0, %s221
      %s224 = sphi 0, %s223
      %s238 = sphi 0, %s224
      %s244 = sphi 0, %s246
      %s247 = sphi 0, %s244
      %s248 = sphi 0, %s247
      %s264 = sphi 0, %s248
    $region4: #{tpu_custom_call.1} parent=1 // loop_header_branch
      %22 = sbr.rel (%p20) target = $region8
    $region5: #{tpu_custom_call.1} parent=1 // loop_body
      %s24 = ssub.s32 %s19, 1
      %s25 = ssub.s32 %s19, 2
      %s26 = sadd.s32 %s19, 1
      %s27 = ssub.s32 %s19, %s26
      %p28 = scmp.eq.s32.totalorder %s27, 0
      %s30 = sadd.s32 %s29, 1
      %s31 = scalar_select %p28, %s29, %s30
      %p34 = pneg %p28
      %p35 = scmp.eq.s32.totalorder %s19, 1
      %p36 = por %p34, %p35
      %p37 = scmp.ne.s32.totalorder %s29, %s32
      %p38 = scmp.eq.s32.totalorder %s19, 0
      %p39 = por %p37, %p38
      %p40 = scmp.ne.s32.totalorder %s29, %s32
      %p41 = scmp.eq.s32.totalorder %s24, 1
      %p42 = por %p40, %p41
      %p43 = scmp.ne.s32.totalorder %s32, %s33
      %p44 = scmp.eq.s32.totalorder %s24, 0
      %p45 = por %p43, %p44
      %p46 = scmp.ne.s32.totalorder %s32, %s33
      %p47 = scmp.eq.s32.totalorder %s25, 1
      %p48 = por %p46, %p47
      %p50 = scmp.ne.s32.totalorder %s33, %s49
      %p51 = scmp.eq.s32.totalorder %s25, 0
      %p52 = por %p50, %p51
      %s54 = sadd.s32 %s53, 1
      %p57 = scmp.eq.s32.totalorder %s19, 1
      %p58 = scmp.ne.s32.totalorder %s53, %s55
      %p59 = scmp.eq.s32.totalorder %s19, 0
      %p60 = por %p58, %p59
      %p61 = scmp.ne.s32.totalorder %s53, %s55
      %p62 = scmp.eq.s32.totalorder %s24, 1
      %p63 = por %p61, %p62
      %p64 = scmp.ne.s32.totalorder %s55, %s56
      %p65 = scmp.eq.s32.totalorder %s24, 0
      %p66 = por %p64, %p65
      %p67 = scmp.ne.s32.totalorder %s55, %s56
      %p68 = scmp.eq.s32.totalorder %s25, 1
      %p69 = por %p67, %p68
      %p71 = scmp.ne.s32.totalorder %s56, %s70
      %p72 = scmp.eq.s32.totalorder %s25, 0
      %p73 = por %p71, %p72
      %s75 = sadd.s32 %s74, 1
      %p78 = scmp.eq.s32.totalorder %s19, 1
      %p79 = scmp.ne.s32.totalorder %s74, %s76
      %p80 = scmp.eq.s32.totalorder %s19, 0
      %p81 = por %p79, %p80
      %p82 = scmp.ne.s32.totalorder %s74, %s76
      %p83 = scmp.eq.s32.totalorder %s24, 1
      %p84 = por %p82, %p83
      %p85 = scmp.ne.s32.totalorder %s76, %s77
      %p86 = scmp.eq.s32.totalorder %s24, 0
      %p87 = por %p85, %p86
      %p88 = scmp.ne.s32.totalorder %s76, %s77
      %p89 = scmp.eq.s32.totalorder %s25, 1
      %p90 = por %p88, %p89
      %p92 = scmp.ne.s32.totalorder %s77, %s91
      %p93 = scmp.eq.s32.totalorder %s25, 0
      %p94 = por %p92, %p93
      %s96 = sadd.s32 %s95, 1
      %p99 = scmp.eq.s32.totalorder %s19, 1
      %p100 = scmp.ne.s32.totalorder %s95, %s97
      %p101 = scmp.eq.s32.totalorder %s19, 0
      %p102 = por %p100, %p101
      %p103 = scmp.ne.s32.totalorder %s95, %s97
      %p104 = scmp.eq.s32.totalorder %s24, 1
      %p105 = por %p103, %p104
      %p106 = scmp.ne.s32.totalorder %s97, %s98
      %p107 = scmp.eq.s32.totalorder %s24, 0
      %p108 = por %p106, %p107
      %p109 = scmp.ne.s32.totalorder %s97, %s98
      %p110 = scmp.eq.s32.totalorder %s25, 1
      %p111 = por %p109, %p110
      %p113 = scmp.ne.s32.totalorder %s98, %s112
      %p114 = scmp.eq.s32.totalorder %s25, 0
      %p115 = por %p113, %p114
      %s117 = sadd.s32 %s116, 1
      %p120 = scmp.eq.s32.totalorder %s19, 1
      %p121 = scmp.ne.s32.totalorder %s116, %s118
      %p122 = scmp.eq.s32.totalorder %s19, 0
      %p123 = por %p121, %p122
      %p124 = scmp.ne.s32.totalorder %s116, %s118
      %p125 = scmp.eq.s32.totalorder %s24, 1
      %p126 = por %p124, %p125
      %p127 = scmp.ne.s32.totalorder %s118, %s119
      %p128 = scmp.eq.s32.totalorder %s24, 0
      %p129 = por %p127, %p128
      %p130 = scmp.ne.s32.totalorder %s118, %s119
      %p131 = scmp.eq.s32.totalorder %s25, 1
      %p132 = por %p130, %p131
      %p134 = scmp.ne.s32.totalorder %s119, %s133
      %p135 = scmp.eq.s32.totalorder %s25, 0
      %p136 = por %p134, %p135
      %s138 = sadd.s32 %s137, 1
      %p141 = scmp.eq.s32.totalorder %s19, 1
      %p142 = scmp.ne.s32.totalorder %s137, %s139
      %p143 = scmp.eq.s32.totalorder %s19, 0
      %p144 = por %p142, %p143
      %p145 = scmp.ne.s32.totalorder %s137, %s139
      %p146 = scmp.eq.s32.totalorder %s24, 1
      %p147 = por %p145, %p146
      %p148 = scmp.ne.s32.totalorder %s139, %s140
      %p149 = scmp.eq.s32.totalorder %s24, 0
      %p150 = por %p148, %p149
      %p151 = scmp.ne.s32.totalorder %s139, %s140
      %p152 = scmp.eq.s32.totalorder %s25, 1
      %p153 = por %p151, %p152
      %p155 = scmp.ne.s32.totalorder %s140, %s154
      %p156 = scmp.eq.s32.totalorder %s25, 0
      %p157 = por %p155, %p156
      %s159 = sadd.s32 %s158, 1
      %p162 = scmp.eq.s32.totalorder %s19, 1
      %p163 = scmp.ne.s32.totalorder %s158, %s160
      %p164 = scmp.eq.s32.totalorder %s19, 0
      %p165 = por %p163, %p164
      %p166 = scmp.ne.s32.totalorder %s158, %s160
      %p167 = scmp.eq.s32.totalorder %s24, 1
      %p168 = por %p166, %p167
      %p169 = scmp.ne.s32.totalorder %s160, %s161
      %p170 = scmp.eq.s32.totalorder %s24, 0
      %p171 = por %p169, %p170
      %p172 = scmp.ne.s32.totalorder %s160, %s161
      %p173 = scmp.eq.s32.totalorder %s25, 1
      %p174 = por %p172, %p173
      %p176 = scmp.ne.s32.totalorder %s161, %s175
      %p177 = scmp.eq.s32.totalorder %s25, 0
      %p178 = por %p176, %p177
      %s180 = sadd.s32 %s179, 1
      %p183 = scmp.eq.s32.totalorder %s19, 1
      %p184 = scmp.ne.s32.totalorder %s179, %s181
      %p185 = scmp.eq.s32.totalorder %s19, 0
      %p186 = por %p184, %p185
      %p187 = scmp.ne.s32.totalorder %s179, %s181
      %p188 = scmp.eq.s32.totalorder %s24, 1
      %p189 = por %p187, %p188
      %p190 = scmp.ne.s32.totalorder %s181, %s182
      %p191 = scmp.eq.s32.totalorder %s24, 0
      %p192 = por %p190, %p191
      %p193 = scmp.ne.s32.totalorder %s181, %s182
      %p194 = scmp.eq.s32.totalorder %s25, 1
      %p195 = por %p193, %p194
      %p197 = scmp.ne.s32.totalorder %s182, %s196
      %p198 = scmp.eq.s32.totalorder %s25, 0
      %p199 = por %p197, %p198
      %s201 = sadd.s32 %s200, 1
      %p204 = scmp.eq.s32.totalorder %s19, 1
      %p205 = scmp.ne.s32.totalorder %s200, %s202
      %p206 = scmp.eq.s32.totalorder %s19, 0
      %p207 = por %p205, %p206
      %p208 = scmp.ne.s32.totalorder %s200, %s202
      %p209 = scmp.eq.s32.totalorder %s24, 1
      %p210 = por %p208, %p209
      %p211 = scmp.ne.s32.totalorder %s202, %s203
      %p212 = scmp.eq.s32.totalorder %s24, 0
      %p213 = por %p211, %p212
      %p214 = scmp.ne.s32.totalorder %s202, %s203
      %p215 = scmp.eq.s32.totalorder %s25, 1
      %p216 = por %p214, %p215
      %p218 = scmp.ne.s32.totalorder %s203, %s217
      %p219 = scmp.eq.s32.totalorder %s25, 0
      %p220 = por %p218, %p219
      %s222 = sadd.s32 %s221, 1
      %p225 = scmp.eq.s32.totalorder %s19, 1
      %p226 = scmp.ne.s32.totalorder %s221, %s223
      %p227 = scmp.eq.s32.totalorder %s19, 0
      %p228 = por %p226, %p227
      %p229 = scmp.ne.s32.totalorder %s221, %s223
      %p230 = scmp.eq.s32.totalorder %s24, 1
      %p231 = por %p229, %p230
      %p232 = scmp.ne.s32.totalorder %s223, %s224
      %p233 = scmp.eq.s32.totalorder %s24, 0
      %p234 = por %p232, %p233
      %p235 = scmp.ne.s32.totalorder %s223, %s224
      %p236 = scmp.eq.s32.totalorder %s25, 1
      %p237 = por %p235, %p236
      %p239 = scmp.ne.s32.totalorder %s224, %s238
      %p240 = scmp.eq.s32.totalorder %s25, 0
      %p241 = por %p239, %p240
      %s242 = ssub.s32 %s19, %s26
      %p243 = scmp.eq.s32.totalorder %s242, 0
      %s245 = sadd.s32 %s244, 1
      %s246 = scalar_select %p243, %s244, %s245
      %p249 = pneg %p243
      %p250 = scmp.eq.s32.totalorder %s19, 1
      %p251 = por %p249, %p250
      %p252 = scmp.ne.s32.totalorder %s244, %s247
      %p253 = scmp.eq.s32.totalorder %s19, 0
      %p254 = por %p252, %p253
      %p255 = scmp.ne.s32.totalorder %s244, %s247
      %p256 = scmp.eq.s32.totalorder %s24, 1
      %p257 = por %p255, %p256
      %p258 = scmp.ne.s32.totalorder %s247, %s248
      %p259 = scmp.eq.s32.totalorder %s24, 0
      %p260 = por %p258, %p259
      %p261 = scmp.ne.s32.totalorder %s247, %s248
      %p262 = scmp.eq.s32.totalorder %s25, 1
      %p263 = por %p261, %p262
      %p265 = scmp.ne.s32.totalorder %s248, %s264
      %p266 = scmp.eq.s32.totalorder %s25, 0
      %p267 = por %p265, %p266
      %p268 = scmp.le.s32.totalorder 1, %s19
      %p269 = scmp.lt.s32.totalorder %s19, 3
      %p270 = pnand %p268, %p269
      %p271 = pneg %p270
      // Predicated region
      $region9: #{tpu_custom_call.1} parent=5 // pred_check
        _
      $region10: #{tpu_custom_call.1} parent=5 // pred_check_branch
        %273 = sbr.rel (%p270) target = $region12
      $region11: #{tpu_custom_call.1} parent=5 // pred_region
        %s274 = ssub.s32 %s19, 1
        // Predicated region
        $region13: #{tpu_custom_call.1} parent=11 // pred_check
          %p275 = pneg %p66
        $region14: #{tpu_custom_call.1} parent=11 // pred_check_branch
          %277 = sbr.rel (%p275) target = $region16
        $region15: #{tpu_custom_call.1} parent=11 // pred_region
          _
        $region16: #{tpu_custom_call.1} parent=11 // pred_fallthru
          _
        // Predicated region
        $region17: #{tpu_custom_call.1} parent=11 // pred_check
          %p278 = pneg %p87
        $region18: #{tpu_custom_call.1} parent=11 // pred_check_branch
          %280 = sbr.rel (%p278) target = $region20
        $region19: #{tpu_custom_call.1} parent=11 // pred_region
          _
        $region20: #{tpu_custom_call.1} parent=11 // pred_fallthru
          _
        // Predicated region
        $region21: #{tpu_custom_call.1} parent=11 // pred_check
          %p281 = pneg %p108
        $region22: #{tpu_custom_call.1} parent=11 // pred_check_branch
          %283 = sbr.rel (%p281) target = $region24
        $region23: #{tpu_custom_call.1} parent=11 // pred_region
          _
        $region24: #{tpu_custom_call.1} parent=11 // pred_fallthru
          _
        // Predicated region
        $region25: #{tpu_custom_call.1} parent=11 // pred_check
          %p284 = pneg %p129
        $region26: #{tpu_custom_call.1} parent=11 // pred_check_branch
          %286 = sbr.rel (%p284) target = $region28
        $region27: #{tpu_custom_call.1} parent=11 // pred_region
          _
        $region28: #{tpu_custom_call.1} parent=11 // pred_fallthru
          _
        // Predicated region
        $region29: #{tpu_custom_call.1} parent=11 // pred_check
          %p287 = pneg %p150
        $region30: #{tpu_custom_call.1} parent=11 // pred_check_branch
          %289 = sbr.rel (%p287) target = $region32
        $region31: #{tpu_custom_call.1} parent=11 // pred_region
          _
        $region32: #{tpu_custom_call.1} parent=11 // pred_fallthru
          _
        // Predicated region
        $region33: #{tpu_custom_call.1} parent=11 // pred_check
          %p290 = pneg %p171
        $region34: #{tpu_custom_call.1} parent=11 // pred_check_branch
          %292 = sbr.rel (%p290) target = $region36
        $region35: #{tpu_custom_call.1} parent=11 // pred_region
          _
        $region36: #{tpu_custom_call.1} parent=11 // pred_fallthru
          _
        // Predicated region
        $region37: #{tpu_custom_call.1} parent=11 // pred_check
          %p293 = pneg %p192
        $region38: #{tpu_custom_call.1} parent=11 // pred_check_branch
          %295 = sbr.rel (%p293) target = $region40
        $region39: #{tpu_custom_call.1} parent=11 // pred_region
          _
        $region40: #{tpu_custom_call.1} parent=11 // pred_fallthru
          _
        // Predicated region
        $region41: #{tpu_custom_call.1} parent=11 // pred_check
          %p296 = pneg %p213
        $region42: #{tpu_custom_call.1} parent=11 // pred_check_branch
          %298 = sbr.rel (%p296) target = $region44
        $region43: #{tpu_custom_call.1} parent=11 // pred_region
          _
        $region44: #{tpu_custom_call.1} parent=11 // pred_fallthru
          _
        // Predicated region
        $region45: #{tpu_custom_call.1} parent=11 // pred_check
          %p299 = pneg %p234
        $region46: #{tpu_custom_call.1} parent=11 // pred_check_branch
          %301 = sbr.rel (%p299) target = $region48
        $region47: #{tpu_custom_call.1} parent=11 // pred_region
          _
        $region48: #{tpu_custom_call.1} parent=11 // pred_fallthru
          _
      $region12: #{tpu_custom_call.1} parent=5 // pred_fallthru
        _
      %p302 = scmp.lt.s32.totalorder %s19, 2
      // Predicated region
      $region49: #{tpu_custom_call.1} parent=5 // pred_check
        %p303 = pneg %p302
      $region50: #{tpu_custom_call.1} parent=5 // pred_check_branch
        %305 = sbr.rel (%p303) target = $region52
      $region51: #{tpu_custom_call.1} parent=5 // pred_region
        // Predicated region
        $region53: #{tpu_custom_call.1} parent=51 // pred_check
          %p306 = pneg %p39
        $region54: #{tpu_custom_call.1} parent=51 // pred_check_branch
          %308 = sbr.rel (%p306) target = $region56
        $region55: #{tpu_custom_call.1} parent=51 // pred_region
          %p309 = scmp.lt.s32.totalorder %s19, 1
          %s310 = scalar_select %p309, %s19, 1
          %s311 = smul.addr %s310, 2
          %s312 = smul.addr %s311, 8
          %s313 = scalar_lea.vmem %s0, %s312
        $region56: #{tpu_custom_call.1} parent=51 // pred_fallthru
          _
      $region52: #{tpu_custom_call.1} parent=5 // pred_fallthru
        _
      %p314 = scmp.le.s32.totalorder 1, %s19
      %p315 = scmp.lt.s32.totalorder %s19, 3
      %p316 = pnand %p314, %p315
      %p317 = pneg %p316
      // Predicated region
      $region57: #{tpu_custom_call.1} parent=5 // pred_check
        _
      $region58: #{tpu_custom_call.1} parent=5 // pred_check_branch
        %319 = sbr.rel (%p316) target = $region60
      $region59: #{tpu_custom_call.1} parent=5 // pred_region
        %s320 = ssub.s32 %s19, 1
        %p321 = scmp.lt.s32.totalorder %s24, 1
        %s322 = scalar_select %p321, %s24, 1
        %s323 = smul.addr %s322, 2
        %s324 = smul.addr %s323, 8
        %s325 = scalar_lea.vmem %s0, %s324
        %p326 = pneg %p45
        %p327 = pneg %p42
        %p328 = pneg %p66
        %p329 = pneg %p63
        %p330 = pneg %p87
        %p331 = pneg %p84
        %p332 = pneg %p108
        %p333 = pneg %p105
        %p334 = pneg %p129
        %p335 = pneg %p126
        %p336 = pneg %p150
        %p337 = pneg %p147
        %p338 = pneg %p171
        %p339 = pneg %p168
        %p340 = pneg %p192
        %p341 = pneg %p189
        %p342 = pneg %p213
        %p343 = pneg %p210
        %p344 = pneg %p234
        %p345 = pneg %p231
        %p346 = pneg %p260
        %p347 = pneg %p257
        %s348 = sand.u32 %s247, 1
        %s349 = scalar_lea.sflag [#allocation3], %s348
        %s350 = sand.u32 %s247, 1
        %s351 = scalar_lea.vmem [#allocation2], %s350
        %p352 = scmp.lt.s32.totalorder %s24, 1
        %s353 = scalar_select %p352, %s24, 1
        %s354 = smul.addr %s353, 2
        %s355 = smul.addr %s354, 8
        %s356 = scalar_lea.vmem %s0, %s355
        %v357 = vld [vmem:[%s356] sm:$0xff]
        %v358 = vld [vmem:[%s356 + $0x8] sm:$0xff]
        %v359 = vld [vmem:[%s8] sm:$0xff]
        %v360 = vld [vmem:[%s9] sm:$0x3]
        %v361 = vld [vmem:[%s5] sm:$0xff]
        %vm362 = vcmask 64512
        %v364 = vsel %vm362, %v357, 0
        %v367 = vsel %vm362, %v358, 0
        %369 = vmatprep.subr.mxu0 0.0
        %370 = vmatpush1.msra.mxu0 %v361
        %371 = vmatprep.subr.mxu0 0.0
        %372 = vmatpush1.msra.mxu0 0.0
        %373 = vmatprep.subr.mxu0 0.0
        %374 = vmatpush1.msra.mxu0 0.0
        %375 = vmatprep.subr.mxu0 0.0
        %376 = vmatpush1.msra.mxu0 0.0
        %377 = vmatprep.subr.mxu0 0.0
        %378 = vmatpush1.msra.mxu0 0.0
        %379 = vmatprep.subr.mxu0 0.0
        %380 = vmatpush1.msra.mxu0 0.0
        %381 = vmatprep.subr.mxu0 0.0
        %382 = vmatpush1.msra.mxu0 0.0
        %383 = vmatprep.subr.mxu0 0.0
        %384 = vmatpush1.msra.mxu0 0.0
        %385 = vmatprep.subr.mxu0 0.0
        %386 = vmatpush1.msra.mxu0 0.0
        %387 = vmatprep.subr.mxu0 0.0
        %388 = vmatpush1.msra.mxu0 0.0
        %389 = vmatprep.subr.mxu0 0.0
        %390 = vmatpush1.msra.mxu0 0.0
        %391 = vmatprep.subr.mxu0 0.0
        %392 = vmatpush1.msra.mxu0 0.0
        %393 = vmatprep.subr.mxu0 0.0
        %394 = vmatpush1.msra.mxu0 0.0
        %395 = vmatprep.subr.mxu0 0.0
        %396 = vmatpush1.msra.mxu0 0.0
        %397 = vmatprep.subr.mxu0 0.0
        %398 = vmatpush1.msra.mxu0 0.0
        %399 = vmatprep.subr.mxu0 0.0
        %400 = vmatpush1.msra.mxu0 0.0
        %401 = vmatprep.subr.mxu0 0.0
        %402 = vmatpush1.msra.mxu0 0.0
        %403 = vmatprep.subr.mxu0 0.0
        %404 = vmatpush1.msra.mxu0 0.0
        %405 = vmatprep.subr.mxu0 0.0
        %406 = vmatpush1.msra.mxu0 0.0
        %407 = vmatprep.subr.mxu0 0.0
        %408 = vmatpush1.msra.mxu0 0.0
        %409 = vmatprep.subr.mxu0 0.0
        %410 = vmatpush1.msra.mxu0 0.0
        %411 = vmatprep.subr.mxu0 0.0
        %412 = vmatpush1.msra.mxu0 0.0
        %413 = vmatprep.subr.mxu0 0.0
        %414 = vmatpush1.msra.mxu0 0.0
        %415 = vmatprep.subr.mxu0 0.0
        %416 = vmatpush1.msra.mxu0 0.0
        %417 = vmatprep.subr.mxu0 0.0
        %418 = vmatpush1.msra.mxu0 0.0
        %419 = vmatprep.subr.mxu0 0.0
        %420 = vmatpush1.msra.mxu0 0.0
        %421 = vmatprep.subr.mxu0 0.0
        %422 = vmatpush1.msra.mxu0 0.0
        %423 = vmatprep.subr.mxu0 0.0
        %424 = vmatpush1.msra.mxu0 0.0
        %425 = vmatprep.subr.mxu0 0.0
        %426 = vmatpush1.msra.mxu0 0.0
        %427 = vmatprep.subr.mxu0 0.0
        %428 = vmatpush1.msra.mxu0 0.0
        %429 = vmatprep.subr.mxu0 0.0
        %430 = vmatpush1.msra.mxu0 0.0
        %431 = vmatprep.subr.mxu0 0.0
        %432 = vmatpush1.msra.mxu0 0.0
        %433 = vmatprep.mubr.f32.mxu0 0.0
        %434 = vmatmul.mubr.f32.gmra.mrb[0].mxu0 %v364
        %v435 = vpop.f32.mrb[0].mxu0
        %v436 = vadd.f32 0.0, %v435
        %v437 = vpop.f32.mrb[0].mxu0
        %438 = vmatprep.mubr.f32.mxu0 0.0
        %439 = vmatmul.mubr.f32.gmra.mrb[0].mxu0 %v367
        %v440 = vpop.f32.mrb[0].mxu0
        %v441 = vadd.f32 0.0, %v440
        %v442 = vpop.f32.mrb[0].mxu0
        %443 = vdwg.mxu0
        %v444 = vld [vmem:[%s1] sm:$0xff]
        %v445 = vld [vmem:[%s1 + $0x8] sm:$0xff]
        %v446 = vadd.f32 %v436, %v444
        %v447 = vadd.f32 %v441, %v445
        %v448 = vsel %vm362, %v357, 0.0
        %v449 = vsel %vm362, %v358, 0.0
        %v450 = vadd.f32 %v448, %v449
        %v451 = vrot.slane %v450, 4
        %v452 = vadd.f32 %v450, %v451
        %v453 = vrot.slane %v452, 2
        %v454 = vadd.f32 %v452, %v453
        %v455 = vrot.slane %v454, 1
        %v456 = vadd.f32 %v454, %v455
        %v457 = vrcp.pop 16.0
        %v458 = vmul.f32 %v456, %v457
        %v459 = vld [vmem:[%s3] sm:$0xff]
        %v460 = vld [vmem:[%s4] sm:$0x1]
        %v462 = vsel %vm362, %v458, 0
        %464 = vmatprep.subr.mxu0 0.0
        %465 = vmatpush1.msra.mxu0 %v459
        %466 = vmatprep.subr.mxu0 0.0
        %467 = vmatpush1.msra.mxu0 0.0
        %468 = vmatprep.subr.mxu0 0.0
        %469 = vmatpush1.msra.mxu0 0.0
        %470 = vmatprep.subr.mxu0 0.0
        %471 = vmatpush1.msra.mxu0 0.0
        %472 = vmatprep.subr.mxu0 0.0
        %473 = vmatpush1.msra.mxu0 0.0
        %474 = vmatprep.subr.mxu0 0.0
        %475 = vmatpush1.msra.mxu0 0.0
        %476 = vmatprep.subr.mxu0 0.0
        %477 = vmatpush1.msra.mxu0 0.0
        %478 = vmatprep.subr.mxu0 0.0
        %479 = vmatpush1.msra.mxu0 0.0
        %480 = vmatprep.subr.mxu0 0.0
        %481 = vmatpush1.msra.mxu0 0.0
        %482 = vmatprep.subr.mxu0 0.0
        %483 = vmatpush1.msra.mxu0 0.0
        %484 = vmatprep.subr.mxu0 0.0
        %485 = vmatpush1.msra.mxu0 0.0
        %486 = vmatprep.subr.mxu0 0.0
        %487 = vmatpush1.msra.mxu0 0.0
        %488 = vmatprep.subr.mxu0 0.0
        %489 = vmatpush1.msra.mxu0 0.0
        %490 = vmatprep.subr.mxu0 0.0
        %491 = vmatpush1.msra.mxu0 0.0
        %492 = vmatprep.subr.mxu0 0.0
        %493 = vmatpush1.msra.mxu0 0.0
        %494 = vmatprep.subr.mxu0 0.0
        %495 = vmatpush1.msra.mxu0 0.0
        %496 = vmatprep.subr.mxu0 0.0
        %497 = vmatpush1.msra.mxu0 0.0
        %498 = vmatprep.subr.mxu0 0.0
        %499 = vmatpush1.msra.mxu0 0.0
        %500 = vmatprep.subr.mxu0 0.0
        %501 = vmatpush1.msra.mxu0 0.0
        %502 = vmatprep.subr.mxu0 0.0
        %503 = vmatpush1.msra.mxu0 0.0
        %504 = vmatprep.subr.mxu0 0.0
        %505 = vmatpush1.msra.mxu0 0.0
        %506 = vmatprep.subr.mxu0 0.0
        %507 = vmatpush1.msra.mxu0 0.0
        %508 = vmatprep.subr.mxu0 0.0
        %509 = vmatpush1.msra.mxu0 0.0
        %510 = vmatprep.subr.mxu0 0.0
        %511 = vmatpush1.msra.mxu0 0.0
        %512 = vmatprep.subr.mxu0 0.0
        %513 = vmatpush1.msra.mxu0 0.0
        %514 = vmatprep.subr.mxu0 0.0
        %515 = vmatpush1.msra.mxu0 0.0
        %516 = vmatprep.subr.mxu0 0.0
        %517 = vmatpush1.msra.mxu0 0.0
        %518 = vmatprep.subr.mxu0 0.0
        %519 = vmatpush1.msra.mxu0 0.0
        %520 = vmatprep.subr.mxu0 0.0
        %521 = vmatpush1.msra.mxu0 0.0
        %522 = vmatprep.subr.mxu0 0.0
        %523 = vmatpush1.msra.mxu0 0.0
        %524 = vmatprep.subr.mxu0 0.0
        %525 = vmatpush1.msra.mxu0 0.0
        %526 = vmatprep.subr.mxu0 0.0
        %527 = vmatpush1.msra.mxu0 0.0
        %528 = vmatprep.mubr.f32.mxu0 0.0
        %529 = vmatmul.mubr.f32.gmra.mrb[0].mxu0 %v462
        %v530 = vpop.f32.mrb[0].mxu0
        %v531 = vadd.f32 %v460, %v530
        %v532 = vpop.f32.mrb[0].mxu0
        %533 = vdwg.mxu0
        %vm534 = vcmask 130048
        %v535 = vsel %vm534, %v446, 0.0
        %v536 = vsel %vm534, %v447, 0.0
        %v537 = vadd.f32 %v535, %v536
        %v538 = vrot.slane %v537, 4
        %v539 = vadd.f32 %v537, %v538
        %v540 = vrot.slane %v539, 2
        %v541 = vadd.f32 %v539, %v540
        %v542 = vrot.slane %v541, 1
        %v543 = vadd.f32 %v541, %v542
        %v544 = vmul.f32 %v543, %v457
        %v545 = vld [vmem:[%s2] sm:$0x1]
        %v546 = vadd.f32 %v544, %v545
        %v547 = vmul.f32 %v531, %v546
        %v549 = vsel %vm362, %v547, 0
        %551 = vmatprep.subr.mxu0 0.0
        %552 = vmatpush1.msra.mxu0 %v359
        %553 = vmatprep.subr.mxu0 0.0
        %554 = vmatpush1.msra.mxu0 0.0
        %555 = vmatprep.subr.mxu0 0.0
        %556 = vmatpush1.msra.mxu0 0.0
        %557 = vmatprep.subr.mxu0 0.0
        %558 = vmatpush1.msra.mxu0 0.0
        %559 = vmatprep.subr.mxu0 0.0
        %560 = vmatpush1.msra.mxu0 0.0
        %561 = vmatprep.subr.mxu0 0.0
        %562 = vmatpush1.msra.mxu0 0.0
        %563 = vmatprep.subr.mxu0 0.0
        %564 = vmatpush1.msra.mxu0 0.0
        %565 = vmatprep.subr.mxu0 0.0
        %566 = vmatpush1.msra.mxu0 0.0
        %567 = vmatprep.subr.mxu0 0.0
        %568 = vmatpush1.msra.mxu0 0.0
        %569 = vmatprep.subr.mxu0 0.0
        %570 = vmatpush1.msra.mxu0 0.0
        %571 = vmatprep.subr.mxu0 0.0
        %572 = vmatpush1.msra.mxu0 0.0
        %573 = vmatprep.subr.mxu0 0.0
        %574 = vmatpush1.msra.mxu0 0.0
        %575 = vmatprep.subr.mxu0 0.0
        %576 = vmatpush1.msra.mxu0 0.0
        %577 = vmatprep.subr.mxu0 0.0
        %578 = vmatpush1.msra.mxu0 0.0
        %579 = vmatprep.subr.mxu0 0.0
        %580 = vmatpush1.msra.mxu0 0.0
        %581 = vmatprep.subr.mxu0 0.0
        %582 = vmatpush1.msra.mxu0 0.0
        %583 = vmatprep.subr.mxu0 0.0
        %584 = vmatpush1.msra.mxu0 0.0
        %585 = vmatprep.subr.mxu0 0.0
        %586 = vmatpush1.msra.mxu0 0.0
        %587 = vmatprep.subr.mxu0 0.0
        %588 = vmatpush1.msra.mxu0 0.0
        %589 = vmatprep.subr.mxu0 0.0
        %590 = vmatpush1.msra.mxu0 0.0
        %591 = vmatprep.subr.mxu0 0.0
        %592 = vmatpush1.msra.mxu0 0.0
        %593 = vmatprep.subr.mxu0 0.0
        %594 = vmatpush1.msra.mxu0 0.0
        %595 = vmatprep.subr.mxu0 0.0
        %596 = vmatpush1.msra.mxu0 0.0
        %597 = vmatprep.subr.mxu0 0.0
        %598 = vmatpush1.msra.mxu0 0.0
        %599 = vmatprep.subr.mxu0 0.0
        %600 = vmatpush1.msra.mxu0 0.0
        %601 = vmatprep.subr.mxu0 0.0
        %602 = vmatpush1.msra.mxu0 0.0
        %603 = vmatprep.subr.mxu0 0.0
        %604 = vmatpush1.msra.mxu0 0.0
        %605 = vmatprep.subr.mxu0 0.0
        %606 = vmatpush1.msra.mxu0 0.0
        %607 = vmatprep.subr.mxu0 0.0
        %608 = vmatpush1.msra.mxu0 0.0
        %609 = vmatprep.subr.mxu0 0.0
        %610 = vmatpush1.msra.mxu0 0.0
        %611 = vmatprep.subr.mxu0 0.0
        %612 = vmatpush1.msra.mxu0 0.0
        %613 = vmatprep.subr.mxu0 0.0
        %614 = vmatpush1.msra.mxu0 0.0
        %615 = vmatprep.mubr.f32.mxu0 0.0
        %616 = vmatmul.mubr.f32.gmra.mrb[0].mxu0 %v549
        %v617 = vpop.f32.mrb[0].mxu0
        %v618 = vadd.f32 0.0, %v617
        %v619 = vpop.f32.mrb[0].mxu0
        %620 = vdwg.mxu0
        %v621 = vlaneseq
        %v622 = vshrl.u32 %v621, 7
        %v623 = vsub.s32 0, %v622
        %v624 = vrot.slane %v531, %v623
        %v625 = vmul.f32 %v624, %v446
        %v626 = vmul.f32 %v624, %v447
        %v628 = vsel %vm362, %v625, 0
        %v631 = vsel %vm362, %v626, 0
        %633 = vmatprep.subr.mxu0 0.0
        %634 = vmatpush1.msra.mxu0 %v359
        %635 = vmatprep.subr.mxu0 0.0
        %636 = vmatpush1.msra.mxu0 0.0
        %637 = vmatprep.subr.mxu0 0.0
        %638 = vmatpush1.msra.mxu0 0.0
        %639 = vmatprep.subr.mxu0 0.0
        %640 = vmatpush1.msra.mxu0 0.0
        %641 = vmatprep.subr.mxu0 0.0
        %642 = vmatpush1.msra.mxu0 0.0
        %643 = vmatprep.subr.mxu0 0.0
        %644 = vmatpush1.msra.mxu0 0.0
        %645 = vmatprep.subr.mxu0 0.0
        %646 = vmatpush1.msra.mxu0 0.0
        %647 = vmatprep.subr.mxu0 0.0
        %648 = vmatpush1.msra.mxu0 0.0
        %649 = vmatprep.subr.mxu0 0.0
        %650 = vmatpush1.msra.mxu0 0.0
        %651 = vmatprep.subr.mxu0 0.0
        %652 = vmatpush1.msra.mxu0 0.0
        %653 = vmatprep.subr.mxu0 0.0
        %654 = vmatpush1.msra.mxu0 0.0
        %655 = vmatprep.subr.mxu0 0.0
        %656 = vmatpush1.msra.mxu0 0.0
        %657 = vmatprep.subr.mxu0 0.0
        %658 = vmatpush1.msra.mxu0 0.0
        %659 = vmatprep.subr.mxu0 0.0
        %660 = vmatpush1.msra.mxu0 0.0
        %661 = vmatprep.subr.mxu0 0.0
        %662 = vmatpush1.msra.mxu0 0.0
        %663 = vmatprep.subr.mxu0 0.0
        %664 = vmatpush1.msra.mxu0 0.0
        %665 = vmatprep.subr.mxu0 0.0
        %666 = vmatpush1.msra.mxu0 0.0
        %667 = vmatprep.subr.mxu0 0.0
        %668 = vmatpush1.msra.mxu0 0.0
        %669 = vmatprep.subr.mxu0 0.0
        %670 = vmatpush1.msra.mxu0 0.0
        %671 = vmatprep.subr.mxu0 0.0
        %672 = vmatpush1.msra.mxu0 0.0
        %673 = vmatprep.subr.mxu0 0.0
        %674 = vmatpush1.msra.mxu0 0.0
        %675 = vmatprep.subr.mxu0 0.0
        %676 = vmatpush1.msra.mxu0 0.0
        %677 = vmatprep.subr.mxu0 0.0
        %678 = vmatpush1.msra.mxu0 0.0
        %679 = vmatprep.subr.mxu0 0.0
        %680 = vmatpush1.msra.mxu0 0.0
        %681 = vmatprep.subr.mxu0 0.0
        %682 = vmatpush1.msra.mxu0 0.0
        %683 = vmatprep.subr.mxu0 0.0
        %684 = vmatpush1.msra.mxu0 0.0
        %685 = vmatprep.subr.mxu0 0.0
        %686 = vmatpush1.msra.mxu0 0.0
        %687 = vmatprep.subr.mxu0 0.0
        %688 = vmatpush1.msra.mxu0 0.0
        %689 = vmatprep.subr.mxu0 0.0
        %690 = vmatpush1.msra.mxu0 0.0
        %691 = vmatprep.subr.mxu0 0.0
        %692 = vmatpush1.msra.mxu0 0.0
        %693 = vmatprep.subr.mxu0 0.0
        %694 = vmatpush1.msra.mxu0 0.0
        %695 = vmatprep.subr.mxu0 0.0
        %696 = vmatpush1.msra.mxu0 0.0
        %697 = vmatprep.mubr.f32.mxu0 0.0
        %698 = vmatmul.mubr.f32.gmra.mrb[0].mxu0 %v628
        %v699 = vpop.f32.mrb[0].mxu0
        %v700 = vadd.f32 0.0, %v699
        %v701 = vpop.f32.mrb[0].mxu0
        %702 = vmatprep.mubr.f32.mxu0 0.0
        %703 = vmatmul.mubr.f32.gmra.mrb[0].mxu0 %v631
        %v704 = vpop.f32.mrb[0].mxu0
        %v705 = vadd.f32 0.0, %v704
        %v706 = vpop.f32.mrb[0].mxu0
        %707 = vdwg.mxu0
        %vm708 = vcmask 15360
        %v709 = vsel %vm708, %v700, -inf
        %v710 = vsel %vm708, %v705, -inf
        %v711 = vmax.f32 %v709, %v710
        %v712 = vrot.slane %v711, 4
        %v713 = vmax.f32 %v711, %v712
        %v714 = vrot.slane %v713, 2
        %v715 = vmax.f32 %v713, %v714
        %v716 = vrot.slane %v715, 1
        %v717 = vmax.f32 %v715, %v716
        %v718 = vmax.f32 %v618, %v717
        %v719 = vsub.f32 %v618, %v718
        %v720 = vmul.f32 %v719, 1.442695
        %v721 = vpow.pop %v720
        %v722 = vlaneseq
        %v723 = vshrl.u32 %v722, 7
        %v724 = vsub.s32 0, %v723
        %v725 = vrot.slane %v718, %v724
        %v726 = vsub.f32 %v700, %v725
        %v727 = vsub.f32 %v705, %v725
        %v728 = vmul.f32 %v726, 1.442695
        %v729 = vpow.pop %v728
        %v730 = vmul.f32 %v727, 1.442695
        %v731 = vpow.pop %v730
        %v732 = vsel %vm708, %v729, 0.0
        %v733 = vsel %vm708, %v731, 0.0
        %v734 = vadd.f32 %v732, %v733
        %v735 = vrot.slane %v734, 4
        %v736 = vadd.f32 %v734, %v735
        %v737 = vrot.slane %v736, 2
        %v738 = vadd.f32 %v736, %v737
        %v739 = vrot.slane %v738, 1
        %v740 = vadd.f32 %v738, %v739
        %v741 = vadd.f32 %v721, %v740
        %v742 = vrcp.pop %v741
        %v743 = vmul.f32 %v741, %v742
        %v744 = vsub.f32 2.0, %v743
        %v745 = vmul.f32 %v742, %v744
        %v746 = vmul.f32 %v741, %v745
        %v747 = vsub.f32 2.0, %v746
        %v748 = vmul.f32 %v745, %v747
        %v749 = vmul.f32 %v721, %v748
        %v750 = vlaneseq
        %v751 = vshrl.u32 %v750, 7
        %v752 = vsub.s32 0, %v751
        %v753 = vrot.slane %v748, %v752
        %v754 = vmul.f32 %v729, %v753
        %v755 = vmul.f32 %v731, %v753
        %756 = vxpose.xlu0.b32.start [1/16] %v754, 128
        %757 = vxpose.xlu0.b32.cont [2/16] %v755, 128
        %758 = vxpose.xlu0.b32.cont [3/16] 0.0, 128
        %759 = vxpose.xlu0.b32.cont [4/16] 0.0, 128
        %760 = vxpose.xlu0.b32.cont [5/16] 0.0, 128
        %761 = vxpose.xlu0.b32.cont [6/16] 0.0, 128
        %762 = vxpose.xlu0.b32.cont [7/16] 0.0, 128
        %763 = vxpose.xlu0.b32.cont [8/16] 0.0, 128
        %764 = vxpose.xlu0.b32.cont [9/16] 0.0, 128
        %765 = vxpose.xlu0.b32.cont [10/16] 0.0, 128
        %766 = vxpose.xlu0.b32.cont [11/16] 0.0, 128
        %767 = vxpose.xlu0.b32.cont [12/16] 0.0, 128
        %768 = vxpose.xlu0.b32.cont [13/16] 0.0, 128
        %769 = vxpose.xlu0.b32.cont [14/16] 0.0, 128
        %770 = vxpose.xlu0.b32.cont [15/16] 0.0, 128
        %771 = vxpose.xlu0.b32.end [16/16] 0.0, 128
        %v772 = vpop.trf.xlu0
        %v773 = vpop.trf.xlu0
        %v774 = vpop.trf.xlu0
        %v775 = vpop.trf.xlu0
        %v776 = vpop.trf.xlu0
        %v777 = vpop.trf.xlu0
        %v778 = vpop.trf.xlu0
        %v779 = vpop.trf.xlu0
        %v780 = vpop.trf.xlu0
        %v781 = vpop.trf.xlu0
        %v782 = vpop.trf.xlu0
        %v783 = vpop.trf.xlu0
        %v784 = vpop.trf.xlu0
        %v785 = vpop.trf.xlu0
        %v786 = vpop.trf.xlu0
        %v787 = vpop.trf.xlu0
        %790 = vrot.lane.b32.xlu0 %v446, 120
        %v791 = vpop.permute.xlu0 %790
        %792 = vrot.lane.b32.xlu0 %v447, 120
        %v793 = vpop.permute.xlu0 %792
        %v797 = vsel %vm534, %v772, 0
        %799 = vmatprep.subr.mxu0 0.0
        %800 = vmatpush1.msra.mxu0 %v791
        %801 = vmatprep.subr.mxu0 0.0
        %802 = vmatpush1.msra.mxu0 %v793
        %803 = vmatprep.subr.mxu0 0.0
        %804 = vmatpush1.msra.mxu0 0.0
        %805 = vmatprep.subr.mxu0 0.0
        %806 = vmatpush1.msra.mxu0 0.0
        %807 = vmatprep.subr.mxu0 0.0
        %808 = vmatpush1.msra.mxu0 0.0
        %809 = vmatprep.subr.mxu0 0.0
        %810 = vmatpush1.msra.mxu0 0.0
        %811 = vmatprep.subr.mxu0 0.0
        %812 = vmatpush1.msra.mxu0 0.0
        %813 = vmatprep.subr.mxu0 0.0
        %814 = vmatpush1.msra.mxu0 0.0
        %815 = vmatprep.subr.mxu0 0.0
        %816 = vmatpush1.msra.mxu0 0.0
        %817 = vmatprep.subr.mxu0 0.0
        %818 = vmatpush1.msra.mxu0 0.0
        %819 = vmatprep.subr.mxu0 0.0
        %820 = vmatpush1.msra.mxu0 0.0
        %821 = vmatprep.subr.mxu0 0.0
        %822 = vmatpush1.msra.mxu0 0.0
        %823 = vmatprep.subr.mxu0 0.0
        %824 = vmatpush1.msra.mxu0 0.0
        %825 = vmatprep.subr.mxu0 0.0
        %826 = vmatpush1.msra.mxu0 0.0
        %827 = vmatprep.subr.mxu0 0.0
        %828 = vmatpush1.msra.mxu0 0.0
        %829 = vmatprep.subr.mxu0 0.0
        %830 = vmatpush1.msra.mxu0 0.0
        %831 = vmatprep.subr.mxu0 0.0
        %832 = vmatpush1.msra.mxu0 0.0
        %833 = vmatprep.subr.mxu0 0.0
        %834 = vmatpush1.msra.mxu0 0.0
        %835 = vmatprep.subr.mxu0 0.0
        %836 = vmatpush1.msra.mxu0 0.0
        %837 = vmatprep.subr.mxu0 0.0
        %838 = vmatpush1.msra.mxu0 0.0
        %839 = vmatprep.subr.mxu0 0.0
        %840 = vmatpush1.msra.mxu0 0.0
        %841 = vmatprep.subr.mxu0 0.0
        %842 = vmatpush1.msra.mxu0 0.0
        %843 = vmatprep.subr.mxu0 0.0
        %844 = vmatpush1.msra.mxu0 0.0
        %845 = vmatprep.subr.mxu0 0.0
        %846 = vmatpush1.msra.mxu0 0.0
        %847 = vmatprep.subr.mxu0 0.0
        %848 = vmatpush1.msra.mxu0 0.0
        %849 = vmatprep.subr.mxu0 0.0
        %850 = vmatpush1.msra.mxu0 0.0
        %851 = vmatprep.subr.mxu0 0.0
        %852 = vmatpush1.msra.mxu0 0.0
        %853 = vmatprep.subr.mxu0 0.0
        %854 = vmatpush1.msra.mxu0 0.0
        %855 = vmatprep.subr.mxu0 0.0
        %856 = vmatpush1.msra.mxu0 0.0
        %857 = vmatprep.subr.mxu0 0.0
        %858 = vmatpush1.msra.mxu0 0.0
        %859 = vmatprep.subr.mxu0 0.0
        %860 = vmatpush1.msra.mxu0 0.0
        %861 = vmatprep.subr.mxu0 0.0
        %862 = vmatpush1.msra.mxu0 0.0
        %863 = vmatprep.mubr.f32.mxu0 0.0
        %864 = vmatmul.mubr.f32.gmra.mrb[0].mxu0 %v797
        %v865 = vpop.f32.mrb[0].mxu0
        %v866 = vadd.f32 0.0, %v865
        %v867 = vpop.f32.mrb[0].mxu0
        %868 = vdwg.mxu0
        %v869 = vmul.f32 %v866, %v360
        %vm870 = vcmask 58368
        %v871 = vsel %vm870, %v869, 0.0
        %v872 = vrot.slane %v871, 4
        %v873 = vadd.f32 %v871, %v872
        %v874 = vrot.slane %v873, 2
        %v875 = vadd.f32 %v873, %v874
        %v876 = vrot.slane %v875, 1
        %v877 = vadd.f32 %v875, %v876
        %v879 = vsel %vm708, %v749, 0
        %vm881 = vcmask 1041408
        %v883 = vsel %vm881, %v360, 0
        %885 = vmatprep.subr.mxu0 0.0
        %886 = vmatpush1.msra.mxu0 %v883
        %887 = vmatprep.subr.mxu0 0.0
        %888 = vmatpush1.msra.mxu0 0.0
        %889 = vmatprep.subr.mxu0 0.0
        %890 = vmatpush1.msra.mxu0 0.0
        %891 = vmatprep.subr.mxu0 0.0
        %892 = vmatpush1.msra.mxu0 0.0
        %893 = vmatprep.subr.mxu0 0.0
        %894 = vmatpush1.msra.mxu0 0.0
        %895 = vmatprep.subr.mxu0 0.0
        %896 = vmatpush1.msra.mxu0 0.0
        %897 = vmatprep.subr.mxu0 0.0
        %898 = vmatpush1.msra.mxu0 0.0
        %899 = vmatprep.subr.mxu0 0.0
        %900 = vmatpush1.msra.mxu0 0.0
        %901 = vmatprep.subr.mxu0 0.0
        %902 = vmatpush1.msra.mxu0 0.0
        %903 = vmatprep.subr.mxu0 0.0
        %904 = vmatpush1.msra.mxu0 0.0
        %905 = vmatprep.subr.mxu0 0.0
        %906 = vmatpush1.msra.mxu0 0.0
        %907 = vmatprep.subr.mxu0 0.0
        %908 = vmatpush1.msra.mxu0 0.0
        %909 = vmatprep.subr.mxu0 0.0
        %910 = vmatpush1.msra.mxu0 0.0
        %911 = vmatprep.subr.mxu0 0.0
        %912 = vmatpush1.msra.mxu0 0.0
        %913 = vmatprep.subr.mxu0 0.0
        %914 = vmatpush1.msra.mxu0 0.0
        %915 = vmatprep.subr.mxu0 0.0
        %916 = vmatpush1.msra.mxu0 0.0
        %917 = vmatprep.subr.mxu0 0.0
        %918 = vmatpush1.msra.mxu0 0.0
        %919 = vmatprep.subr.mxu0 0.0
        %920 = vmatpush1.msra.mxu0 0.0
        %921 = vmatprep.subr.mxu0 0.0
        %922 = vmatpush1.msra.mxu0 0.0
        %923 = vmatprep.subr.mxu0 0.0
        %924 = vmatpush1.msra.mxu0 0.0
        %925 = vmatprep.subr.mxu0 0.0
        %926 = vmatpush1.msra.mxu0 0.0
        %927 = vmatprep.subr.mxu0 0.0
        %928 = vmatpush1.msra.mxu0 0.0
        %929 = vmatprep.subr.mxu0 0.0
        %930 = vmatpush1.msra.mxu0 0.0
        %931 = vmatprep.subr.mxu0 0.0
        %932 = vmatpush1.msra.mxu0 0.0
        %933 = vmatprep.subr.mxu0 0.0
        %934 = vmatpush1.msra.mxu0 0.0
        %935 = vmatprep.subr.mxu0 0.0
        %936 = vmatpush1.msra.mxu0 0.0
        %937 = vmatprep.subr.mxu0 0.0
        %938 = vmatpush1.msra.mxu0 0.0
        %939 = vmatprep.subr.mxu0 0.0
        %940 = vmatpush1.msra.mxu0 0.0
        %941 = vmatprep.subr.mxu0 0.0
        %942 = vmatpush1.msra.mxu0 0.0
        %943 = vmatprep.subr.mxu0 0.0
        %944 = vmatpush1.msra.mxu0 0.0
        %945 = vmatprep.subr.mxu0 0.0
        %946 = vmatpush1.msra.mxu0 0.0
        %947 = vmatprep.subr.mxu0 0.0
        %948 = vmatpush1.msra.mxu0 0.0
        %949 = vmatprep.mubr.f32.mxu0 0.0
        %950 = vmatmul.mubr.f32.gmra.mrb[0].mxu0 %v879
        %v951 = vpop.f32.mrb[0].mxu0
        %v952 = vadd.f32 0.0, %v951
        %v953 = vpop.f32.mrb[0].mxu0
        %954 = vdwg.mxu0
        %956 = vrot.lane.b32.xlu0 %v546, 120
        %v957 = vpop.permute.xlu0 %956
        %v959 = vmul.f32 %v952, %v957
        %v960 = vadd.f32 %v877, %v959
        %v961 = vld [vmem:[%s6] sm:$0xff]
        %v962 = vld [vmem:[%s7] sm:$0x1]
        %v964 = vsel %vm362, %v960, 0
        %966 = vmatprep.subr.mxu0 0.0
        %967 = vmatpush1.msra.mxu0 %v961
        %968 = vmatprep.subr.mxu0 0.0
        %969 = vmatpush1.msra.mxu0 0.0
        %970 = vmatprep.subr.mxu0 0.0
        %971 = vmatpush1.msra.mxu0 0.0
        %972 = vmatprep.subr.mxu0 0.0
        %973 = vmatpush1.msra.mxu0 0.0
        %974 = vmatprep.subr.mxu0 0.0
        %975 = vmatpush1.msra.mxu0 0.0
        %976 = vmatprep.subr.mxu0 0.0
        %977 = vmatpush1.msra.mxu0 0.0
        %978 = vmatprep.subr.mxu0 0.0
        %979 = vmatpush1.msra.mxu0 0.0
        %980 = vmatprep.subr.mxu0 0.0
        %981 = vmatpush1.msra.mxu0 0.0
        %982 = vmatprep.subr.mxu0 0.0
        %983 = vmatpush1.msra.mxu0 0.0
        %984 = vmatprep.subr.mxu0 0.0
        %985 = vmatpush1.msra.mxu0 0.0
        %986 = vmatprep.subr.mxu0 0.0
        %987 = vmatpush1.msra.mxu0 0.0
        %988 = vmatprep.subr.mxu0 0.0
        %989 = vmatpush1.msra.mxu0 0.0
        %990 = vmatprep.subr.mxu0 0.0
        %991 = vmatpush1.msra.mxu0 0.0
        %992 = vmatprep.subr.mxu0 0.0
        %993 = vmatpush1.msra.mxu0 0.0
        %994 = vmatprep.subr.mxu0 0.0
        %995 = vmatpush1.msra.mxu0 0.0
        %996 = vmatprep.subr.mxu0 0.0
        %997 = vmatpush1.msra.mxu0 0.0
        %998 = vmatprep.subr.mxu0 0.0
        %999 = vmatpush1.msra.mxu0 0.0
        %1000 = vmatprep.subr.mxu0 0.0
        %1001 = vmatpush1.msra.mxu0 0.0
        %1002 = vmatprep.subr.mxu0 0.0
        %1003 = vmatpush1.msra.mxu0 0.0
        %1004 = vmatprep.subr.mxu0 0.0
        %1005 = vmatpush1.msra.mxu0 0.0
        %1006 = vmatprep.subr.mxu0 0.0
        %1007 = vmatpush1.msra.mxu0 0.0
        %1008 = vmatprep.subr.mxu0 0.0
        %1009 = vmatpush1.msra.mxu0 0.0
        %1010 = vmatprep.subr.mxu0 0.0
        %1011 = vmatpush1.msra.mxu0 0.0
        %1012 = vmatprep.subr.mxu0 0.0
        %1013 = vmatpush1.msra.mxu0 0.0
        %1014 = vmatprep.subr.mxu0 0.0
        %1015 = vmatpush1.msra.mxu0 0.0
        %1016 = vmatprep.subr.mxu0 0.0
        %1017 = vmatpush1.msra.mxu0 0.0
        %1018 = vmatprep.subr.mxu0 0.0
        %1019 = vmatpush1.msra.mxu0 0.0
        %1020 = vmatprep.subr.mxu0 0.0
        %1021 = vmatpush1.msra.mxu0 0.0
        %1022 = vmatprep.subr.mxu0 0.0
        %1023 = vmatpush1.msra.mxu0 0.0
        %1024 = vmatprep.subr.mxu0 0.0
        %1025 = vmatpush1.msra.mxu0 0.0
        %1026 = vmatprep.subr.mxu0 0.0
        %1027 = vmatpush1.msra.mxu0 0.0
        %1028 = vmatprep.subr.mxu0 0.0
        %1029 = vmatpush1.msra.mxu0 0.0
        %1030 = vmatprep.mubr.f32.mxu0 0.0
        %1031 = vmatmul.mubr.f32.gmra.mrb[0].mxu0 %v964
        %v1032 = vpop.f32.mrb[0].mxu0
        %v1033 = vadd.f32 %v962, %v1032
        %v1034 = vpop.f32.mrb[0].mxu0
        %1035 = vdwg.mxu0
        %vm1036 = vcmask 57344
        %1037 = vst.msk [vmem:[%s351] sm:$0x1] %vm1036, %v1033
        %s1038 = sand.u32 %s247, 1
        %s1039 = scalar_lea.sflag [#allocation3], %s1038
        %s1040 = sand.u32 %s247, 1
        %s1041 = scalar_lea.vmem [#allocation2], %s1040
        // Predicated region
        $region61: #{tpu_custom_call.1} parent=59 // pred_check
          %p1042 = pneg %p257
        $region62: #{tpu_custom_call.1} parent=59 // pred_check_branch
          %1044 = sbr.rel (%p1042) target = $region64
        $region63: #{tpu_custom_call.1} parent=59 // pred_region
          %s1046 = ssub.s32 16, 16
          %1047 = vsyncadd %s1039, %s1046
          %s1048 = smul.addr %s24, 16
          %s1049 = scalar_lea.hbm %s10, %s1048
          %s1051 = sshll.u32 %s1041, 4
          %s1052 = int_to_ptr.vmem [resolvable:$true] %s1051
          %1054 = dma.vmem_to_hbm [thread:$0]  %s1052, 16, %s1049, %s1039
        $region64: #{tpu_custom_call.1} parent=59 // pred_fallthru
          _
      $region60: #{tpu_custom_call.1} parent=5 // pred_fallthru
        _
      %p1055 = scmp.le.s32.totalorder 2, %s19
      // Predicated region
      $region65: #{tpu_custom_call.1} parent=5 // pred_check
        %p1056 = pneg %p1055
      $region66: #{tpu_custom_call.1} parent=5 // pred_check_branch
        %1058 = sbr.rel (%p1056) target = $region68
      $region67: #{tpu_custom_call.1} parent=5 // pred_region
        %s1059 = ssub.s32 %s19, 2
        // Predicated region
        $region69: #{tpu_custom_call.1} parent=67 // pred_check
          %p1060 = pneg %p263
        $region70: #{tpu_custom_call.1} parent=67 // pred_check_branch
          %1062 = sbr.rel (%p1060) target = $region72
        $region71: #{tpu_custom_call.1} parent=67 // pred_region
          %s1063 = sand.u32 %s248, 1
          %s1064 = scalar_lea.sflag [#allocation3], %s1063
          %s1065 = sand.u32 %s248, 1
          %s1066 = scalar_lea.vmem [#allocation2], %s1065
          %1067 = dma.done %s1064, 16
        $region72: #{tpu_custom_call.1} parent=67 // pred_fallthru
          _
      $region68: #{tpu_custom_call.1} parent=5 // pred_fallthru
        _
    $region6: #{tpu_custom_call.1} parent=1 // loop_footer
      %s23 = sadd.s32 1, %s19
    $region7: #{tpu_custom_call.1} parent=1 // loop_footer_branch
      %18 = sbr.rel target = $region3
    $region8: #{tpu_custom_call.1} parent=1 // loop_exit
      _
    %1068 = vsyncpa [#allocation3], 1
    %s1069 = scalar_lea.sflag [#allocation3], 1
    %1070 = vsyncpa %s1069, 1

// kernel: tpu_custom_call.1
$region0: #{tpu_custom_call.1}
  #allocation0 [shape = 'u32[]', space=smem, size = 0x4, offset = 0x4, fixed_abs, tag = 'smem constant byte address 0x4 - core index']
  #allocation1 [shape = 'u32[144,128]{1,0:T(1,128)}', space=vmem, size = 0x12000, scoped, tag = 'internal scratch']
  %s0 = inlined_call_operand.vmem [shape: f32[2,16,8], index: 0, kind: input, shape index: {}]
  %s1 = inlined_call_operand.vmem [shape: f32[16,16], index: 1, kind: input, shape index: {}]
  %s2 = inlined_call_operand.vmem [shape: f32[1,16], index: 2, kind: input, shape index: {}]
  %s3 = inlined_call_operand.vmem [shape: f32[8,8], index: 3, kind: input, shape index: {}]
  %s4 = inlined_call_operand.vmem [shape: f32[1,8], index: 4, kind: input, shape index: {}]
  %s5 = inlined_call_operand.vmem [shape: f32[8,16], index: 5, kind: input, shape index: {}]
  %s6 = inlined_call_operand.vmem [shape: f32[8,8], index: 6, kind: input, shape index: {}]
  %s7 = inlined_call_operand.vmem [shape: f32[1,8], index: 7, kind: input, shape index: {}]
  %s8 = inlined_call_operand.vmem [shape: f32[8,2], index: 8, kind: input, shape index: {}]
  %s9 = inlined_call_operand.vmem [shape: f32[2,8], index: 9, kind: input, shape index: {}]
  %s10 = inlined_call_operand.hbm [shape: f32[2,1,8], index: 10, kind: output, shape index: {}]
  %s11 = sld [smem:[#allocation0]]
  $region73: #{tpu_custom_call.1} parent=0
    _
  %s13 = ssub.s32 1, %s11
  %s14 = scalar_select 0, %s13, %s11
  $region1: #{tpu_custom_call.1} parent=0
    #allocation2 [shape = 'u8[1024]{0}', space=vmem, size = 0x400, scoped, tag = 'output window, operand 0']
    #allocation3 [shape = 's32[2]{0}', space=sflag, size = 0x8, scoped, tag = 'scoped memory for tpu_custom_call.1']
    %15 = vsyncpa [#allocation3], 0
    %s16 = scalar_lea.sflag [#allocation3], 1
    %17 = vsyncpa %s16, 0
    loop: start=0, step=1, limit=4
    $region2: #{tpu_custom_call.1} parent=1 // loop_pre_header
      _
    $region3: #{tpu_custom_call.1} parent=1 // loop_header
      %s19 = sphi 0, %s23
      %p20 = scmp.ge.s32.totalorder %s19, 4
      %s29 = sphi 0, %s31
      %s32 = sphi 0, %s29
      %s33 = sphi 0, %s32
      %s49 = sphi 0, %s33
      %s53 = sphi 0, %s53
      %s55 = sphi 0, %s53
      %s56 = sphi 0, %s55
      %s70 = sphi 0, %s56
      %s74 = sphi 0, %s74
      %s76 = sphi 0, %s74
      %s77 = sphi 0, %s76
      %s91 = sphi 0, %s77
      %s95 = sphi 0, %s95
      %s97 = sphi 0, %s95
      %s98 = sphi 0, %s97
      %s112 = sphi 0, %s98
      %s116 = sphi 0, %s116
      %s118 = sphi 0, %s116
      %s119 = sphi 0, %s118
      %s133 = sphi 0, %s119
      %s137 = sphi 0, %s137
      %s139 = sphi 0, %s137
      %s140 = sphi 0, %s139
      %s154 = sphi 0, %s140
      %s158 = sphi 0, %s158
      %s160 = sphi 0, %s158
      %s161 = sphi 0, %s160
      %s175 = sphi 0, %s161
      %s179 = sphi 0, %s179
      %s181 = sphi 0, %s179
      %s182 = sphi 0, %s181
      %s196 = sphi 0, %s182
      %s200 = sphi 0, %s200
      %s202 = sphi 0, %s200
      %s203 = sphi 0, %s202
      %s217 = sphi 0, %s203
      %s221 = sphi 0, %s221
      %s223 = sphi 0, %s221
      %s224 = sphi 0, %s223
      %s238 = sphi 0, %s224
      %s244 = sphi 0, %s246
      %s247 = sphi 0, %s244
      %s248 = sphi 0, %s247
      %s264 = sphi 0, %s248
    $region4: #{tpu_custom_call.1} parent=1 // loop_header_branch
      %22 = sbr.rel (%p20) target = $region8
    $region5: #{tpu_custom_call.1} parent=1 // loop_body
      %s24 = ssub.s32 %s19, 1
      %s25 = ssub.s32 %s19, 2
      %s26 = sadd.s32 %s19, 1
      %s27 = ssub.s32 %s19, %s26
      %p28 = scmp.eq.s32.totalorder %s27, 0
      %s30 = sadd.s32 %s29, 1
      %s31 = scalar_select %p28, %s29, %s30
      %p34 = pneg %p28
      %p35 = scmp.eq.s32.totalorder %s19, 1
      %p36 = por %p34, %p35
      %p37 = scmp.ne.s32.totalorder %s29, %s32
      %p38 = scmp.eq.s32.totalorder %s19, 0
      %p39 = por %p37, %p38
      %p40 = scmp.ne.s32.totalorder %s29, %s32
      %p41 = scmp.eq.s32.totalorder %s24, 1
      %p42 = por %p40, %p41
      %p43 = scmp.ne.s32.totalorder %s32, %s33
      %p44 = scmp.eq.s32.totalorder %s24, 0
      %p45 = por %p43, %p44
      %p46 = scmp.ne.s32.totalorder %s32, %s33
      %p47 = scmp.eq.s32.totalorder %s25, 1
      %p48 = por %p46, %p47
      %p50 = scmp.ne.s32.totalorder %s33, %s49
      %p51 = scmp.eq.s32.totalorder %s25, 0
      %p52 = por %p50, %p51
      %s54 = sadd.s32 %s53, 1
      %p57 = scmp.eq.s32.totalorder %s19, 1
      %p58 = scmp.ne.s32.totalorder %s53, %s55
      %p59 = scmp.eq.s32.totalorder %s19, 0
      %p60 = por %p58, %p59
      %p61 = scmp.ne.s32.totalorder %s53, %s55
      %p62 = scmp.eq.s32.totalorder %s24, 1
      %p63 = por %p61, %p62
      %p64 = scmp.ne.s32.totalorder %s55, %s56
      %p65 = scmp.eq.s32.totalorder %s24, 0
      %p66 = por %p64, %p65
      %p67 = scmp.ne.s32.totalorder %s55, %s56
      %p68 = scmp.eq.s32.totalorder %s25, 1
      %p69 = por %p67, %p68
      %p71 = scmp.ne.s32.totalorder %s56, %s70
      %p72 = scmp.eq.s32.totalorder %s25, 0
      %p73 = por %p71, %p72
      %s75 = sadd.s32 %s74, 1
      %p78 = scmp.eq.s32.totalorder %s19, 1
      %p79 = scmp.ne.s32.totalorder %s74, %s76
      %p80 = scmp.eq.s32.totalorder %s19, 0
      %p81 = por %p79, %p80
      %p82 = scmp.ne.s32.totalorder %s74, %s76
      %p83 = scmp.eq.s32.totalorder %s24, 1
      %p84 = por %p82, %p83
      %p85 = scmp.ne.s32.totalorder %s76, %s77
      %p86 = scmp.eq.s32.totalorder %s24, 0
      %p87 = por %p85, %p86
      %p88 = scmp.ne.s32.totalorder %s76, %s77
      %p89 = scmp.eq.s32.totalorder %s25, 1
      %p90 = por %p88, %p89
      %p92 = scmp.ne.s32.totalorder %s77, %s91
      %p93 = scmp.eq.s32.totalorder %s25, 0
      %p94 = por %p92, %p93
      %s96 = sadd.s32 %s95, 1
      %p99 = scmp.eq.s32.totalorder %s19, 1
      %p100 = scmp.ne.s32.totalorder %s95, %s97
      %p101 = scmp.eq.s32.totalorder %s19, 0
      %p102 = por %p100, %p101
      %p103 = scmp.ne.s32.totalorder %s95, %s97
      %p104 = scmp.eq.s32.totalorder %s24, 1
      %p105 = por %p103, %p104
      %p106 = scmp.ne.s32.totalorder %s97, %s98
      %p107 = scmp.eq.s32.totalorder %s24, 0
      %p108 = por %p106, %p107
      %p109 = scmp.ne.s32.totalorder %s97, %s98
      %p110 = scmp.eq.s32.totalorder %s25, 1
      %p111 = por %p109, %p110
      %p113 = scmp.ne.s32.totalorder %s98, %s112
      %p114 = scmp.eq.s32.totalorder %s25, 0
      %p115 = por %p113, %p114
      %s117 = sadd.s32 %s116, 1
      %p120 = scmp.eq.s32.totalorder %s19, 1
      %p121 = scmp.ne.s32.totalorder %s116, %s118
      %p122 = scmp.eq.s32.totalorder %s19, 0
      %p123 = por %p121, %p122
      %p124 = scmp.ne.s32.totalorder %s116, %s118
      %p125 = scmp.eq.s32.totalorder %s24, 1
      %p126 = por %p124, %p125
      %p127 = scmp.ne.s32.totalorder %s118, %s119
      %p128 = scmp.eq.s32.totalorder %s24, 0
      %p129 = por %p127, %p128
      %p130 = scmp.ne.s32.totalorder %s118, %s119
      %p131 = scmp.eq.s32.totalorder %s25, 1
      %p132 = por %p130, %p131
      %p134 = scmp.ne.s32.totalorder %s119, %s133
      %p135 = scmp.eq.s32.totalorder %s25, 0
      %p136 = por %p134, %p135
      %s138 = sadd.s32 %s137, 1
      %p141 = scmp.eq.s32.totalorder %s19, 1
      %p142 = scmp.ne.s32.totalorder %s137, %s139
      %p143 = scmp.eq.s32.totalorder %s19, 0
      %p144 = por %p142, %p143
      %p145 = scmp.ne.s32.totalorder %s137, %s139
      %p146 = scmp.eq.s32.totalorder %s24, 1
      %p147 = por %p145, %p146
      %p148 = scmp.ne.s32.totalorder %s139, %s140
      %p149 = scmp.eq.s32.totalorder %s24, 0
      %p150 = por %p148, %p149
      %p151 = scmp.ne.s32.totalorder %s139, %s140
      %p152 = scmp.eq.s32.totalorder %s25, 1
      %p153 = por %p151, %p152
      %p155 = scmp.ne.s32.totalorder %s140, %s154
      %p156 = scmp.eq.s32.totalorder %s25, 0
      %p157 = por %p155, %p156
      %s159 = sadd.s32 %s158, 1
      %p162 = scmp.eq.s32.totalorder %s19, 1
      %p163 = scmp.ne.s32.totalorder %s158, %s160
      %p164 = scmp.eq.s32.totalorder %s19, 0
      %p165 = por %p163, %p164
      %p166 = scmp.ne.s32.totalorder %s158, %s160
      %p167 = scmp.eq.s32.totalorder %s24, 1
      %p168 = por %p166, %p167
      %p169 = scmp.ne.s32.totalorder %s160, %s161
      %p170 = scmp.eq.s32.totalorder %s24, 0
      %p171 = por %p169, %p170
      %p172 = scmp.ne.s32.totalorder %s160, %s161
      %p173 = scmp.eq.s32.totalorder %s25, 1
      %p174 = por %p172, %p173
      %p176 = scmp.ne.s32.totalorder %s161, %s175
      %p177 = scmp.eq.s32.totalorder %s25, 0
      %p178 = por %p176, %p177
      %s180 = sadd.s32 %s179, 1
      %p183 = scmp.eq.s32.totalorder %s19, 1
      %p184 = scmp.ne.s32.totalorder %s179, %s181
      %p185 = scmp.eq.s32.totalorder %s19, 0
      %p186 = por %p184, %p185
      %p187 = scmp.ne.s32.totalorder %s179, %s181
      %p188 = scmp.eq.s32.totalorder %s24, 1
      %p189 = por %p187, %p188
      %p190 = scmp.ne.s32.totalorder %s181, %s182
      %p191 = scmp.eq.s32.totalorder %s24, 0
      %p192 = por %p190, %p191
      %p193 = scmp.ne.s32.totalorder %s181, %s182
      %p194 = scmp.eq.s32.totalorder %s25, 1
      %p195 = por %p193, %p194
      %p197 = scmp.ne.s32.totalorder %s182, %s196
      %p198 = scmp.eq.s32.totalorder %s25, 0
      %p199 = por %p197, %p198
      %s201 = sadd.s32 %s200, 1
      %p204 = scmp.eq.s32.totalorder %s19, 1
      %p205 = scmp.ne.s32.totalorder %s200, %s202
      %p206 = scmp.eq.s32.totalorder %s19, 0
      %p207 = por %p205, %p206
      %p208 = scmp.ne.s32.totalorder %s200, %s202
      %p209 = scmp.eq.s32.totalorder %s24, 1
      %p210 = por %p208, %p209
      %p211 = scmp.ne.s32.totalorder %s202, %s203
      %p212 = scmp.eq.s32.totalorder %s24, 0
      %p213 = por %p211, %p212
      %p214 = scmp.ne.s32.totalorder %s202, %s203
      %p215 = scmp.eq.s32.totalorder %s25, 1
      %p216 = por %p214, %p215
      %p218 = scmp.ne.s32.totalorder %s203, %s217
      %p219 = scmp.eq.s32.totalorder %s25, 0
      %p220 = por %p218, %p219
      %s222 = sadd.s32 %s221, 1
      %p225 = scmp.eq.s32.totalorder %s19, 1
      %p226 = scmp.ne.s32.totalorder %s221, %s223
      %p227 = scmp.eq.s32.totalorder %s19, 0
      %p228 = por %p226, %p227
      %p229 = scmp.ne.s32.totalorder %s221, %s223
      %p230 = scmp.eq.s32.totalorder %s24, 1
      %p231 = por %p229, %p230
      %p232 = scmp.ne.s32.totalorder %s223, %s224
      %p233 = scmp.eq.s32.totalorder %s24, 0
      %p234 = por %p232, %p233
      %p235 = scmp.ne.s32.totalorder %s223, %s224
      %p236 = scmp.eq.s32.totalorder %s25, 1
      %p237 = por %p235, %p236
      %p239 = scmp.ne.s32.totalorder %s224, %s238
      %p240 = scmp.eq.s32.totalorder %s25, 0
      %p241 = por %p239, %p240
      %s242 = ssub.s32 %s19, %s26
      %p243 = scmp.eq.s32.totalorder %s242, 0
      %s245 = sadd.s32 %s244, 1
      %s246 = scalar_select %p243, %s244, %s245
      %p249 = pneg %p243
      %p250 = scmp.eq.s32.totalorder %s19, 1
      %p251 = por %p249, %p250
      %p252 = scmp.ne.s32.totalorder %s244, %s247
      %p253 = scmp.eq.s32.totalorder %s19, 0
      %p254 = por %p252, %p253
      %p255 = scmp.ne.s32.totalorder %s244, %s247
      %p256 = scmp.eq.s32.totalorder %s24, 1
      %p257 = por %p255, %p256
      %p258 = scmp.ne.s32.totalorder %s247, %s248
      %p259 = scmp.eq.s32.totalorder %s24, 0
      %p260 = por %p258, %p259
      %p261 = scmp.ne.s32.totalorder %s247, %s248
      %p262 = scmp.eq.s32.totalorder %s25, 1
      %p263 = por %p261, %p262
      %p265 = scmp.ne.s32.totalorder %s248, %s264
      %p266 = scmp.eq.s32.totalorder %s25, 0
      %p267 = por %p265, %p266
      %p268 = scmp.le.s32.totalorder 1, %s19
      %p269 = scmp.lt.s32.totalorder %s19, 3
      %p270 = pnand %p268, %p269
      %p271 = pneg %p270
      // Predicated region
      $region9: #{tpu_custom_call.1} parent=5 // pred_check
        _
      $region10: #{tpu_custom_call.1} parent=5 // pred_check_branch
        %273 = sbr.rel (%p270) target = $region12
      $region11: #{tpu_custom_call.1} parent=5 // pred_region
        %s274 = ssub.s32 %s19, 1
        // Predicated region
        $region13: #{tpu_custom_call.1} parent=11 // pred_check
          %p275 = pneg %p66
        $region14: #{tpu_custom_call.1} parent=11 // pred_check_branch
          %277 = sbr.rel (%p275) target = $region16
        $region15: #{tpu_custom_call.1} parent=11 // pred_region
          _
        $region16: #{tpu_custom_call.1} parent=11 // pred_fallthru
          _
        // Predicated region
        $region17: #{tpu_custom_call.1} parent=11 // pred_check
          %p278 = pneg %p87
        $region18: #{tpu_custom_call.1} parent=11 // pred_check_branch
          %280 = sbr.rel (%p278) target = $region20
        $region19: #{tpu_custom_call.1} parent=11 // pred_region
          _
        $region20: #{tpu_custom_call.1} parent=11 // pred_fallthru
          _
        // Predicated region
        $region21: #{tpu_custom_call.1} parent=11 // pred_check
          %p281 = pneg %p108
        $region22: #{tpu_custom_call.1} parent=11 // pred_check_branch
          %283 = sbr.rel (%p281) target = $region24
        $region23: #{tpu_custom_call.1} parent=11 // pred_region
          _
        $region24: #{tpu_custom_call.1} parent=11 // pred_fallthru
          _
        // Predicated region
        $region25: #{tpu_custom_call.1} parent=11 // pred_check
          %p284 = pneg %p129
        $region26: #{tpu_custom_call.1} parent=11 // pred_check_branch
          %286 = sbr.rel (%p284) target = $region28
        $region27: #{tpu_custom_call.1} parent=11 // pred_region
          _
        $region28: #{tpu_custom_call.1} parent=11 // pred_fallthru
          _
        // Predicated region
        $region29: #{tpu_custom_call.1} parent=11 // pred_check
          %p287 = pneg %p150
        $region30: #{tpu_custom_call.1} parent=11 // pred_check_branch
          %289 = sbr.rel (%p287) target = $region32
        $region31: #{tpu_custom_call.1} parent=11 // pred_region
          _
        $region32: #{tpu_custom_call.1} parent=11 // pred_fallthru
          _
        // Predicated region
        $region33: #{tpu_custom_call.1} parent=11 // pred_check
          %p290 = pneg %p171
        $region34: #{tpu_custom_call.1} parent=11 // pred_check_branch
          %292 = sbr.rel (%p290) target = $region36
        $region35: #{tpu_custom_call.1} parent=11 // pred_region
          _
        $region36: #{tpu_custom_call.1} parent=11 // pred_fallthru
          _
        // Predicated region
        $region37: #{tpu_custom_call.1} parent=11 // pred_check
          %p293 = pneg %p192
        $region38: #{tpu_custom_call.1} parent=11 // pred_check_branch
          %295 = sbr.rel (%p293) target = $region40
        $region39: #{tpu_custom_call.1} parent=11 // pred_region
          _
        $region40: #{tpu_custom_call.1} parent=11 // pred_fallthru
          _
        // Predicated region
        $region41: #{tpu_custom_call.1} parent=11 // pred_check
          %p296 = pneg %p213
        $region42: #{tpu_custom_call.1} parent=11 // pred_check_branch
          %298 = sbr.rel (%p296) target = $region44
        $region43: #{tpu_custom_call.1} parent=11 // pred_region
          _
        $region44: #{tpu_custom_call.1} parent=11 // pred_fallthru
          _
        // Predicated region
        $region45: #{tpu_custom_call.1} parent=11 // pred_check
          %p299 = pneg %p234
        $region46: #{tpu_custom_call.1} parent=11 // pred_check_branch
          %301 = sbr.rel (%p299) target = $region48
        $region47: #{tpu_custom_call.1} parent=11 // pred_region
          _
        $region48: #{tpu_custom_call.1} parent=11 // pred_fallthru
          _
      $region12: #{tpu_custom_call.1} parent=5 // pred_fallthru
        _
      %p302 = scmp.lt.s32.totalorder %s19, 2
      // Predicated region
      $region49: #{tpu_custom_call.1} parent=5 // pred_check
        %p303 = pneg %p302
      $region50: #{tpu_custom_call.1} parent=5 // pred_check_branch
        %305 = sbr.rel (%p303) target = $region52
      $region51: #{tpu_custom_call.1} parent=5 // pred_region
        // Predicated region
        $region53: #{tpu_custom_call.1} parent=51 // pred_check
          %p306 = pneg %p39
        $region54: #{tpu_custom_call.1} parent=51 // pred_check_branch
          %308 = sbr.rel (%p306) target = $region56
        $region55: #{tpu_custom_call.1} parent=51 // pred_region
          %p309 = scmp.lt.s32.totalorder %s19, 1
          %s310 = scalar_select %p309, %s19, 1
          %s311 = smul.addr %s310, 2
          %s312 = smul.addr %s311, 8
          %s313 = scalar_lea.vmem %s0, %s312
        $region56: #{tpu_custom_call.1} parent=51 // pred_fallthru
          _
      $region52: #{tpu_custom_call.1} parent=5 // pred_fallthru
        _
      %p314 = scmp.le.s32.totalorder 1, %s19
      %p315 = scmp.lt.s32.totalorder %s19, 3
      %p316 = pnand %p314, %p315
      %p317 = pneg %p316
      // Predicated region
      $region57: #{tpu_custom_call.1} parent=5 // pred_check
        _
      $region58: #{tpu_custom_call.1} parent=5 // pred_check_branch
        %319 = sbr.rel (%p316) target = $region60
      $region59: #{tpu_custom_call.1} parent=5 // pred_region
        %s320 = ssub.s32 %s19, 1
        %p321 = scmp.lt.s32.totalorder %s24, 1
        %s322 = scalar_select %p321, %s24, 1
        %s323 = smul.addr %s322, 2
        %s324 = smul.addr %s323, 8
        %s325 = scalar_lea.vmem %s0, %s324
        %p326 = pneg %p45
        %p327 = pneg %p42
        %p328 = pneg %p66
        %p329 = pneg %p63
        %p330 = pneg %p87
        %p331 = pneg %p84
        %p332 = pneg %p108
        %p333 = pneg %p105
        %p334 = pneg %p129
        %p335 = pneg %p126
        %p336 = pneg %p150
        %p337 = pneg %p147
        %p338 = pneg %p171
        %p339 = pneg %p168
        %p340 = pneg %p192
        %p341 = pneg %p189
        %p342 = pneg %p213
        %p343 = pneg %p210
        %p344 = pneg %p234
        %p345 = pneg %p231
        %p346 = pneg %p260
        %p347 = pneg %p257
        %s348 = sand.u32 %s247, 1
        %s349 = scalar_lea.sflag [#allocation3], %s348
        %s350 = sand.u32 %s247, 1
        %s351 = scalar_lea.vmem [#allocation2], %s350
        %p352 = scmp.lt.s32.totalorder %s24, 1
        %s353 = scalar_select %p352, %s24, 1
        %s354 = smul.addr %s353, 2
        %s355 = smul.addr %s354, 8
        %s356 = scalar_lea.vmem %s0, %s355
        %v357 = vld [vmem:[%s356] sm:$0xff]
        %v358 = vld [vmem:[%s356 + $0x8] sm:$0xff]
        %v359 = vld [vmem:[%s8] sm:$0xff]
        %v360 = vld [vmem:[%s9] sm:$0x3]
        %v361 = vld [vmem:[%s5] sm:$0xff]
        %vm362 = vcmask 64512
        %v364 = vsel %vm362, %v357, 0
        %v367 = vsel %vm362, %v358, 0
        %369 = vmatprep.subr.mxu0 0.0
        %370 = vmatpush1.msra.mxu0 %v361
        %371 = vmatprep.subr.mxu0 0.0
        %372 = vmatpush1.msra.mxu0 0.0
        %373 = vmatprep.subr.mxu0 0.0
        %374 = vmatpush1.msra.mxu0 0.0
        %375 = vmatprep.subr.mxu0 0.0
        %376 = vmatpush1.msra.mxu0 0.0
        %377 = vmatprep.subr.mxu0 0.0
        %378 = vmatpush1.msra.mxu0 0.0
        %379 = vmatprep.subr.mxu0 0.0
        %380 = vmatpush1.msra.mxu0 0.0
        %381 = vmatprep.subr.mxu0 0.0
        %382 = vmatpush1.msra.mxu0 0.0
        %383 = vmatprep.subr.mxu0 0.0
        %384 = vmatpush1.msra.mxu0 0.0
        %385 = vmatprep.subr.mxu0 0.0
        %386 = vmatpush1.msra.mxu0 0.0
        %387 = vmatprep.subr.mxu0 0.0
        %388 = vmatpush1.msra.mxu0 0.0
        %389 = vmatprep.subr.mxu0 0.0
        %390 = vmatpush1.msra.mxu0 0.0
        %391 = vmatprep.subr.mxu0 0.0
        %392 = vmatpush1.msra.mxu0 0.0
        %393 = vmatprep.subr.mxu0 0.0
        %394 = vmatpush1.msra.mxu0 0.0
        %395 = vmatprep.subr.mxu0 0.0
        %396 = vmatpush1.msra.mxu0 0.0
        %397 = vmatprep.subr.mxu0 0.0
        %398 = vmatpush1.msra.mxu0 0.0
        %399 = vmatprep.subr.mxu0 0.0
        %400 = vmatpush1.msra.mxu0 0.0
        %401 = vmatprep.subr.mxu0 0.0
        %402 = vmatpush1.msra.mxu0 0.0
        %403 = vmatprep.subr.mxu0 0.0
        %404 = vmatpush1.msra.mxu0 0.0
        %405 = vmatprep.subr.mxu0 0.0
        %406 = vmatpush1.msra.mxu0 0.0
        %407 = vmatprep.subr.mxu0 0.0
        %408 = vmatpush1.msra.mxu0 0.0
        %409 = vmatprep.subr.mxu0 0.0
        %410 = vmatpush1.msra.mxu0 0.0
        %411 = vmatprep.subr.mxu0 0.0
        %412 = vmatpush1.msra.mxu0 0.0
        %413 = vmatprep.subr.mxu0 0.0
        %414 = vmatpush1.msra.mxu0 0.0
        %415 = vmatprep.subr.mxu0 0.0
        %416 = vmatpush1.msra.mxu0 0.0
        %417 = vmatprep.subr.mxu0 0.0
        %418 = vmatpush1.msra.mxu0 0.0
        %419 = vmatprep.subr.mxu0 0.0
        %420 = vmatpush1.msra.mxu0 0.0
        %421 = vmatprep.subr.mxu0 0.0
        %422 = vmatpush1.msra.mxu0 0.0
        %423 = vmatprep.subr.mxu0 0.0
        %424 = vmatpush1.msra.mxu0 0.0
        %425 = vmatprep.subr.mxu0 0.0
        %426 = vmatpush1.msra.mxu0 0.0
        %427 = vmatprep.subr.mxu0 0.0
        %428 = vmatpush1.msra.mxu0 0.0
        %429 = vmatprep.subr.mxu0 0.0
        %430 = vmatpush1.msra.mxu0 0.0
        %431 = vmatprep.subr.mxu0 0.0
        %432 = vmatpush1.msra.mxu0 0.0
        %433 = vmatprep.mubr.f32.mxu0 0.0
        %434 = vmatmul.mubr.f32.gmra.mrb[0].mxu0 %v364
        %v435 = vpop.f32.mrb[0].mxu0
        %v436 = vadd.f32 0.0, %v435
        %v437 = vpop.f32.mrb[0].mxu0
        %438 = vmatprep.mubr.f32.mxu0 0.0
        %439 = vmatmul.mubr.f32.gmra.mrb[0].mxu0 %v367
        %v440 = vpop.f32.mrb[0].mxu0
        %v441 = vadd.f32 0.0, %v440
        %v442 = vpop.f32.mrb[0].mxu0
        %443 = vdwg.mxu0
        %v444 = vld [vmem:[%s1] sm:$0xff]
        %v445 = vld [vmem:[%s1 + $0x8] sm:$0xff]
        %v446 = vadd.f32 %v436, %v444
        %v447 = vadd.f32 %v441, %v445
        %v448 = vsel %vm362, %v357, 0.0
        %v449 = vsel %vm362, %v358, 0.0
        %v450 = vadd.f32 %v448, %v449
        %v451 = vrot.slane %v450, 4
        %v452 = vadd.f32 %v450, %v451
        %v453 = vrot.slane %v452, 2
        %v454 = vadd.f32 %v452, %v453
        %v455 = vrot.slane %v454, 1
        %v456 = vadd.f32 %v454, %v455
        %v457 = vrcp.pop 16.0
        %v458 = vmul.f32 %v456, %v457
        %v459 = vld [vmem:[%s3] sm:$0xff]
        %v460 = vld [vmem:[%s4] sm:$0x1]
        %v462 = vsel %vm362, %v458, 0
        %464 = vmatprep.subr.mxu0 0.0
        %465 = vmatpush1.msra.mxu0 %v459
        %466 = vmatprep.subr.mxu0 0.0
        %467 = vmatpush1.msra.mxu0 0.0
        %468 = vmatprep.subr.mxu0 0.0
        %469 = vmatpush1.msra.mxu0 0.0
        %470 = vmatprep.subr.mxu0 0.0
        %471 = vmatpush1.msra.mxu0 0.0
        %472 = vmatprep.subr.mxu0 0.0
        %473 = vmatpush1.msra.mxu0 0.0
        %474 = vmatprep.subr.mxu0 0.0
        %475 = vmatpush1.msra.mxu0 0.0
        %476 = vmatprep.subr.mxu0 0.0
        %477 = vmatpush1.msra.mxu0 0.0
        %478 = vmatprep.subr.mxu0 0.0
        %479 = vmatpush1.msra.mxu0 0.0
        %480 = vmatprep.subr.mxu0 0.0
        %481 = vmatpush1.msra.mxu0 0.0
        %482 = vmatprep.subr.mxu0 0.0
        %483 = vmatpush1.msra.mxu0 0.0
        %484 = vmatprep.subr.mxu0 0.0
        %485 = vmatpush1.msra.mxu0 0.0
        %486 = vmatprep.subr.mxu0 0.0
        %487 = vmatpush1.msra.mxu0 0.0
        %488 = vmatprep.subr.mxu0 0.0
        %489 = vmatpush1.msra.mxu0 0.0
        %490 = vmatprep.subr.mxu0 0.0
        %491 = vmatpush1.msra.mxu0 0.0
        %492 = vmatprep.subr.mxu0 0.0
        %493 = vmatpush1.msra.mxu0 0.0
        %494 = vmatprep.subr.mxu0 0.0
        %495 = vmatpush1.msra.mxu0 0.0
        %496 = vmatprep.subr.mxu0 0.0
        %497 = vmatpush1.msra.mxu0 0.0
        %498 = vmatprep.subr.mxu0 0.0
        %499 = vmatpush1.msra.mxu0 0.0
        %500 = vmatprep.subr.mxu0 0.0
        %501 = vmatpush1.msra.mxu0 0.0
        %502 = vmatprep.subr.mxu0 0.0
        %503 = vmatpush1.msra.mxu0 0.0
        %504 = vmatprep.subr.mxu0 0.0
        %505 = vmatpush1.msra.mxu0 0.0
        %506 = vmatprep.subr.mxu0 0.0
        %507 = vmatpush1.msra.mxu0 0.0
        %508 = vmatprep.subr.mxu0 0.0
        %509 = vmatpush1.msra.mxu0 0.0
        %510 = vmatprep.subr.mxu0 0.0
        %511 = vmatpush1.msra.mxu0 0.0
        %512 = vmatprep.subr.mxu0 0.0
        %513 = vmatpush1.msra.mxu0 0.0
        %514 = vmatprep.subr.mxu0 0.0
        %515 = vmatpush1.msra.mxu0 0.0
        %516 = vmatprep.subr.mxu0 0.0
        %517 = vmatpush1.msra.mxu0 0.0
        %518 = vmatprep.subr.mxu0 0.0
        %519 = vmatpush1.msra.mxu0 0.0
        %520 = vmatprep.subr.mxu0 0.0
        %521 = vmatpush1.msra.mxu0 0.0
        %522 = vmatprep.subr.mxu0 0.0
        %523 = vmatpush1.msra.mxu0 0.0
        %524 = vmatprep.subr.mxu0 0.0
        %525 = vmatpush1.msra.mxu0 0.0
        %526 = vmatprep.subr.mxu0 0.0
        %527 = vmatpush1.msra.mxu0 0.0
        %528 = vmatprep.mubr.f32.mxu0 0.0
        %529 = vmatmul.mubr.f32.gmra.mrb[0].mxu0 %v462
        %v530 = vpop.f32.mrb[0].mxu0
        %v531 = vadd.f32 %v460, %v530
        %v532 = vpop.f32.mrb[0].mxu0
        %533 = vdwg.mxu0
        %vm534 = vcmask 130048
        %v535 = vsel %vm534, %v446, 0.0
        %v536 = vsel %vm534, %v447, 0.0
        %v537 = vadd.f32 %v535, %v536
        %v538 = vrot.slane %v537, 4
        %v539 = vadd.f32 %v537, %v538
        %v540 = vrot.slane %v539, 2
        %v541 = vadd.f32 %v539, %v540
        %v542 = vrot.slane %v541, 1
        %v543 = vadd.f32 %v541, %v542
        %v544 = vmul.f32 %v543, %v457
        %v545 = vld [vmem:[%s2] sm:$0x1]
        %v546 = vadd.f32 %v544, %v545
        %v547 = vmul.f32 %v531, %v546
        %v549 = vsel %vm362, %v547, 0
        %551 = vmatprep.subr.mxu0 0.0
        %552 = vmatpush1.msra.mxu0 %v359
        %553 = vmatprep.subr.mxu0 0.0
        %554 = vmatpush1.msra.mxu0 0.0
        %555 = vmatprep.subr.mxu0 0.0
        %556 = vmatpush1.msra.mxu0 0.0
        %557 = vmatprep.subr.mxu0 0.0
        %558 = vmatpush1.msra.mxu0 0.0
        %559 = vmatprep.subr.mxu0 0.0
        %560 = vmatpush1.msra.mxu0 0.0
        %561 = vmatprep.subr.mxu0 0.0
        %562 = vmatpush1.msra.mxu0 0.0
        %563 = vmatprep.subr.mxu0 0.0
        %564 = vmatpush1.msra.mxu0 0.0
        %565 = vmatprep.subr.mxu0 0.0
        %566 = vmatpush1.msra.mxu0 0.0
        %567 = vmatprep.subr.mxu0 0.0
        %568 = vmatpush1.msra.mxu0 0.0
        %569 = vmatprep.subr.mxu0 0.0
        %570 = vmatpush1.msra.mxu0 0.0
        %571 = vmatprep.subr.mxu0 0.0
        %572 = vmatpush1.msra.mxu0 0.0
        %573 = vmatprep.subr.mxu0 0.0
        %574 = vmatpush1.msra.mxu0 0.0
        %575 = vmatprep.subr.mxu0 0.0
        %576 = vmatpush1.msra.mxu0 0.0
        %577 = vmatprep.subr.mxu0 0.0
        %578 = vmatpush1.msra.mxu0 0.0
        %579 = vmatprep.subr.mxu0 0.0
        %580 = vmatpush1.msra.mxu0 0.0
        %581 = vmatprep.subr.mxu0 0.0
        %582 = vmatpush1.msra.mxu0 0.0
        %583 = vmatprep.subr.mxu0 0.0
        %584 = vmatpush1.msra.mxu0 0.0
        %585 = vmatprep.subr.mxu0 0.0
        %586 = vmatpush1.msra.mxu0 0.0
        %587 = vmatprep.subr.mxu0 0.0
        %588 = vmatpush1.msra.mxu0 0.0
        %589 = vmatprep.subr.mxu0 0.0
        %590 = vmatpush1.msra.mxu0 0.0
        %591 = vmatprep.subr.mxu0 0.0
        %592 = vmatpush1.msra.mxu0 0.0
        %593 = vmatprep.subr.mxu0 0.0
        %594 = vmatpush1.msra.mxu0 0.0
        %595 = vmatprep.subr.mxu0 0.0
        %596 = vmatpush1.msra.mxu0 0.0
        %597 = vmatprep.subr.mxu0 0.0
        %598 = vmatpush1.msra.mxu0 0.0
        %599 = vmatprep.subr.mxu0 0.0
        %600 = vmatpush1.msra.mxu0 0.0
        %601 = vmatprep.subr.mxu0 0.0
        %602 = vmatpush1.msra.mxu0 0.0
        %603 = vmatprep.subr.mxu0 0.0
        %604 = vmatpush1.msra.mxu0 0.0
        %605 = vmatprep.subr.mxu0 0.0
        %606 = vmatpush1.msra.mxu0 0.0
        %607 = vmatprep.subr.mxu0 0.0
        %608 = vmatpush1.msra.mxu0 0.0
        %609 = vmatprep.subr.mxu0 0.0
        %610 = vmatpush1.msra.mxu0 0.0
        %611 = vmatprep.subr.mxu0 0.0
        %612 = vmatpush1.msra.mxu0 0.0
        %613 = vmatprep.subr.mxu0 0.0
        %614 = vmatpush1.msra.mxu0 0.0
        %615 = vmatprep.mubr.f32.mxu0 0.0
        %616 = vmatmul.mubr.f32.gmra.mrb[0].mxu0 %v549
        %v617 = vpop.f32.mrb[0].mxu0
        %v618 = vadd.f32 0.0, %v617
        %v619 = vpop.f32.mrb[0].mxu0
        %620 = vdwg.mxu0
        %v621 = vlaneseq
        %v622 = vshrl.u32 %v621, 7
        %v623 = vsub.s32 0, %v622
        %v624 = vrot.slane %v531, %v623
        %v625 = vmul.f32 %v624, %v446
        %v626 = vmul.f32 %v624, %v447
        %v628 = vsel %vm362, %v625, 0
        %v631 = vsel %vm362, %v626, 0
        %633 = vmatprep.subr.mxu0 0.0
        %634 = vmatpush1.msra.mxu0 %v359
        %635 = vmatprep.subr.mxu0 0.0
        %636 = vmatpush1.msra.mxu0 0.0
        %637 = vmatprep.subr.mxu0 0.0
        %638 = vmatpush1.msra.mxu0 0.0
        %639 = vmatprep.subr.mxu0 0.0
        %640 = vmatpush1.msra.mxu0 0.0
        %641 = vmatprep.subr.mxu0 0.0
        %642 = vmatpush1.msra.mxu0 0.0
        %643 = vmatprep.subr.mxu0 0.0
        %644 = vmatpush1.msra.mxu0 0.0
        %645 = vmatprep.subr.mxu0 0.0
        %646 = vmatpush1.msra.mxu0 0.0
        %647 = vmatprep.subr.mxu0 0.0
        %648 = vmatpush1.msra.mxu0 0.0
        %649 = vmatprep.subr.mxu0 0.0
        %650 = vmatpush1.msra.mxu0 0.0
        %651 = vmatprep.subr.mxu0 0.0
        %652 = vmatpush1.msra.mxu0 0.0
        %653 = vmatprep.subr.mxu0 0.0
        %654 = vmatpush1.msra.mxu0 0.0
        %655 = vmatprep.subr.mxu0 0.0
        %656 = vmatpush1.msra.mxu0 0.0
        %657 = vmatprep.subr.mxu0 0.0
        %658 = vmatpush1.msra.mxu0 0.0
        %659 = vmatprep.subr.mxu0 0.0
        %660 = vmatpush1.msra.mxu0 0.0
        %661 = vmatprep.subr.mxu0 0.0
        %662 = vmatpush1.msra.mxu0 0.0
        %663 = vmatprep.subr.mxu0 0.0
        %664 = vmatpush1.msra.mxu0 0.0
        %665 = vmatprep.subr.mxu0 0.0
        %666 = vmatpush1.msra.mxu0 0.0
        %667 = vmatprep.subr.mxu0 0.0
        %668 = vmatpush1.msra.mxu0 0.0
        %669 = vmatprep.subr.mxu0 0.0
        %670 = vmatpush1.msra.mxu0 0.0
        %671 = vmatprep.subr.mxu0 0.0
        %672 = vmatpush1.msra.mxu0 0.0
        %673 = vmatprep.subr.mxu0 0.0
        %674 = vmatpush1.msra.mxu0 0.0
        %675 = vmatprep.subr.mxu0 0.0
        %676 = vmatpush1.msra.mxu0 0.0
        %677 = vmatprep.subr.mxu0 0.0
        %678 = vmatpush1.msra.mxu0 0.0
        %679 = vmatprep.subr.mxu0 0.0
        %680 = vmatpush1.msra.mxu0 0.0
        %681 = vmatprep.subr.mxu0 0.0
        %682 = vmatpush1.msra.mxu0 0.0
        %683 = vmatprep.subr.mxu0 0.0
        %684 = vmatpush1.msra.mxu0 0.0
        %685 = vmatprep.subr.mxu0 0.0
        %686 = vmatpush1.msra.mxu0 0.0
        %687 = vmatprep.subr.mxu0 0.0
        %688 = vmatpush1.msra.mxu0 0.0
        %689 = vmatprep.subr.mxu0 0.0
        %690 = vmatpush1.msra.mxu0 0.0
        %691 = vmatprep.subr.mxu0 0.0
        %692 = vmatpush1.msra.mxu0 0.0
        %693 = vmatprep.subr.mxu0 0.0
        %694 = vmatpush1.msra.mxu0 0.0
        %695 = vmatprep.subr.mxu0 0.0
        %696 = vmatpush1.msra.mxu0 0.0
        %697 = vmatprep.mubr.f32.mxu0 0.0
        %698 = vmatmul.mubr.f32.gmra.mrb[0].mxu0 %v628
        %v699 = vpop.f32.mrb[0].mxu0
        %v700 = vadd.f32 0.0, %v699
        %v701 = vpop.f32.mrb[0].mxu0
        %702 = vmatprep.mubr.f32.mxu0 0.0
        %703 = vmatmul.mubr.f32.gmra.mrb[0].mxu0 %v631
        %v704 = vpop.f32.mrb[0].mxu0
        %v705 = vadd.f32 0.0, %v704
        %v706 = vpop.f32.mrb[0].mxu0
        %707 = vdwg.mxu0
        %vm708 = vcmask 15360
        %v709 = vsel %vm708, %v700, -inf
        %v710 = vsel %vm708, %v705, -inf
        %v711 = vmax.f32 %v709, %v710
        %v712 = vrot.slane %v711, 4
        %v713 = vmax.f32 %v711, %v712
        %v714 = vrot.slane %v713, 2
        %v715 = vmax.f32 %v713, %v714
        %v716 = vrot.slane %v715, 1
        %v717 = vmax.f32 %v715, %v716
        %v718 = vmax.f32 %v618, %v717
        %v719 = vsub.f32 %v618, %v718
        %v720 = vmul.f32 %v719, 1.442695
        %v721 = vpow.pop %v720
        %v722 = vlaneseq
        %v723 = vshrl.u32 %v722, 7
        %v724 = vsub.s32 0, %v723
        %v725 = vrot.slane %v718, %v724
        %v726 = vsub.f32 %v700, %v725
        %v727 = vsub.f32 %v705, %v725
        %v728 = vmul.f32 %v726, 1.442695
        %v729 = vpow.pop %v728
        %v730 = vmul.f32 %v727, 1.442695
        %v731 = vpow.pop %v730
        %v732 = vsel %vm708, %v729, 0.0
        %v733 = vsel %vm708, %v731, 0.0
        %v734 = vadd.f32 %v732, %v733
        %v735 = vrot.slane %v734, 4
        %v736 = vadd.f32 %v734, %v735
        %v737 = vrot.slane %v736, 2
        %v738 = vadd.f32 %v736, %v737
        %v739 = vrot.slane %v738, 1
        %v740 = vadd.f32 %v738, %v739
        %v741 = vadd.f32 %v721, %v740
        %v742 = vrcp.pop %v741
        %v743 = vmul.f32 %v741, %v742
        %v744 = vsub.f32 2.0, %v743
        %v745 = vmul.f32 %v742, %v744
        %v746 = vmul.f32 %v741, %v745
        %v747 = vsub.f32 2.0, %v746
        %v748 = vmul.f32 %v745, %v747
        %v749 = vmul.f32 %v721, %v748
        %v750 = vlaneseq
        %v751 = vshrl.u32 %v750, 7
        %v752 = vsub.s32 0, %v751
        %v753 = vrot.slane %v748, %v752
        %v754 = vmul.f32 %v729, %v753
        %v755 = vmul.f32 %v731, %v753
        %v757 = vsel %vm708, %v754, 0
        %v760 = vsel %vm708, %v755, 0
        %vm762 = vcmask 1041408
        %v764 = vsel %vm762, %v360, 0
        %766 = vmatprep.subr.mxu0 0.0
        %767 = vmatpush1.msra.mxu0 %v764
        %768 = vmatprep.subr.mxu0 0.0
        %769 = vmatpush1.msra.mxu0 0.0
        %770 = vmatprep.subr.mxu0 0.0
        %771 = vmatpush1.msra.mxu0 0.0
        %772 = vmatprep.subr.mxu0 0.0
        %773 = vmatpush1.msra.mxu0 0.0
        %774 = vmatprep.subr.mxu0 0.0
        %775 = vmatpush1.msra.mxu0 0.0
        %776 = vmatprep.subr.mxu0 0.0
        %777 = vmatpush1.msra.mxu0 0.0
        %778 = vmatprep.subr.mxu0 0.0
        %779 = vmatpush1.msra.mxu0 0.0
        %780 = vmatprep.subr.mxu0 0.0
        %781 = vmatpush1.msra.mxu0 0.0
        %782 = vmatprep.subr.mxu0 0.0
        %783 = vmatpush1.msra.mxu0 0.0
        %784 = vmatprep.subr.mxu0 0.0
        %785 = vmatpush1.msra.mxu0 0.0
        %786 = vmatprep.subr.mxu0 0.0
        %787 = vmatpush1.msra.mxu0 0.0
        %788 = vmatprep.subr.mxu0 0.0
        %789 = vmatpush1.msra.mxu0 0.0
        %790 = vmatprep.subr.mxu0 0.0
        %791 = vmatpush1.msra.mxu0 0.0
        %792 = vmatprep.subr.mxu0 0.0
        %793 = vmatpush1.msra.mxu0 0.0
        %794 = vmatprep.subr.mxu0 0.0
        %795 = vmatpush1.msra.mxu0 0.0
        %796 = vmatprep.subr.mxu0 0.0
        %797 = vmatpush1.msra.mxu0 0.0
        %798 = vmatprep.subr.mxu0 0.0
        %799 = vmatpush1.msra.mxu0 0.0
        %800 = vmatprep.subr.mxu0 0.0
        %801 = vmatpush1.msra.mxu0 0.0
        %802 = vmatprep.subr.mxu0 0.0
        %803 = vmatpush1.msra.mxu0 0.0
        %804 = vmatprep.subr.mxu0 0.0
        %805 = vmatpush1.msra.mxu0 0.0
        %806 = vmatprep.subr.mxu0 0.0
        %807 = vmatpush1.msra.mxu0 0.0
        %808 = vmatprep.subr.mxu0 0.0
        %809 = vmatpush1.msra.mxu0 0.0
        %810 = vmatprep.subr.mxu0 0.0
        %811 = vmatpush1.msra.mxu0 0.0
        %812 = vmatprep.subr.mxu0 0.0
        %813 = vmatpush1.msra.mxu0 0.0
        %814 = vmatprep.subr.mxu0 0.0
        %815 = vmatpush1.msra.mxu0 0.0
        %816 = vmatprep.subr.mxu0 0.0
        %817 = vmatpush1.msra.mxu0 0.0
        %818 = vmatprep.subr.mxu0 0.0
        %819 = vmatpush1.msra.mxu0 0.0
        %820 = vmatprep.subr.mxu0 0.0
        %821 = vmatpush1.msra.mxu0 0.0
        %822 = vmatprep.subr.mxu0 0.0
        %823 = vmatpush1.msra.mxu0 0.0
        %824 = vmatprep.subr.mxu0 0.0
        %825 = vmatpush1.msra.mxu0 0.0
        %826 = vmatprep.subr.mxu0 0.0
        %827 = vmatpush1.msra.mxu0 0.0
        %828 = vmatprep.subr.mxu0 0.0
        %829 = vmatpush1.msra.mxu0 0.0
        %830 = vmatprep.mubr.f32.mxu0 0.0
        %831 = vmatmul.mubr.f32.gmra.mrb[0].mxu0 %v757
        %v832 = vpop.f32.mrb[0].mxu0
        %v833 = vadd.f32 0.0, %v832
        %v834 = vpop.f32.mrb[0].mxu0
        %835 = vmatprep.mubr.f32.mxu0 0.0
        %836 = vmatmul.mubr.f32.gmra.mrb[0].mxu0 %v760
        %v837 = vpop.f32.mrb[0].mxu0
        %v838 = vadd.f32 0.0, %v837
        %v839 = vpop.f32.mrb[0].mxu0
        %840 = vdwg.mxu0
        %843 = vrot.lane.b32.xlu0 %v446, 120
        %v844 = vpop.permute.xlu0 %843
        %845 = vrot.lane.b32.xlu0 %v447, 120
        %v846 = vpop.permute.xlu0 %845
        %v849 = vmul.f32 %v833, %v844
        %v850 = vmul.f32 %v838, %v846
        %v851 = vsel %vm362, %v849, 0.0
        %v852 = vsel %vm362, %v850, 0.0
        %v853 = vadd.f32 %v851, %v852
        %v854 = vrot.slane %v853, 4
        %v855 = vadd.f32 %v853, %v854
        %v856 = vrot.slane %v855, 2
        %v857 = vadd.f32 %v855, %v856
        %v858 = vrot.slane %v857, 1
        %v859 = vadd.f32 %v857, %v858
        %v861 = vsel %vm708, %v749, 0
        %863 = vmatprep.subr.mxu0 0.0
        %864 = vmatpush1.msra.mxu0 %v764
        %865 = vmatprep.subr.mxu0 0.0
        %866 = vmatpush1.msra.mxu0 0.0
        %867 = vmatprep.subr.mxu0 0.0
        %868 = vmatpush1.msra.mxu0 0.0
        %869 = vmatprep.subr.mxu0 0.0
        %870 = vmatpush1.msra.mxu0 0.0
        %871 = vmatprep.subr.mxu0 0.0
        %872 = vmatpush1.msra.mxu0 0.0
        %873 = vmatprep.subr.mxu0 0.0
        %874 = vmatpush1.msra.mxu0 0.0
        %875 = vmatprep.subr.mxu0 0.0
        %876 = vmatpush1.msra.mxu0 0.0
        %877 = vmatprep.subr.mxu0 0.0
        %878 = vmatpush1.msra.mxu0 0.0
        %879 = vmatprep.subr.mxu0 0.0
        %880 = vmatpush1.msra.mxu0 0.0
        %881 = vmatprep.subr.mxu0 0.0
        %882 = vmatpush1.msra.mxu0 0.0
        %883 = vmatprep.subr.mxu0 0.0
        %884 = vmatpush1.msra.mxu0 0.0
        %885 = vmatprep.subr.mxu0 0.0
        %886 = vmatpush1.msra.mxu0 0.0
        %887 = vmatprep.subr.mxu0 0.0
        %888 = vmatpush1.msra.mxu0 0.0
        %889 = vmatprep.subr.mxu0 0.0
        %890 = vmatpush1.msra.mxu0 0.0
        %891 = vmatprep.subr.mxu0 0.0
        %892 = vmatpush1.msra.mxu0 0.0
        %893 = vmatprep.subr.mxu0 0.0
        %894 = vmatpush1.msra.mxu0 0.0
        %895 = vmatprep.subr.mxu0 0.0
        %896 = vmatpush1.msra.mxu0 0.0
        %897 = vmatprep.subr.mxu0 0.0
        %898 = vmatpush1.msra.mxu0 0.0
        %899 = vmatprep.subr.mxu0 0.0
        %900 = vmatpush1.msra.mxu0 0.0
        %901 = vmatprep.subr.mxu0 0.0
        %902 = vmatpush1.msra.mxu0 0.0
        %903 = vmatprep.subr.mxu0 0.0
        %904 = vmatpush1.msra.mxu0 0.0
        %905 = vmatprep.subr.mxu0 0.0
        %906 = vmatpush1.msra.mxu0 0.0
        %907 = vmatprep.subr.mxu0 0.0
        %908 = vmatpush1.msra.mxu0 0.0
        %909 = vmatprep.subr.mxu0 0.0
        %910 = vmatpush1.msra.mxu0 0.0
        %911 = vmatprep.subr.mxu0 0.0
        %912 = vmatpush1.msra.mxu0 0.0
        %913 = vmatprep.subr.mxu0 0.0
        %914 = vmatpush1.msra.mxu0 0.0
        %915 = vmatprep.subr.mxu0 0.0
        %916 = vmatpush1.msra.mxu0 0.0
        %917 = vmatprep.subr.mxu0 0.0
        %918 = vmatpush1.msra.mxu0 0.0
        %919 = vmatprep.subr.mxu0 0.0
        %920 = vmatpush1.msra.mxu0 0.0
        %921 = vmatprep.subr.mxu0 0.0
        %922 = vmatpush1.msra.mxu0 0.0
        %923 = vmatprep.subr.mxu0 0.0
        %924 = vmatpush1.msra.mxu0 0.0
        %925 = vmatprep.subr.mxu0 0.0
        %926 = vmatpush1.msra.mxu0 0.0
        %927 = vmatprep.mubr.f32.mxu0 0.0
        %928 = vmatmul.mubr.f32.gmra.mrb[0].mxu0 %v861
        %v929 = vpop.f32.mrb[0].mxu0
        %v930 = vadd.f32 0.0, %v929
        %v931 = vpop.f32.mrb[0].mxu0
        %932 = vdwg.mxu0
        %934 = vrot.lane.b32.xlu0 %v546, 120
        %v935 = vpop.permute.xlu0 %934
        %v937 = vmul.f32 %v930, %v935
        %v938 = vadd.f32 %v859, %v937
        %v939 = vld [vmem:[%s6] sm:$0xff]
        %v940 = vld [vmem:[%s7] sm:$0x1]
        %v942 = vsel %vm362, %v938, 0
        %944 = vmatprep.subr.mxu0 0.0
        %945 = vmatpush1.msra.mxu0 %v939
        %946 = vmatprep.subr.mxu0 0.0
        %947 = vmatpush1.msra.mxu0 0.0
        %948 = vmatprep.subr.mxu0 0.0
        %949 = vmatpush1.msra.mxu0 0.0
        %950 = vmatprep.subr.mxu0 0.0
        %951 = vmatpush1.msra.mxu0 0.0
        %952 = vmatprep.subr.mxu0 0.0
        %953 = vmatpush1.msra.mxu0 0.0
        %954 = vmatprep.subr.mxu0 0.0
        %955 = vmatpush1.msra.mxu0 0.0
        %956 = vmatprep.subr.mxu0 0.0
        %957 = vmatpush1.msra.mxu0 0.0
        %958 = vmatprep.subr.mxu0 0.0
        %959 = vmatpush1.msra.mxu0 0.0
        %960 = vmatprep.subr.mxu0 0.0
        %961 = vmatpush1.msra.mxu0 0.0
        %962 = vmatprep.subr.mxu0 0.0
        %963 = vmatpush1.msra.mxu0 0.0
        %964 = vmatprep.subr.mxu0 0.0
        %965 = vmatpush1.msra.mxu0 0.0
        %966 = vmatprep.subr.mxu0 0.0
        %967 = vmatpush1.msra.mxu0 0.0
        %968 = vmatprep.subr.mxu0 0.0
        %969 = vmatpush1.msra.mxu0 0.0
        %970 = vmatprep.subr.mxu0 0.0
        %971 = vmatpush1.msra.mxu0 0.0
        %972 = vmatprep.subr.mxu0 0.0
        %973 = vmatpush1.msra.mxu0 0.0
        %974 = vmatprep.subr.mxu0 0.0
        %975 = vmatpush1.msra.mxu0 0.0
        %976 = vmatprep.subr.mxu0 0.0
        %977 = vmatpush1.msra.mxu0 0.0
        %978 = vmatprep.subr.mxu0 0.0
        %979 = vmatpush1.msra.mxu0 0.0
        %980 = vmatprep.subr.mxu0 0.0
        %981 = vmatpush1.msra.mxu0 0.0
        %982 = vmatprep.subr.mxu0 0.0
        %983 = vmatpush1.msra.mxu0 0.0
        %984 = vmatprep.subr.mxu0 0.0
        %985 = vmatpush1.msra.mxu0 0.0
        %986 = vmatprep.subr.mxu0 0.0
        %987 = vmatpush1.msra.mxu0 0.0
        %988 = vmatprep.subr.mxu0 0.0
        %989 = vmatpush1.msra.mxu0 0.0
        %990 = vmatprep.subr.mxu0 0.0
        %991 = vmatpush1.msra.mxu0 0.0
        %992 = vmatprep.subr.mxu0 0.0
        %993 = vmatpush1.msra.mxu0 0.0
        %994 = vmatprep.subr.mxu0 0.0
        %995 = vmatpush1.msra.mxu0 0.0
        %996 = vmatprep.subr.mxu0 0.0
        %997 = vmatpush1.msra.mxu0 0.0
        %998 = vmatprep.subr.mxu0 0.0
        %999 = vmatpush1.msra.mxu0 0.0
        %1000 = vmatprep.subr.mxu0 0.0
        %1001 = vmatpush1.msra.mxu0 0.0
        %1002 = vmatprep.subr.mxu0 0.0
        %1003 = vmatpush1.msra.mxu0 0.0
        %1004 = vmatprep.subr.mxu0 0.0
        %1005 = vmatpush1.msra.mxu0 0.0
        %1006 = vmatprep.subr.mxu0 0.0
        %1007 = vmatpush1.msra.mxu0 0.0
        %1008 = vmatprep.mubr.f32.mxu0 0.0
        %1009 = vmatmul.mubr.f32.gmra.mrb[0].mxu0 %v942
        %v1010 = vpop.f32.mrb[0].mxu0
        %v1011 = vadd.f32 %v940, %v1010
        %v1012 = vpop.f32.mrb[0].mxu0
        %1013 = vdwg.mxu0
        %vm1014 = vcmask 57344
        %1015 = vst.msk [vmem:[%s351] sm:$0x1] %vm1014, %v1011
        %s1016 = sand.u32 %s247, 1
        %s1017 = scalar_lea.sflag [#allocation3], %s1016
        %s1018 = sand.u32 %s247, 1
        %s1019 = scalar_lea.vmem [#allocation2], %s1018
        // Predicated region
        $region61: #{tpu_custom_call.1} parent=59 // pred_check
          %p1020 = pneg %p257
        $region62: #{tpu_custom_call.1} parent=59 // pred_check_branch
          %1022 = sbr.rel (%p1020) target = $region64
        $region63: #{tpu_custom_call.1} parent=59 // pred_region
          %s1024 = ssub.s32 16, 16
          %1025 = vsyncadd %s1017, %s1024
          %s1026 = smul.addr %s24, 16
          %s1027 = scalar_lea.hbm %s10, %s1026
          %s1029 = sshll.u32 %s1019, 4
          %s1030 = int_to_ptr.vmem [resolvable:$true] %s1029
          %1032 = dma.vmem_to_hbm [thread:$0]  %s1030, 16, %s1027, %s1017
        $region64: #{tpu_custom_call.1} parent=59 // pred_fallthru
          _
      $region60: #{tpu_custom_call.1} parent=5 // pred_fallthru
        _
      %p1033 = scmp.le.s32.totalorder 2, %s19
      // Predicated region
      $region65: #{tpu_custom_call.1} parent=5 // pred_check
        %p1034 = pneg %p1033
      $region66: #{tpu_custom_call.1} parent=5 // pred_check_branch
        %1036 = sbr.rel (%p1034) target = $region68
      $region67: #{tpu_custom_call.1} parent=5 // pred_region
        %s1037 = ssub.s32 %s19, 2
        // Predicated region
        $region69: #{tpu_custom_call.1} parent=67 // pred_check
          %p1038 = pneg %p263
        $region70: #{tpu_custom_call.1} parent=67 // pred_check_branch
          %1040 = sbr.rel (%p1038) target = $region72
        $region71: #{tpu_custom_call.1} parent=67 // pred_region
          %s1041 = sand.u32 %s248, 1
          %s1042 = scalar_lea.sflag [#allocation3], %s1041
          %s1043 = sand.u32 %s248, 1
          %s1044 = scalar_lea.vmem [#allocation2], %s1043
          %1045 = dma.done %s1042, 16
        $region72: #{tpu_custom_call.1} parent=67 // pred_fallthru
          _
      $region68: #{tpu_custom_call.1} parent=5 // pred_fallthru
        _
    $region6: #{tpu_custom_call.1} parent=1 // loop_footer
      %s23 = sadd.s32 1, %s19
    $region7: #{tpu_custom_call.1} parent=1 // loop_footer_branch
      %18 = sbr.rel target = $region3
    $region8: #{tpu_custom_call.1} parent=1 // loop_exit
      _
    %1046 = vsyncpa [#allocation3], 1
    %s1047 = scalar_lea.sflag [#allocation3], 1
    %1048 = vsyncpa %s1047, 1

// kernel: tpu_custom_call.1
$region0: #{tpu_custom_call.1}
  #allocation0 [shape = 'u32[]', space=smem, size = 0x4, offset = 0x4, fixed_abs, tag = 'smem constant byte address 0x4 - core index']
  #allocation1 [shape = 'u32[144,128]{1,0:T(1,128)}', space=vmem, size = 0x12000, scoped, tag = 'internal scratch']
  %s0 = inlined_call_operand.vmem [shape: f32[2,16,8], index: 0, kind: input, shape index: {}]
  %s1 = inlined_call_operand.vmem [shape: f32[16,16], index: 1, kind: input, shape index: {}]
  %s2 = inlined_call_operand.vmem [shape: f32[1,16], index: 2, kind: input, shape index: {}]
  %s3 = inlined_call_operand.vmem [shape: f32[8,8], index: 3, kind: input, shape index: {}]
  %s4 = inlined_call_operand.vmem [shape: f32[1,8], index: 4, kind: input, shape index: {}]
  %s5 = inlined_call_operand.vmem [shape: f32[8,16], index: 5, kind: input, shape index: {}]
  %s6 = inlined_call_operand.vmem [shape: f32[8,8], index: 6, kind: input, shape index: {}]
  %s7 = inlined_call_operand.vmem [shape: f32[1,8], index: 7, kind: input, shape index: {}]
  %s8 = inlined_call_operand.vmem [shape: f32[8,2], index: 8, kind: input, shape index: {}]
  %s9 = inlined_call_operand.vmem [shape: f32[2,8], index: 9, kind: input, shape index: {}]
  %s10 = inlined_call_operand.hbm [shape: f32[2,1,8], index: 10, kind: output, shape index: {}]
  %s11 = sld [smem:[#allocation0]]
  $region73: #{tpu_custom_call.1} parent=0
    _
  %s13 = ssub.s32 1, %s11
  %s14 = scalar_select 0, %s13, %s11
  $region1: #{tpu_custom_call.1} parent=0
    #allocation2 [shape = 'u8[1024]{0}', space=vmem, size = 0x400, scoped, tag = 'output window, operand 0']
    #allocation3 [shape = 's32[2]{0}', space=sflag, size = 0x8, scoped, tag = 'scoped memory for tpu_custom_call.1']
    %15 = vsyncpa [#allocation3], 0
    %s16 = scalar_lea.sflag [#allocation3], 1
    %17 = vsyncpa %s16, 0
    loop: start=0, step=1, limit=4
    $region2: #{tpu_custom_call.1} parent=1 // loop_pre_header
      _
    $region3: #{tpu_custom_call.1} parent=1 // loop_header
      %s19 = sphi 0, %s23
      %p20 = scmp.ge.s32.totalorder %s19, 4
      %s29 = sphi 0, %s31
      %s32 = sphi 0, %s29
      %s33 = sphi 0, %s32
      %s49 = sphi 0, %s33
      %s53 = sphi 0, %s53
      %s55 = sphi 0, %s53
      %s56 = sphi 0, %s55
      %s70 = sphi 0, %s56
      %s74 = sphi 0, %s74
      %s76 = sphi 0, %s74
      %s77 = sphi 0, %s76
      %s91 = sphi 0, %s77
      %s95 = sphi 0, %s95
      %s97 = sphi 0, %s95
      %s98 = sphi 0, %s97
      %s112 = sphi 0, %s98
      %s116 = sphi 0, %s116
      %s118 = sphi 0, %s116
      %s119 = sphi 0, %s118
      %s133 = sphi 0, %s119
      %s137 = sphi 0, %s137
      %s139 = sphi 0, %s137
      %s140 = sphi 0, %s139
      %s154 = sphi 0, %s140
      %s158 = sphi 0, %s158
      %s160 = sphi 0, %s158
      %s161 = sphi 0, %s160
      %s175 = sphi 0, %s161
      %s179 = sphi 0, %s179
      %s181 = sphi 0, %s179
      %s182 = sphi 0, %s181
      %s196 = sphi 0, %s182
      %s200 = sphi 0, %s200
      %s202 = sphi 0, %s200
      %s203 = sphi 0, %s202
      %s217 = sphi 0, %s203
      %s221 = sphi 0, %s221
      %s223 = sphi 0, %s221
      %s224 = sphi 0, %s223
      %s238 = sphi 0, %s224
      %s244 = sphi 0, %s246
      %s247 = sphi 0, %s244
      %s248 = sphi 0, %s247
      %s264 = sphi 0, %s248
    $region4: #{tpu_custom_call.1} parent=1 // loop_header_branch
      %22 = sbr.rel (%p20) target = $region8
    $region5: #{tpu_custom_call.1} parent=1 // loop_body
      %s24 = ssub.s32 %s19, 1
      %s25 = ssub.s32 %s19, 2
      %s26 = sadd.s32 %s19, 1
      %s27 = ssub.s32 %s19, %s26
      %p28 = scmp.eq.s32.totalorder %s27, 0
      %s30 = sadd.s32 %s29, 1
      %s31 = scalar_select %p28, %s29, %s30
      %p34 = pneg %p28
      %p35 = scmp.eq.s32.totalorder %s19, 1
      %p36 = por %p34, %p35
      %p37 = scmp.ne.s32.totalorder %s29, %s32
      %p38 = scmp.eq.s32.totalorder %s19, 0
      %p39 = por %p37, %p38
      %p40 = scmp.ne.s32.totalorder %s29, %s32
      %p41 = scmp.eq.s32.totalorder %s24, 1
      %p42 = por %p40, %p41
      %p43 = scmp.ne.s32.totalorder %s32, %s33
      %p44 = scmp.eq.s32.totalorder %s24, 0
      %p45 = por %p43, %p44
      %p46 = scmp.ne.s32.totalorder %s32, %s33
      %p47 = scmp.eq.s32.totalorder %s25, 1
      %p48 = por %p46, %p47
      %p50 = scmp.ne.s32.totalorder %s33, %s49
      %p51 = scmp.eq.s32.totalorder %s25, 0
      %p52 = por %p50, %p51
      %s54 = sadd.s32 %s53, 1
      %p57 = scmp.eq.s32.totalorder %s19, 1
      %p58 = scmp.ne.s32.totalorder %s53, %s55
      %p59 = scmp.eq.s32.totalorder %s19, 0
      %p60 = por %p58, %p59
      %p61 = scmp.ne.s32.totalorder %s53, %s55
      %p62 = scmp.eq.s32.totalorder %s24, 1
      %p63 = por %p61, %p62
      %p64 = scmp.ne.s32.totalorder %s55, %s56
      %p65 = scmp.eq.s32.totalorder %s24, 0
      %p66 = por %p64, %p65
      %p67 = scmp.ne.s32.totalorder %s55, %s56
      %p68 = scmp.eq.s32.totalorder %s25, 1
      %p69 = por %p67, %p68
      %p71 = scmp.ne.s32.totalorder %s56, %s70
      %p72 = scmp.eq.s32.totalorder %s25, 0
      %p73 = por %p71, %p72
      %s75 = sadd.s32 %s74, 1
      %p78 = scmp.eq.s32.totalorder %s19, 1
      %p79 = scmp.ne.s32.totalorder %s74, %s76
      %p80 = scmp.eq.s32.totalorder %s19, 0
      %p81 = por %p79, %p80
      %p82 = scmp.ne.s32.totalorder %s74, %s76
      %p83 = scmp.eq.s32.totalorder %s24, 1
      %p84 = por %p82, %p83
      %p85 = scmp.ne.s32.totalorder %s76, %s77
      %p86 = scmp.eq.s32.totalorder %s24, 0
      %p87 = por %p85, %p86
      %p88 = scmp.ne.s32.totalorder %s76, %s77
      %p89 = scmp.eq.s32.totalorder %s25, 1
      %p90 = por %p88, %p89
      %p92 = scmp.ne.s32.totalorder %s77, %s91
      %p93 = scmp.eq.s32.totalorder %s25, 0
      %p94 = por %p92, %p93
      %s96 = sadd.s32 %s95, 1
      %p99 = scmp.eq.s32.totalorder %s19, 1
      %p100 = scmp.ne.s32.totalorder %s95, %s97
      %p101 = scmp.eq.s32.totalorder %s19, 0
      %p102 = por %p100, %p101
      %p103 = scmp.ne.s32.totalorder %s95, %s97
      %p104 = scmp.eq.s32.totalorder %s24, 1
      %p105 = por %p103, %p104
      %p106 = scmp.ne.s32.totalorder %s97, %s98
      %p107 = scmp.eq.s32.totalorder %s24, 0
      %p108 = por %p106, %p107
      %p109 = scmp.ne.s32.totalorder %s97, %s98
      %p110 = scmp.eq.s32.totalorder %s25, 1
      %p111 = por %p109, %p110
      %p113 = scmp.ne.s32.totalorder %s98, %s112
      %p114 = scmp.eq.s32.totalorder %s25, 0
      %p115 = por %p113, %p114
      %s117 = sadd.s32 %s116, 1
      %p120 = scmp.eq.s32.totalorder %s19, 1
      %p121 = scmp.ne.s32.totalorder %s116, %s118
      %p122 = scmp.eq.s32.totalorder %s19, 0
      %p123 = por %p121, %p122
      %p124 = scmp.ne.s32.totalorder %s116, %s118
      %p125 = scmp.eq.s32.totalorder %s24, 1
      %p126 = por %p124, %p125
      %p127 = scmp.ne.s32.totalorder %s118, %s119
      %p128 = scmp.eq.s32.totalorder %s24, 0
      %p129 = por %p127, %p128
      %p130 = scmp.ne.s32.totalorder %s118, %s119
      %p131 = scmp.eq.s32.totalorder %s25, 1
      %p132 = por %p130, %p131
      %p134 = scmp.ne.s32.totalorder %s119, %s133
      %p135 = scmp.eq.s32.totalorder %s25, 0
      %p136 = por %p134, %p135
      %s138 = sadd.s32 %s137, 1
      %p141 = scmp.eq.s32.totalorder %s19, 1
      %p142 = scmp.ne.s32.totalorder %s137, %s139
      %p143 = scmp.eq.s32.totalorder %s19, 0
      %p144 = por %p142, %p143
      %p145 = scmp.ne.s32.totalorder %s137, %s139
      %p146 = scmp.eq.s32.totalorder %s24, 1
      %p147 = por %p145, %p146
      %p148 = scmp.ne.s32.totalorder %s139, %s140
      %p149 = scmp.eq.s32.totalorder %s24, 0
      %p150 = por %p148, %p149
      %p151 = scmp.ne.s32.totalorder %s139, %s140
      %p152 = scmp.eq.s32.totalorder %s25, 1
      %p153 = por %p151, %p152
      %p155 = scmp.ne.s32.totalorder %s140, %s154
      %p156 = scmp.eq.s32.totalorder %s25, 0
      %p157 = por %p155, %p156
      %s159 = sadd.s32 %s158, 1
      %p162 = scmp.eq.s32.totalorder %s19, 1
      %p163 = scmp.ne.s32.totalorder %s158, %s160
      %p164 = scmp.eq.s32.totalorder %s19, 0
      %p165 = por %p163, %p164
      %p166 = scmp.ne.s32.totalorder %s158, %s160
      %p167 = scmp.eq.s32.totalorder %s24, 1
      %p168 = por %p166, %p167
      %p169 = scmp.ne.s32.totalorder %s160, %s161
      %p170 = scmp.eq.s32.totalorder %s24, 0
      %p171 = por %p169, %p170
      %p172 = scmp.ne.s32.totalorder %s160, %s161
      %p173 = scmp.eq.s32.totalorder %s25, 1
      %p174 = por %p172, %p173
      %p176 = scmp.ne.s32.totalorder %s161, %s175
      %p177 = scmp.eq.s32.totalorder %s25, 0
      %p178 = por %p176, %p177
      %s180 = sadd.s32 %s179, 1
      %p183 = scmp.eq.s32.totalorder %s19, 1
      %p184 = scmp.ne.s32.totalorder %s179, %s181
      %p185 = scmp.eq.s32.totalorder %s19, 0
      %p186 = por %p184, %p185
      %p187 = scmp.ne.s32.totalorder %s179, %s181
      %p188 = scmp.eq.s32.totalorder %s24, 1
      %p189 = por %p187, %p188
      %p190 = scmp.ne.s32.totalorder %s181, %s182
      %p191 = scmp.eq.s32.totalorder %s24, 0
      %p192 = por %p190, %p191
      %p193 = scmp.ne.s32.totalorder %s181, %s182
      %p194 = scmp.eq.s32.totalorder %s25, 1
      %p195 = por %p193, %p194
      %p197 = scmp.ne.s32.totalorder %s182, %s196
      %p198 = scmp.eq.s32.totalorder %s25, 0
      %p199 = por %p197, %p198
      %s201 = sadd.s32 %s200, 1
      %p204 = scmp.eq.s32.totalorder %s19, 1
      %p205 = scmp.ne.s32.totalorder %s200, %s202
      %p206 = scmp.eq.s32.totalorder %s19, 0
      %p207 = por %p205, %p206
      %p208 = scmp.ne.s32.totalorder %s200, %s202
      %p209 = scmp.eq.s32.totalorder %s24, 1
      %p210 = por %p208, %p209
      %p211 = scmp.ne.s32.totalorder %s202, %s203
      %p212 = scmp.eq.s32.totalorder %s24, 0
      %p213 = por %p211, %p212
      %p214 = scmp.ne.s32.totalorder %s202, %s203
      %p215 = scmp.eq.s32.totalorder %s25, 1
      %p216 = por %p214, %p215
      %p218 = scmp.ne.s32.totalorder %s203, %s217
      %p219 = scmp.eq.s32.totalorder %s25, 0
      %p220 = por %p218, %p219
      %s222 = sadd.s32 %s221, 1
      %p225 = scmp.eq.s32.totalorder %s19, 1
      %p226 = scmp.ne.s32.totalorder %s221, %s223
      %p227 = scmp.eq.s32.totalorder %s19, 0
      %p228 = por %p226, %p227
      %p229 = scmp.ne.s32.totalorder %s221, %s223
      %p230 = scmp.eq.s32.totalorder %s24, 1
      %p231 = por %p229, %p230
      %p232 = scmp.ne.s32.totalorder %s223, %s224
      %p233 = scmp.eq.s32.totalorder %s24, 0
      %p234 = por %p232, %p233
      %p235 = scmp.ne.s32.totalorder %s223, %s224
      %p236 = scmp.eq.s32.totalorder %s25, 1
      %p237 = por %p235, %p236
      %p239 = scmp.ne.s32.totalorder %s224, %s238
      %p240 = scmp.eq.s32.totalorder %s25, 0
      %p241 = por %p239, %p240
      %s242 = ssub.s32 %s19, %s26
      %p243 = scmp.eq.s32.totalorder %s242, 0
      %s245 = sadd.s32 %s244, 1
      %s246 = scalar_select %p243, %s244, %s245
      %p249 = pneg %p243
      %p250 = scmp.eq.s32.totalorder %s19, 1
      %p251 = por %p249, %p250
      %p252 = scmp.ne.s32.totalorder %s244, %s247
      %p253 = scmp.eq.s32.totalorder %s19, 0
      %p254 = por %p252, %p253
      %p255 = scmp.ne.s32.totalorder %s244, %s247
      %p256 = scmp.eq.s32.totalorder %s24, 1
      %p257 = por %p255, %p256
      %p258 = scmp.ne.s32.totalorder %s247, %s248
      %p259 = scmp.eq.s32.totalorder %s24, 0
      %p260 = por %p258, %p259
      %p261 = scmp.ne.s32.totalorder %s247, %s248
      %p262 = scmp.eq.s32.totalorder %s25, 1
      %p263 = por %p261, %p262
      %p265 = scmp.ne.s32.totalorder %s248, %s264
      %p266 = scmp.eq.s32.totalorder %s25, 0
      %p267 = por %p265, %p266
      %p268 = scmp.le.s32.totalorder 1, %s19
      %p269 = scmp.lt.s32.totalorder %s19, 3
      %p270 = pnand %p268, %p269
      %p271 = pneg %p270
      // Predicated region
      $region9: #{tpu_custom_call.1} parent=5 // pred_check
        _
      $region10: #{tpu_custom_call.1} parent=5 // pred_check_branch
        %273 = sbr.rel (%p270) target = $region12
      $region11: #{tpu_custom_call.1} parent=5 // pred_region
        %s274 = ssub.s32 %s19, 1
        // Predicated region
        $region13: #{tpu_custom_call.1} parent=11 // pred_check
          %p275 = pneg %p66
        $region14: #{tpu_custom_call.1} parent=11 // pred_check_branch
          %277 = sbr.rel (%p275) target = $region16
        $region15: #{tpu_custom_call.1} parent=11 // pred_region
          _
        $region16: #{tpu_custom_call.1} parent=11 // pred_fallthru
          _
        // Predicated region
        $region17: #{tpu_custom_call.1} parent=11 // pred_check
          %p278 = pneg %p87
        $region18: #{tpu_custom_call.1} parent=11 // pred_check_branch
          %280 = sbr.rel (%p278) target = $region20
        $region19: #{tpu_custom_call.1} parent=11 // pred_region
          _
        $region20: #{tpu_custom_call.1} parent=11 // pred_fallthru
          _
        // Predicated region
        $region21: #{tpu_custom_call.1} parent=11 // pred_check
          %p281 = pneg %p108
        $region22: #{tpu_custom_call.1} parent=11 // pred_check_branch
          %283 = sbr.rel (%p281) target = $region24
        $region23: #{tpu_custom_call.1} parent=11 // pred_region
          _
        $region24: #{tpu_custom_call.1} parent=11 // pred_fallthru
          _
        // Predicated region
        $region25: #{tpu_custom_call.1} parent=11 // pred_check
          %p284 = pneg %p129
        $region26: #{tpu_custom_call.1} parent=11 // pred_check_branch
          %286 = sbr.rel (%p284) target = $region28
        $region27: #{tpu_custom_call.1} parent=11 // pred_region
          _
        $region28: #{tpu_custom_call.1} parent=11 // pred_fallthru
          _
        // Predicated region
        $region29: #{tpu_custom_call.1} parent=11 // pred_check
          %p287 = pneg %p150
        $region30: #{tpu_custom_call.1} parent=11 // pred_check_branch
          %289 = sbr.rel (%p287) target = $region32
        $region31: #{tpu_custom_call.1} parent=11 // pred_region
          _
        $region32: #{tpu_custom_call.1} parent=11 // pred_fallthru
          _
        // Predicated region
        $region33: #{tpu_custom_call.1} parent=11 // pred_check
          %p290 = pneg %p171
        $region34: #{tpu_custom_call.1} parent=11 // pred_check_branch
          %292 = sbr.rel (%p290) target = $region36
        $region35: #{tpu_custom_call.1} parent=11 // pred_region
          _
        $region36: #{tpu_custom_call.1} parent=11 // pred_fallthru
          _
        // Predicated region
        $region37: #{tpu_custom_call.1} parent=11 // pred_check
          %p293 = pneg %p192
        $region38: #{tpu_custom_call.1} parent=11 // pred_check_branch
          %295 = sbr.rel (%p293) target = $region40
        $region39: #{tpu_custom_call.1} parent=11 // pred_region
          _
        $region40: #{tpu_custom_call.1} parent=11 // pred_fallthru
          _
        // Predicated region
        $region41: #{tpu_custom_call.1} parent=11 // pred_check
          %p296 = pneg %p213
        $region42: #{tpu_custom_call.1} parent=11 // pred_check_branch
          %298 = sbr.rel (%p296) target = $region44
        $region43: #{tpu_custom_call.1} parent=11 // pred_region
          _
        $region44: #{tpu_custom_call.1} parent=11 // pred_fallthru
          _
        // Predicated region
        $region45: #{tpu_custom_call.1} parent=11 // pred_check
          %p299 = pneg %p234
        $region46: #{tpu_custom_call.1} parent=11 // pred_check_branch
          %301 = sbr.rel (%p299) target = $region48
        $region47: #{tpu_custom_call.1} parent=11 // pred_region
          _
        $region48: #{tpu_custom_call.1} parent=11 // pred_fallthru
          _
      $region12: #{tpu_custom_call.1} parent=5 // pred_fallthru
        _
      %p302 = scmp.lt.s32.totalorder %s19, 2
      // Predicated region
      $region49: #{tpu_custom_call.1} parent=5 // pred_check
        %p303 = pneg %p302
      $region50: #{tpu_custom_call.1} parent=5 // pred_check_branch
        %305 = sbr.rel (%p303) target = $region52
      $region51: #{tpu_custom_call.1} parent=5 // pred_region
        // Predicated region
        $region53: #{tpu_custom_call.1} parent=51 // pred_check
          %p306 = pneg %p39
        $region54: #{tpu_custom_call.1} parent=51 // pred_check_branch
          %308 = sbr.rel (%p306) target = $region56
        $region55: #{tpu_custom_call.1} parent=51 // pred_region
          %p309 = scmp.lt.s32.totalorder %s19, 1
          %s310 = scalar_select %p309, %s19, 1
          %s311 = smul.addr %s310, 2
          %s312 = smul.addr %s311, 8
          %s313 = scalar_lea.vmem %s0, %s312
        $region56: #{tpu_custom_call.1} parent=51 // pred_fallthru
          _
      $region52: #{tpu_custom_call.1} parent=5 // pred_fallthru
        _
      %p314 = scmp.le.s32.totalorder 1, %s19
      %p315 = scmp.lt.s32.totalorder %s19, 3
      %p316 = pnand %p314, %p315
      %p317 = pneg %p316
      // Predicated region
      $region57: #{tpu_custom_call.1} parent=5 // pred_check
        _
      $region58: #{tpu_custom_call.1} parent=5 // pred_check_branch
        %319 = sbr.rel (%p316) target = $region60
      $region59: #{tpu_custom_call.1} parent=5 // pred_region
        %s320 = ssub.s32 %s19, 1
        %p321 = scmp.lt.s32.totalorder %s24, 1
        %s322 = scalar_select %p321, %s24, 1
        %s323 = smul.addr %s322, 2
        %s324 = smul.addr %s323, 8
        %s325 = scalar_lea.vmem %s0, %s324
        %p326 = pneg %p45
        %p327 = pneg %p42
        %p328 = pneg %p66
        %p329 = pneg %p63
        %p330 = pneg %p87
        %p331 = pneg %p84
        %p332 = pneg %p108
        %p333 = pneg %p105
        %p334 = pneg %p129
        %p335 = pneg %p126
        %p336 = pneg %p150
        %p337 = pneg %p147
        %p338 = pneg %p171
        %p339 = pneg %p168
        %p340 = pneg %p192
        %p341 = pneg %p189
        %p342 = pneg %p213
        %p343 = pneg %p210
        %p344 = pneg %p234
        %p345 = pneg %p231
        %p346 = pneg %p260
        %p347 = pneg %p257
        %s348 = sand.u32 %s247, 1
        %s349 = scalar_lea.sflag [#allocation3], %s348
        %s350 = sand.u32 %s247, 1
        %s351 = scalar_lea.vmem [#allocation2], %s350
        %p352 = scmp.lt.s32.totalorder %s24, 1
        %s353 = scalar_select %p352, %s24, 1
        %s354 = smul.addr %s353, 2
        %s355 = smul.addr %s354, 8
        %s356 = scalar_lea.vmem %s0, %s355
        %v357 = vld [vmem:[%s356] sm:$0xff]
        %v358 = vld [vmem:[%s356 + $0x8] sm:$0xff]
        %v359 = vld [vmem:[%s8] sm:$0xff]
        %v360 = vld [vmem:[%s9] sm:$0x3]
        %v361 = vld [vmem:[%s5] sm:$0xff]
        %vm362 = vcmask 64512
        %v364 = vsel %vm362, %v357, 0
        %v367 = vsel %vm362, %v358, 0
        %369 = vmatprep.subr.mxu0 0.0
        %370 = vmatpush1.msra.mxu0 %v361
        %371 = vmatprep.subr.mxu0 0.0
        %372 = vmatpush1.msra.mxu0 0.0
        %373 = vmatprep.subr.mxu0 0.0
        %374 = vmatpush1.msra.mxu0 0.0
        %375 = vmatprep.subr.mxu0 0.0
        %376 = vmatpush1.msra.mxu0 0.0
        %377 = vmatprep.subr.mxu0 0.0
        %378 = vmatpush1.msra.mxu0 0.0
        %379 = vmatprep.subr.mxu0 0.0
        %380 = vmatpush1.msra.mxu0 0.0
        %381 = vmatprep.subr.mxu0 0.0
        %382 = vmatpush1.msra.mxu0 0.0
        %383 = vmatprep.subr.mxu0 0.0
        %384 = vmatpush1.msra.mxu0 0.0
        %385 = vmatprep.subr.mxu0 0.0
        %386 = vmatpush1.msra.mxu0 0.0
        %387 = vmatprep.subr.mxu0 0.0
        %388 = vmatpush1.msra.mxu0 0.0
        %389 = vmatprep.subr.mxu0 0.0
        %390 = vmatpush1.msra.mxu0 0.0
        %391 = vmatprep.subr.mxu0 0.0
        %392 = vmatpush1.msra.mxu0 0.0
        %393 = vmatprep.subr.mxu0 0.0
        %394 = vmatpush1.msra.mxu0 0.0
        %395 = vmatprep.subr.mxu0 0.0
        %396 = vmatpush1.msra.mxu0 0.0
        %397 = vmatprep.subr.mxu0 0.0
        %398 = vmatpush1.msra.mxu0 0.0
        %399 = vmatprep.subr.mxu0 0.0
        %400 = vmatpush1.msra.mxu0 0.0
        %401 = vmatprep.subr.mxu0 0.0
        %402 = vmatpush1.msra.mxu0 0.0
        %403 = vmatprep.subr.mxu0 0.0
        %404 = vmatpush1.msra.mxu0 0.0
        %405 = vmatprep.subr.mxu0 0.0
        %406 = vmatpush1.msra.mxu0 0.0
        %407 = vmatprep.subr.mxu0 0.0
        %408 = vmatpush1.msra.mxu0 0.0
        %409 = vmatprep.subr.mxu0 0.0
        %410 = vmatpush1.msra.mxu0 0.0
        %411 = vmatprep.subr.mxu0 0.0
        %412 = vmatpush1.msra.mxu0 0.0
        %413 = vmatprep.subr.mxu0 0.0
        %414 = vmatpush1.msra.mxu0 0.0
        %415 = vmatprep.subr.mxu0 0.0
        %416 = vmatpush1.msra.mxu0 0.0
        %417 = vmatprep.subr.mxu0 0.0
        %418 = vmatpush1.msra.mxu0 0.0
        %419 = vmatprep.subr.mxu0 0.0
        %420 = vmatpush1.msra.mxu0 0.0
        %421 = vmatprep.subr.mxu0 0.0
        %422 = vmatpush1.msra.mxu0 0.0
        %423 = vmatprep.subr.mxu0 0.0
        %424 = vmatpush1.msra.mxu0 0.0
        %425 = vmatprep.subr.mxu0 0.0
        %426 = vmatpush1.msra.mxu0 0.0
        %427 = vmatprep.subr.mxu0 0.0
        %428 = vmatpush1.msra.mxu0 0.0
        %429 = vmatprep.subr.mxu0 0.0
        %430 = vmatpush1.msra.mxu0 0.0
        %431 = vmatprep.subr.mxu0 0.0
        %432 = vmatpush1.msra.mxu0 0.0
        %433 = vmatprep.mubr.f32.mxu0 0.0
        %434 = vmatmul.mubr.f32.gmra.mrb[0].mxu0 %v364
        %v435 = vpop.f32.mrb[0].mxu0
        %v436 = vadd.f32 0.0, %v435
        %v437 = vpop.f32.mrb[0].mxu0
        %438 = vmatprep.mubr.f32.mxu0 0.0
        %439 = vmatmul.mubr.f32.gmra.mrb[0].mxu0 %v367
        %v440 = vpop.f32.mrb[0].mxu0
        %v441 = vadd.f32 0.0, %v440
        %v442 = vpop.f32.mrb[0].mxu0
        %443 = vdwg.mxu0
        %v444 = vld [vmem:[%s1] sm:$0xff]
        %v445 = vld [vmem:[%s1 + $0x8] sm:$0xff]
        %v446 = vadd.f32 %v436, %v444
        %v447 = vadd.f32 %v441, %v445
        %v448 = vsel %vm362, %v357, 0.0
        %v449 = vsel %vm362, %v358, 0.0
        %v450 = vadd.f32 %v448, %v449
        %v451 = vrot.slane %v450, 4
        %v452 = vadd.f32 %v450, %v451
        %v453 = vrot.slane %v452, 2
        %v454 = vadd.f32 %v452, %v453
        %v455 = vrot.slane %v454, 1
        %v456 = vadd.f32 %v454, %v455
        %v457 = vrcp.pop 16.0
        %v458 = vmul.f32 %v456, %v457
        %v459 = vld [vmem:[%s3] sm:$0xff]
        %v460 = vld [vmem:[%s4] sm:$0x1]
        %v462 = vsel %vm362, %v458, 0
        %464 = vmatprep.subr.mxu0 0.0
        %465 = vmatpush1.msra.mxu0 %v459
        %466 = vmatprep.subr.mxu0 0.0
        %467 = vmatpush1.msra.mxu0 0.0
        %468 = vmatprep.subr.mxu0 0.0
        %469 = vmatpush1.msra.mxu0 0.0
        %470 = vmatprep.subr.mxu0 0.0
        %471 = vmatpush1.msra.mxu0 0.0
        %472 = vmatprep.subr.mxu0 0.0
        %473 = vmatpush1.msra.mxu0 0.0
        %474 = vmatprep.subr.mxu0 0.0
        %475 = vmatpush1.msra.mxu0 0.0
        %476 = vmatprep.subr.mxu0 0.0
        %477 = vmatpush1.msra.mxu0 0.0
        %478 = vmatprep.subr.mxu0 0.0
        %479 = vmatpush1.msra.mxu0 0.0
        %480 = vmatprep.subr.mxu0 0.0
        %481 = vmatpush1.msra.mxu0 0.0
        %482 = vmatprep.subr.mxu0 0.0
        %483 = vmatpush1.msra.mxu0 0.0
        %484 = vmatprep.subr.mxu0 0.0
        %485 = vmatpush1.msra.mxu0 0.0
        %486 = vmatprep.subr.mxu0 0.0
        %487 = vmatpush1.msra.mxu0 0.0
        %488 = vmatprep.subr.mxu0 0.0
        %489 = vmatpush1.msra.mxu0 0.0
        %490 = vmatprep.subr.mxu0 0.0
        %491 = vmatpush1.msra.mxu0 0.0
        %492 = vmatprep.subr.mxu0 0.0
        %493 = vmatpush1.msra.mxu0 0.0
        %494 = vmatprep.subr.mxu0 0.0
        %495 = vmatpush1.msra.mxu0 0.0
        %496 = vmatprep.subr.mxu0 0.0
        %497 = vmatpush1.msra.mxu0 0.0
        %498 = vmatprep.subr.mxu0 0.0
        %499 = vmatpush1.msra.mxu0 0.0
        %500 = vmatprep.subr.mxu0 0.0
        %501 = vmatpush1.msra.mxu0 0.0
        %502 = vmatprep.subr.mxu0 0.0
        %503 = vmatpush1.msra.mxu0 0.0
        %504 = vmatprep.subr.mxu0 0.0
        %505 = vmatpush1.msra.mxu0 0.0
        %506 = vmatprep.subr.mxu0 0.0
        %507 = vmatpush1.msra.mxu0 0.0
        %508 = vmatprep.subr.mxu0 0.0
        %509 = vmatpush1.msra.mxu0 0.0
        %510 = vmatprep.subr.mxu0 0.0
        %511 = vmatpush1.msra.mxu0 0.0
        %512 = vmatprep.subr.mxu0 0.0
        %513 = vmatpush1.msra.mxu0 0.0
        %514 = vmatprep.subr.mxu0 0.0
        %515 = vmatpush1.msra.mxu0 0.0
        %516 = vmatprep.subr.mxu0 0.0
        %517 = vmatpush1.msra.mxu0 0.0
        %518 = vmatprep.subr.mxu0 0.0
        %519 = vmatpush1.msra.mxu0 0.0
        %520 = vmatprep.subr.mxu0 0.0
        %521 = vmatpush1.msra.mxu0 0.0
        %522 = vmatprep.subr.mxu0 0.0
        %523 = vmatpush1.msra.mxu0 0.0
        %524 = vmatprep.subr.mxu0 0.0
        %525 = vmatpush1.msra.mxu0 0.0
        %526 = vmatprep.subr.mxu0 0.0
        %527 = vmatpush1.msra.mxu0 0.0
        %528 = vmatprep.mubr.f32.mxu0 0.0
        %529 = vmatmul.mubr.f32.gmra.mrb[0].mxu0 %v462
        %v530 = vpop.f32.mrb[0].mxu0
        %v531 = vadd.f32 %v460, %v530
        %v532 = vpop.f32.mrb[0].mxu0
        %533 = vdwg.mxu0
        %vm534 = vcmask 130048
        %v535 = vsel %vm534, %v446, 0.0
        %v536 = vsel %vm534, %v447, 0.0
        %v537 = vadd.f32 %v535, %v536
        %v538 = vrot.slane %v537, 4
        %v539 = vadd.f32 %v537, %v538
        %v540 = vrot.slane %v539, 2
        %v541 = vadd.f32 %v539, %v540
        %v542 = vrot.slane %v541, 1
        %v543 = vadd.f32 %v541, %v542
        %v544 = vmul.f32 %v543, %v457
        %v545 = vld [vmem:[%s2] sm:$0x1]
        %v546 = vadd.f32 %v544, %v545
        %v547 = vmul.f32 %v531, %v546
        %v549 = vsel %vm362, %v547, 0
        %551 = vmatprep.subr.mxu0 0.0
        %552 = vmatpush1.msra.mxu0 %v359
        %553 = vmatprep.subr.mxu0 0.0
        %554 = vmatpush1.msra.mxu0 0.0
        %555 = vmatprep.subr.mxu0 0.0
        %556 = vmatpush1.msra.mxu0 0.0
        %557 = vmatprep.subr.mxu0 0.0
        %558 = vmatpush1.msra.mxu0 0.0
        %559 = vmatprep.subr.mxu0 0.0
        %560 = vmatpush1.msra.mxu0 0.0
        %561 = vmatprep.subr.mxu0 0.0
        %562 = vmatpush1.msra.mxu0 0.0
        %563 = vmatprep.subr.mxu0 0.0
        %564 = vmatpush1.msra.mxu0 0.0
        %565 = vmatprep.subr.mxu0 0.0
        %566 = vmatpush1.msra.mxu0 0.0
        %567 = vmatprep.subr.mxu0 0.0
        %568 = vmatpush1.msra.mxu0 0.0
        %569 = vmatprep.subr.mxu0 0.0
        %570 = vmatpush1.msra.mxu0 0.0
        %571 = vmatprep.subr.mxu0 0.0
        %572 = vmatpush1.msra.mxu0 0.0
        %573 = vmatprep.subr.mxu0 0.0
        %574 = vmatpush1.msra.mxu0 0.0
        %575 = vmatprep.subr.mxu0 0.0
        %576 = vmatpush1.msra.mxu0 0.0
        %577 = vmatprep.subr.mxu0 0.0
        %578 = vmatpush1.msra.mxu0 0.0
        %579 = vmatprep.subr.mxu0 0.0
        %580 = vmatpush1.msra.mxu0 0.0
        %581 = vmatprep.subr.mxu0 0.0
        %582 = vmatpush1.msra.mxu0 0.0
        %583 = vmatprep.subr.mxu0 0.0
        %584 = vmatpush1.msra.mxu0 0.0
        %585 = vmatprep.subr.mxu0 0.0
        %586 = vmatpush1.msra.mxu0 0.0
        %587 = vmatprep.subr.mxu0 0.0
        %588 = vmatpush1.msra.mxu0 0.0
        %589 = vmatprep.subr.mxu0 0.0
        %590 = vmatpush1.msra.mxu0 0.0
        %591 = vmatprep.subr.mxu0 0.0
        %592 = vmatpush1.msra.mxu0 0.0
        %593 = vmatprep.subr.mxu0 0.0
        %594 = vmatpush1.msra.mxu0 0.0
        %595 = vmatprep.subr.mxu0 0.0
        %596 = vmatpush1.msra.mxu0 0.0
        %597 = vmatprep.subr.mxu0 0.0
        %598 = vmatpush1.msra.mxu0 0.0
        %599 = vmatprep.subr.mxu0 0.0
        %600 = vmatpush1.msra.mxu0 0.0
        %601 = vmatprep.subr.mxu0 0.0
        %602 = vmatpush1.msra.mxu0 0.0
        %603 = vmatprep.subr.mxu0 0.0
        %604 = vmatpush1.msra.mxu0 0.0
        %605 = vmatprep.subr.mxu0 0.0
        %606 = vmatpush1.msra.mxu0 0.0
        %607 = vmatprep.subr.mxu0 0.0
        %608 = vmatpush1.msra.mxu0 0.0
        %609 = vmatprep.subr.mxu0 0.0
        %610 = vmatpush1.msra.mxu0 0.0
        %611 = vmatprep.subr.mxu0 0.0
        %612 = vmatpush1.msra.mxu0 0.0
        %613 = vmatprep.subr.mxu0 0.0
        %614 = vmatpush1.msra.mxu0 0.0
        %615 = vmatprep.mubr.f32.mxu0 0.0
        %616 = vmatmul.mubr.f32.gmra.mrb[0].mxu0 %v549
        %v617 = vpop.f32.mrb[0].mxu0
        %v618 = vadd.f32 0.0, %v617
        %v619 = vpop.f32.mrb[0].mxu0
        %620 = vdwg.mxu0
        %v621 = vlaneseq
        %v622 = vshrl.u32 %v621, 7
        %v623 = vsub.s32 0, %v622
        %v624 = vrot.slane %v531, %v623
        %v625 = vmul.f32 %v624, %v446
        %v626 = vmul.f32 %v624, %v447
        %v628 = vsel %vm362, %v625, 0
        %v631 = vsel %vm362, %v626, 0
        %633 = vmatprep.subr.mxu0 0.0
        %634 = vmatpush1.msra.mxu0 %v359
        %635 = vmatprep.subr.mxu0 0.0
        %636 = vmatpush1.msra.mxu0 0.0
        %637 = vmatprep.subr.mxu0 0.0
        %638 = vmatpush1.msra.mxu0 0.0
        %639 = vmatprep.subr.mxu0 0.0
        %640 = vmatpush1.msra.mxu0 0.0
        %641 = vmatprep.subr.mxu0 0.0
        %642 = vmatpush1.msra.mxu0 0.0
        %643 = vmatprep.subr.mxu0 0.0
        %644 = vmatpush1.msra.mxu0 0.0
        %645 = vmatprep.subr.mxu0 0.0
        %646 = vmatpush1.msra.mxu0 0.0
        %647 = vmatprep.subr.mxu0 0.0
        %648 = vmatpush1.msra.mxu0 0.0
        %649 = vmatprep.subr.mxu0 0.0
        %650 = vmatpush1.msra.mxu0 0.0
        %651 = vmatprep.subr.mxu0 0.0
        %652 = vmatpush1.msra.mxu0 0.0
        %653 = vmatprep.subr.mxu0 0.0
        %654 = vmatpush1.msra.mxu0 0.0
        %655 = vmatprep.subr.mxu0 0.0
        %656 = vmatpush1.msra.mxu0 0.0
        %657 = vmatprep.subr.mxu0 0.0
        %658 = vmatpush1.msra.mxu0 0.0
        %659 = vmatprep.subr.mxu0 0.0
        %660 = vmatpush1.msra.mxu0 0.0
        %661 = vmatprep.subr.mxu0 0.0
        %662 = vmatpush1.msra.mxu0 0.0
        %663 = vmatprep.subr.mxu0 0.0
        %664 = vmatpush1.msra.mxu0 0.0
        %665 = vmatprep.subr.mxu0 0.0
        %666 = vmatpush1.msra.mxu0 0.0
        %667 = vmatprep.subr.mxu0 0.0
        %668 = vmatpush1.msra.mxu0 0.0
        %669 = vmatprep.subr.mxu0 0.0
        %670 = vmatpush1.msra.mxu0 0.0
        %671 = vmatprep.subr.mxu0 0.0
        %672 = vmatpush1.msra.mxu0 0.0
        %673 = vmatprep.subr.mxu0 0.0
        %674 = vmatpush1.msra.mxu0 0.0
        %675 = vmatprep.subr.mxu0 0.0
        %676 = vmatpush1.msra.mxu0 0.0
        %677 = vmatprep.subr.mxu0 0.0
        %678 = vmatpush1.msra.mxu0 0.0
        %679 = vmatprep.subr.mxu0 0.0
        %680 = vmatpush1.msra.mxu0 0.0
        %681 = vmatprep.subr.mxu0 0.0
        %682 = vmatpush1.msra.mxu0 0.0
        %683 = vmatprep.subr.mxu0 0.0
        %684 = vmatpush1.msra.mxu0 0.0
        %685 = vmatprep.subr.mxu0 0.0
        %686 = vmatpush1.msra.mxu0 0.0
        %687 = vmatprep.subr.mxu0 0.0
        %688 = vmatpush1.msra.mxu0 0.0
        %689 = vmatprep.subr.mxu0 0.0
        %690 = vmatpush1.msra.mxu0 0.0
        %691 = vmatprep.subr.mxu0 0.0
        %692 = vmatpush1.msra.mxu0 0.0
        %693 = vmatprep.subr.mxu0 0.0
        %694 = vmatpush1.msra.mxu0 0.0
        %695 = vmatprep.subr.mxu0 0.0
        %696 = vmatpush1.msra.mxu0 0.0
        %697 = vmatprep.mubr.f32.mxu0 0.0
        %698 = vmatmul.mubr.f32.gmra.mrb[0].mxu0 %v628
        %v699 = vpop.f32.mrb[0].mxu0
        %v700 = vadd.f32 0.0, %v699
        %v701 = vpop.f32.mrb[0].mxu0
        %702 = vmatprep.mubr.f32.mxu0 0.0
        %703 = vmatmul.mubr.f32.gmra.mrb[0].mxu0 %v631
        %v704 = vpop.f32.mrb[0].mxu0
        %v705 = vadd.f32 0.0, %v704
        %v706 = vpop.f32.mrb[0].mxu0
        %707 = vdwg.mxu0
        %vm708 = vcmask 15360
        %v709 = vsel %vm708, %v700, -inf
        %v710 = vsel %vm708, %v705, -inf
        %v711 = vmax.f32 %v709, %v710
        %v712 = vrot.slane %v711, 4
        %v713 = vmax.f32 %v711, %v712
        %v714 = vrot.slane %v713, 2
        %v715 = vmax.f32 %v713, %v714
        %v716 = vrot.slane %v715, 1
        %v717 = vmax.f32 %v715, %v716
        %v718 = vmax.f32 %v618, %v717
        %v719 = vsub.f32 %v618, %v718
        %v720 = vmul.f32 %v719, 1.442695
        %v721 = vpow.pop %v720
        %v722 = vlaneseq
        %v723 = vshrl.u32 %v722, 7
        %v724 = vsub.s32 0, %v723
        %v725 = vrot.slane %v718, %v724
        %v726 = vsub.f32 %v700, %v725
        %v727 = vsub.f32 %v705, %v725
        %v728 = vmul.f32 %v726, 1.442695
        %v729 = vpow.pop %v728
        %v730 = vmul.f32 %v727, 1.442695
        %v731 = vpow.pop %v730
        %v732 = vsel %vm708, %v729, 0.0
        %v733 = vsel %vm708, %v731, 0.0
        %v734 = vadd.f32 %v732, %v733
        %v735 = vrot.slane %v734, 4
        %v736 = vadd.f32 %v734, %v735
        %v737 = vrot.slane %v736, 2
        %v738 = vadd.f32 %v736, %v737
        %v739 = vrot.slane %v738, 1
        %v740 = vadd.f32 %v738, %v739
        %v741 = vadd.f32 %v721, %v740
        %v742 = vrcp.pop %v741
        %v743 = vmul.f32 %v741, %v742
        %v744 = vsub.f32 2.0, %v743
        %v745 = vmul.f32 %v742, %v744
        %v746 = vmul.f32 %v741, %v745
        %v747 = vsub.f32 2.0, %v746
        %v748 = vmul.f32 %v745, %v747
        %v749 = vmul.f32 %v721, %v748
        %v750 = vlaneseq
        %v751 = vshrl.u32 %v750, 7
        %v752 = vsub.s32 0, %v751
        %v753 = vrot.slane %v748, %v752
        %v754 = vmul.f32 %v729, %v753
        %v755 = vmul.f32 %v731, %v753
        %v757 = vsel %vm708, %v754, 0
        %v760 = vsel %vm708, %v755, 0
        %vm762 = vcmask 1041408
        %v764 = vsel %vm762, %v360, 0
        %766 = vmatprep.subr.mxu0 0.0
        %767 = vmatpush1.msra.mxu0 %v764
        %768 = vmatprep.subr.mxu0 0.0
        %769 = vmatpush1.msra.mxu0 0.0
        %770 = vmatprep.subr.mxu0 0.0
        %771 = vmatpush1.msra.mxu0 0.0
        %772 = vmatprep.subr.mxu0 0.0
        %773 = vmatpush1.msra.mxu0 0.0
        %774 = vmatprep.subr.mxu0 0.0
        %775 = vmatpush1.msra.mxu0 0.0
        %776 = vmatprep.subr.mxu0 0.0
        %777 = vmatpush1.msra.mxu0 0.0
        %778 = vmatprep.subr.mxu0 0.0
        %779 = vmatpush1.msra.mxu0 0.0
        %780 = vmatprep.subr.mxu0 0.0
        %781 = vmatpush1.msra.mxu0 0.0
        %782 = vmatprep.subr.mxu0 0.0
        %783 = vmatpush1.msra.mxu0 0.0
        %784 = vmatprep.subr.mxu0 0.0
        %785 = vmatpush1.msra.mxu0 0.0
        %786 = vmatprep.subr.mxu0 0.0
        %787 = vmatpush1.msra.mxu0 0.0
        %788 = vmatprep.subr.mxu0 0.0
        %789 = vmatpush1.msra.mxu0 0.0
        %790 = vmatprep.subr.mxu0 0.0
        %791 = vmatpush1.msra.mxu0 0.0
        %792 = vmatprep.subr.mxu0 0.0
        %793 = vmatpush1.msra.mxu0 0.0
        %794 = vmatprep.subr.mxu0 0.0
        %795 = vmatpush1.msra.mxu0 0.0
        %796 = vmatprep.subr.mxu0 0.0
        %797 = vmatpush1.msra.mxu0 0.0
        %798 = vmatprep.subr.mxu0 0.0
        %799 = vmatpush1.msra.mxu0 0.0
        %800 = vmatprep.subr.mxu0 0.0
        %801 = vmatpush1.msra.mxu0 0.0
        %802 = vmatprep.subr.mxu0 0.0
        %803 = vmatpush1.msra.mxu0 0.0
        %804 = vmatprep.subr.mxu0 0.0
        %805 = vmatpush1.msra.mxu0 0.0
        %806 = vmatprep.subr.mxu0 0.0
        %807 = vmatpush1.msra.mxu0 0.0
        %808 = vmatprep.subr.mxu0 0.0
        %809 = vmatpush1.msra.mxu0 0.0
        %810 = vmatprep.subr.mxu0 0.0
        %811 = vmatpush1.msra.mxu0 0.0
        %812 = vmatprep.subr.mxu0 0.0
        %813 = vmatpush1.msra.mxu0 0.0
        %814 = vmatprep.subr.mxu0 0.0
        %815 = vmatpush1.msra.mxu0 0.0
        %816 = vmatprep.subr.mxu0 0.0
        %817 = vmatpush1.msra.mxu0 0.0
        %818 = vmatprep.subr.mxu0 0.0
        %819 = vmatpush1.msra.mxu0 0.0
        %820 = vmatprep.subr.mxu0 0.0
        %821 = vmatpush1.msra.mxu0 0.0
        %822 = vmatprep.subr.mxu0 0.0
        %823 = vmatpush1.msra.mxu0 0.0
        %824 = vmatprep.subr.mxu0 0.0
        %825 = vmatpush1.msra.mxu0 0.0
        %826 = vmatprep.subr.mxu0 0.0
        %827 = vmatpush1.msra.mxu0 0.0
        %828 = vmatprep.subr.mxu0 0.0
        %829 = vmatpush1.msra.mxu0 0.0
        %830 = vmatprep.mubr.f32.mxu0 0.0
        %831 = vmatmul.mubr.f32.gmra.mrb[0].mxu0 %v757
        %v832 = vpop.f32.mrb[0].mxu0
        %v833 = vadd.f32 0.0, %v832
        %v834 = vpop.f32.mrb[0].mxu0
        %835 = vmatprep.mubr.f32.mxu0 0.0
        %836 = vmatmul.mubr.f32.gmra.mrb[0].mxu0 %v760
        %v837 = vpop.f32.mrb[0].mxu0
        %v838 = vadd.f32 0.0, %v837
        %v839 = vpop.f32.mrb[0].mxu0
        %840 = vdwg.mxu0
        %843 = vrot.lane.b32.xlu0 %v446, 120
        %v844 = vpop.permute.xlu0 %843
        %845 = vrot.lane.b32.xlu0 %v447, 120
        %v846 = vpop.permute.xlu0 %845
        %v849 = vmul.f32 %v833, %v844
        %v850 = vmul.f32 %v838, %v846
        %v851 = vsel %vm362, %v849, 0.0
        %v852 = vsel %vm362, %v850, 0.0
        %v853 = vadd.f32 %v851, %v852
        %v854 = vrot.slane %v853, 4
        %v855 = vadd.f32 %v853, %v854
        %v856 = vrot.slane %v855, 2
        %v857 = vadd.f32 %v855, %v856
        %v858 = vrot.slane %v857, 1
        %v859 = vadd.f32 %v857, %v858
        %v861 = vsel %vm708, %v749, 0
        %863 = vmatprep.subr.mxu0 0.0
        %864 = vmatpush1.msra.mxu0 %v764
        %865 = vmatprep.subr.mxu0 0.0
        %866 = vmatpush1.msra.mxu0 0.0
        %867 = vmatprep.subr.mxu0 0.0
        %868 = vmatpush1.msra.mxu0 0.0
        %869 = vmatprep.subr.mxu0 0.0
        %870 = vmatpush1.msra.mxu0 0.0
        %871 = vmatprep.subr.mxu0 0.0
        %872 = vmatpush1.msra.mxu0 0.0
        %873 = vmatprep.subr.mxu0 0.0
        %874 = vmatpush1.msra.mxu0 0.0
        %875 = vmatprep.subr.mxu0 0.0
        %876 = vmatpush1.msra.mxu0 0.0
        %877 = vmatprep.subr.mxu0 0.0
        %878 = vmatpush1.msra.mxu0 0.0
        %879 = vmatprep.subr.mxu0 0.0
        %880 = vmatpush1.msra.mxu0 0.0
        %881 = vmatprep.subr.mxu0 0.0
        %882 = vmatpush1.msra.mxu0 0.0
        %883 = vmatprep.subr.mxu0 0.0
        %884 = vmatpush1.msra.mxu0 0.0
        %885 = vmatprep.subr.mxu0 0.0
        %886 = vmatpush1.msra.mxu0 0.0
        %887 = vmatprep.subr.mxu0 0.0
        %888 = vmatpush1.msra.mxu0 0.0
        %889 = vmatprep.subr.mxu0 0.0
        %890 = vmatpush1.msra.mxu0 0.0
        %891 = vmatprep.subr.mxu0 0.0
        %892 = vmatpush1.msra.mxu0 0.0
        %893 = vmatprep.subr.mxu0 0.0
        %894 = vmatpush1.msra.mxu0 0.0
        %895 = vmatprep.subr.mxu0 0.0
        %896 = vmatpush1.msra.mxu0 0.0
        %897 = vmatprep.subr.mxu0 0.0
        %898 = vmatpush1.msra.mxu0 0.0
        %899 = vmatprep.subr.mxu0 0.0
        %900 = vmatpush1.msra.mxu0 0.0
        %901 = vmatprep.subr.mxu0 0.0
        %902 = vmatpush1.msra.mxu0 0.0
        %903 = vmatprep.subr.mxu0 0.0
        %904 = vmatpush1.msra.mxu0 0.0
        %905 = vmatprep.subr.mxu0 0.0
        %906 = vmatpush1.msra.mxu0 0.0
        %907 = vmatprep.subr.mxu0 0.0
        %908 = vmatpush1.msra.mxu0 0.0
        %909 = vmatprep.subr.mxu0 0.0
        %910 = vmatpush1.msra.mxu0 0.0
        %911 = vmatprep.subr.mxu0 0.0
        %912 = vmatpush1.msra.mxu0 0.0
        %913 = vmatprep.subr.mxu0 0.0
        %914 = vmatpush1.msra.mxu0 0.0
        %915 = vmatprep.subr.mxu0 0.0
        %916 = vmatpush1.msra.mxu0 0.0
        %917 = vmatprep.subr.mxu0 0.0
        %918 = vmatpush1.msra.mxu0 0.0
        %919 = vmatprep.subr.mxu0 0.0
        %920 = vmatpush1.msra.mxu0 0.0
        %921 = vmatprep.subr.mxu0 0.0
        %922 = vmatpush1.msra.mxu0 0.0
        %923 = vmatprep.subr.mxu0 0.0
        %924 = vmatpush1.msra.mxu0 0.0
        %925 = vmatprep.subr.mxu0 0.0
        %926 = vmatpush1.msra.mxu0 0.0
        %927 = vmatprep.mubr.f32.mxu0 0.0
        %928 = vmatmul.mubr.f32.gmra.mrb[0].mxu0 %v861
        %v929 = vpop.f32.mrb[0].mxu0
        %v930 = vadd.f32 0.0, %v929
        %v931 = vpop.f32.mrb[0].mxu0
        %932 = vdwg.mxu0
        %934 = vrot.lane.b32.xlu0 %v546, 120
        %v935 = vpop.permute.xlu0 %934
        %v937 = vmul.f32 %v930, %v935
        %v938 = vadd.f32 %v859, %v937
        %v939 = vld [vmem:[%s6] sm:$0xff]
        %v940 = vld [vmem:[%s7] sm:$0x1]
        %v942 = vsel %vm362, %v938, 0
        %944 = vmatprep.subr.mxu0 0.0
        %945 = vmatpush1.msra.mxu0 %v939
        %946 = vmatprep.subr.mxu0 0.0
        %947 = vmatpush1.msra.mxu0 0.0
        %948 = vmatprep.subr.mxu0 0.0
        %949 = vmatpush1.msra.mxu0 0.0
        %950 = vmatprep.subr.mxu0 0.0
        %951 = vmatpush1.msra.mxu0 0.0
        %952 = vmatprep.subr.mxu0 0.0
        %953 = vmatpush1.msra.mxu0 0.0
        %954 = vmatprep.subr.mxu0 0.0
        %955 = vmatpush1.msra.mxu0 0.0
        %956 = vmatprep.subr.mxu0 0.0
        %957 = vmatpush1.msra.mxu0 0.0
        %958 = vmatprep.subr.mxu0 0.0
        %959 = vmatpush1.msra.mxu0 0.0
        %960 = vmatprep.subr.mxu0 0.0
        %961 = vmatpush1.msra.mxu0 0.0
        %962 = vmatprep.subr.mxu0 0.0
        %963 = vmatpush1.msra.mxu0 0.0
        %964 = vmatprep.subr.mxu0 0.0
        %965 = vmatpush1.msra.mxu0 0.0
        %966 = vmatprep.subr.mxu0 0.0
        %967 = vmatpush1.msra.mxu0 0.0
        %968 = vmatprep.subr.mxu0 0.0
        %969 = vmatpush1.msra.mxu0 0.0
        %970 = vmatprep.subr.mxu0 0.0
        %971 = vmatpush1.msra.mxu0 0.0
        %972 = vmatprep.subr.mxu0 0.0
        %973 = vmatpush1.msra.mxu0 0.0
        %974 = vmatprep.subr.mxu0 0.0
        %975 = vmatpush1.msra.mxu0 0.0
        %976 = vmatprep.subr.mxu0 0.0
        %977 = vmatpush1.msra.mxu0 0.0
        %978 = vmatprep.subr.mxu0 0.0
        %979 = vmatpush1.msra.mxu0 0.0
        %980 = vmatprep.subr.mxu0 0.0
        %981 = vmatpush1.msra.mxu0 0.0
        %982 = vmatprep.subr.mxu0 0.0
        %983 = vmatpush1.msra.mxu0 0.0
        %984 = vmatprep.subr.mxu0 0.0
        %985 = vmatpush1.msra.mxu0 0.0
        %986 = vmatprep.subr.mxu0 0.0
        %987 = vmatpush1.msra.mxu0 0.0
        %988 = vmatprep.subr.mxu0 0.0
        %989 = vmatpush1.msra.mxu0 0.0
        %990 = vmatprep.subr.mxu0 0.0
        %991 = vmatpush1.msra.mxu0 0.0
        %992 = vmatprep.subr.mxu0 0.0
        %993 = vmatpush1.msra.mxu0 0.0
        %994 = vmatprep.subr.mxu0 0.0
        %995 = vmatpush1.msra.mxu0 0.0
        %996 = vmatprep.subr.mxu0 0.0
        %997 = vmatpush1.msra.mxu0 0.0
        %998 = vmatprep.subr.mxu0 0.0
        %999 = vmatpush1.msra.mxu0 0.0
        %1000 = vmatprep.subr.mxu0 0.0
        %1001 = vmatpush1.msra.mxu0 0.0
        %1002 = vmatprep.subr.mxu0 0.0
        %1003 = vmatpush1.msra.mxu0 0.0
        %1004 = vmatprep.subr.mxu0 0.0
        %1005 = vmatpush1.msra.mxu0 0.0
        %1006 = vmatprep.subr.mxu0 0.0
        %1007 = vmatpush1.msra.mxu0 0.0
        %1008 = vmatprep.mubr.f32.mxu0 0.0
        %1009 = vmatmul.mubr.f32.gmra.mrb[0].mxu0 %v942
        %v1010 = vpop.f32.mrb[0].mxu0
        %v1011 = vadd.f32 %v940, %v1010
        %v1012 = vpop.f32.mrb[0].mxu0
        %1013 = vdwg.mxu0
        %vm1014 = vcmask 57344
        %1015 = vst.msk [vmem:[%s351] sm:$0x1] %vm1014, %v1011
        %s1016 = sand.u32 %s247, 1
        %s1017 = scalar_lea.sflag [#allocation3], %s1016
        %s1018 = sand.u32 %s247, 1
        %s1019 = scalar_lea.vmem [#allocation2], %s1018
        // Predicated region
        $region61: #{tpu_custom_call.1} parent=59 // pred_check
          %p1020 = pneg %p257
        $region62: #{tpu_custom_call.1} parent=59 // pred_check_branch
          %1022 = sbr.rel (%p1020) target = $region64
        $region63: #{tpu_custom_call.1} parent=59 // pred_region
          %s1024 = ssub.s32 16, 16
          %1025 = vsyncadd %s1017, %s1024
          %s1026 = smul.addr %s24, 16
          %s1027 = scalar_lea.hbm %s10, %s1026
          %s1029 = sshll.u32 %s1019, 4
          %s1030 = int_to_ptr.vmem [resolvable:$true] %s1029
          %1032 = dma.vmem_to_hbm [thread:$0]  %s1030, 16, %s1027, %s1017
        $region64: #{tpu_custom_call.1} parent=59 // pred_fallthru
          _
      $region60: #{tpu_custom_call.1} parent=5 // pred_fallthru
        _
      %p1033 = scmp.le.s32.totalorder 2, %s19
      // Predicated region
      $region65: #{tpu_custom_call.1} parent=5 // pred_check
        %p1034 = pneg %p1033
      $region66: #{tpu_custom_call.1} parent=5 // pred_check_branch
        %1036 = sbr.rel (%p1034) target = $region68
      $region67: #{tpu_custom_call.1} parent=5 // pred_region
        %s1037 = ssub.s32 %s19, 2
        // Predicated region
        $region69: #{tpu_custom_call.1} parent=67 // pred_check
          %p1038 = pneg %p263
        $region70: #{tpu_custom_call.1} parent=67 // pred_check_branch
          %1040 = sbr.rel (%p1038) target = $region72
        $region71: #{tpu_custom_call.1} parent=67 // pred_region
          %s1041 = sand.u32 %s248, 1
          %s1042 = scalar_lea.sflag [#allocation3], %s1041
          %s1043 = sand.u32 %s248, 1
          %s1044 = scalar_lea.vmem [#allocation2], %s1043
          %1045 = dma.done %s1042, 16
        $region72: #{tpu_custom_call.1} parent=67 // pred_fallthru
          _
      $region68: #{tpu_custom_call.1} parent=5 // pred_fallthru
        _
    $region6: #{tpu_custom_call.1} parent=1 // loop_footer
      %s23 = sadd.s32 1, %s19
    $region7: #{tpu_custom_call.1} parent=1 // loop_footer_branch
      %18 = sbr.rel target = $region3
    $region8: #{tpu_custom_call.1} parent=1 // loop_exit
      _
    %1046 = vsyncpa [#allocation3], 1
    %s1047 = scalar_lea.sflag [#allocation3], 1
    %1048 = vsyncpa %s1047, 1

</llo_original>
